<compile_context>
chip_gen: v7x
topology: tpu7x:2x2x1
jax: 0.10.0
libtpu: 0.0.40
codegen_flags: <defaults>
</compile_context>

<pallas_src>
import functools

import numpy as np
import jax
import jax.numpy as jnp
from jax.experimental import pallas as pl
from jax.experimental.pallas import tpu as pltpu

# ----------------------------- configuration --------------------------------
BATCH = 2
INPUT_CHANNELS = 3
NUM_CLASSES = 1                 # posterior=True => encoder sees 3 + 1 channels
NUM_FILTERS = (4, 8, 8)
NO_CONVS_PER_BLOCK = 2
LATENT_DIM = 6
NUM_FLOWS = 4
H = W = 16

_ARB = pltpu.CompilerParams(dimension_semantics=("arbitrary",))


# ----------------------------- Pallas kernels --------------------------------
def _conv_block_kernel(*refs, has_pool, num_convs):
    """One encoder block: [AvgPool2d(2,2) as matmuls] + num_convs x (conv3x3 + ReLU).

    Activations live in a packed 2-D layout (B*H, W*C): rows = (batch, height),
    lanes = (width, channels).  A 3x3 same-padded conv is
        y = sum_{d in -1,0,1}  S_d @ (x @ Wd_d) + bias
    where Wd_d folds the three horizontal taps (and horizontal zero padding) into a
    block-structured (W*Cin, W*Cout) matrix and S_d is a (B*H, B*H) row-shift matrix
    that applies the vertical tap (and vertical zero padding, and batch boundaries).
    """
    idx = 0
    x_ref = refs[idx]; idx += 1
    if has_pool:
        pr_ref = refs[idx]; pc_ref = refs[idx + 1]; idx += 2
    conv_refs = []
    for _ in range(num_convs):
        conv_refs.append(refs[idx:idx + 4]); idx += 4
    sm_ref, sp_ref, o_ref = refs[idx], refs[idx + 1], refs[idx + 2]

    x = x_ref[...]
    if has_pool:
        # AvgPool2d(kernel=2, stride=2) == P_row @ x @ P_col with constant matrices.
        x = jnp.dot(pr_ref[...],
                    jnp.dot(x, pc_ref[...], preferred_element_type=jnp.float32),
                    preferred_element_type=jnp.float32)

    sm = sm_ref[...]
    sp = sp_ref[...]

    h = x
    for (wm_ref, w0_ref, wp_ref, b_ref) in conv_refs:
        pm = jnp.dot(h, wm_ref[...], preferred_element_type=jnp.float32)
        p0 = jnp.dot(h, w0_ref[...], preferred_element_type=jnp.float32)
        pp = jnp.dot(h, wp_ref[...], preferred_element_type=jnp.float32)
        y = (p0
             + jnp.dot(sm, pm, preferred_element_type=jnp.float32)
             + jnp.dot(sp, pp, preferred_element_type=jnp.float32)
             + b_ref[...])
        h = jnp.maximum(y, 0.0)                                   # ReLU
    o_ref[...] = h


def _softplus(x):
    return jnp.maximum(x, 0.0) + jnp.log1p(jnp.exp(-jnp.abs(x)))


def _tail_kernel(x_ref, r_ref, g_ref, w1_ref, b1_ref, w2_ref, b2_ref,
                 gamma_ref, beta_ref, eps_ref, o_ref, *, latent_dim, num_flows):
    """Fused post-encoder tail:
       spatial mean -> fused [1x1 conv | amor_u.L1 | amor_w.L1 | amor_b.L1] GEMM
       -> ReLU -> block-diagonal second-layer GEMM -> BatchNorm1d (training stats)
       -> rsample -> K planar flows with accumulated log|det J|.
       Output slab: [log_det_j | z0 | z_K | mu | log_sigma]  shape (B, 1 + 4L).
    """
    L = latent_dim
    K = num_flows

    x = x_ref[...]                                                # (B*Hc, Wc*C) packed
    # mean over H then W == R @ x @ G with constant averaging matrices
    enc = jnp.dot(r_ref[...],
                  jnp.dot(x, g_ref[...], preferred_element_type=jnp.float32),
                  preferred_element_type=jnp.float32)             # (B, C_last)

    # one lane-dense GEMM for conv1x1 + the three amortized first layers
    y1 = jnp.dot(enc, w1_ref[...], preferred_element_type=jnp.float32) + b1_ref[...]
    mu = y1[:, :L]                                                # conv1x1: no activation
    log_sigma = y1[:, L:2 * L]
    hid = jnp.maximum(y1[:, 2 * L:], 0.0)                         # ReLU for amor branches

    # block-diagonal second layer + fused BatchNorm1d (biased batch stats, training mode)
    y2 = jnp.dot(hid, w2_ref[...], preferred_element_type=jnp.float32) + b2_ref[...]
    mean = jnp.mean(y2, axis=0, keepdims=True)
    var = jnp.mean((y2 - mean) ** 2, axis=0, keepdims=True)
    y2n = (y2 - mean) * jax.lax.rsqrt(var + 1e-5) * gamma_ref[...] + beta_ref[...]

    u_all = y2n[:, :K * L]                                        # (B, K*L)
    w_all = y2n[:, K * L:2 * K * L]                               # (B, K*L)
    b_all = y2n[:, 2 * K * L:]                                    # (B, K)

    # z0 = dist.rsample()  (Independent(Normal(mu, exp(log_sigma)), 1))
    z0 = mu + jnp.exp(log_sigma) * eps_ref[...]

    # planar flow chain (Sylvester-flows `flows.Planar`):
    #   u_hat = u + (m(w^T u) - w^T u) * w / ||w||^2,  m(x) = -1 + softplus(x)
    #   z'    = z + u_hat * tanh(w^T z + b)
    #   logdet = log|1 + psi^T u_hat|,  psi = w * (1 - tanh(w^T z + b)^2)
    z = z0
    ldj = jnp.zeros((z.shape[0], 1), jnp.float32)
    for k in range(K):
        u = u_all[:, k * L:(k + 1) * L]
        w = w_all[:, k * L:(k + 1) * L]
        b = b_all[:, k:k + 1]
        uw = jnp.sum(w * u, axis=-1, keepdims=True)
        m_uw = -1.0 + _softplus(uw)
        w_norm_sq = jnp.sum(w * w, axis=-1, keepdims=True)
        u_hat = u + (m_uw - uw) * w / w_norm_sq
        wzb = jnp.sum(w * z, axis=-1, keepdims=True) + b
        t = jnp.tanh(wzb)
        z = z + u_hat * t
        psi_u = jnp.sum(w * (1.0 - t * t) * u_hat, axis=-1, keepdims=True)
        ldj = ldj + jnp.log(jnp.abs(1.0 + psi_u))

    o_ref[...] = jnp.concatenate([ldj, z0, z, mu, log_sigma], axis=-1)


# ----------------------------- pallas_call wrappers ---------------------------
def _whole(a):
    return pl.BlockSpec(a.shape, lambda i: (0, 0))


def conv_block(x2d, blk, has_pool):
    args = [x2d]
    if has_pool:
        args += [blk["p_row"], blk["p_col"]]
    for conv in blk["convs"]:
        args += list(conv["wd"]) + [conv["b"]]
    args += [blk["s_m"], blk["s_p"]]
    out_rows = blk["s_m"].shape[0]
    out_cols = blk["convs"][-1]["b"].shape[1]
    return pl.pallas_call(
        functools.partial(_conv_block_kernel, has_pool=has_pool,
                          num_convs=len(blk["convs"])),
        out_shape=jax.ShapeDtypeStruct((out_rows, out_cols), jnp.float32),
        grid=(1,),
        in_specs=[_whole(a) for a in args],
        out_specs=pl.BlockSpec((out_rows, out_cols), lambda i: (0, 0)),
        compiler_params=_ARB,
    )(*args)


def flow_tail(h2, params, eps):
    args = [h2, params["mean_r"], params["mean_g"],
            params["w1_cat"], params["b1_cat"],
            params["w2_bd"], params["b2_cat"],
            params["gamma_cat"], params["beta_cat"], eps]
    B = eps.shape[0]
    out_cols = 1 + 4 * LATENT_DIM
    return pl.pallas_call(
        functools.partial(_tail_kernel, latent_dim=LATENT_DIM, num_flows=NUM_FLOWS),
        out_shape=jax.ShapeDtypeStruct((B, out_cols), jnp.float32),
        grid=(1,),
        in_specs=[_whole(a) for a in args],
        out_specs=pl.BlockSpec((B, out_cols), lambda i: (0, 0)),
        compiler_params=_ARB,
    )(*args)


# ----------------------------- parameter / constant packing -------------------
def _normal(key, shape, std):
    return std * jax.random.normal(key, shape, dtype=jnp.float32)


def _pack_conv_weight(w_mat, cin, cout, w, dy):
    """Fold the 3 horizontal taps (row dy) of a 3x3 conv into a (w*cin, w*cout)
    block-structured matrix acting on the packed (W,C) lane layout."""
    wd = jnp.zeros((w * cin, w * cout), jnp.float32)
    for dx in range(3):
        e = dx - 1
        blk = w_mat[(dy * 3 + dx) * cin:(dy * 3 + dx + 1) * cin, :]   # (cin, cout)
        ind = np.eye(w, k=-e, dtype=np.float32)                        # wi == wo + e
        wd = wd + jnp.kron(jnp.asarray(ind), blk)
    return wd


def _row_shift_matrix(b, h, d):
    n = b * h
    m = np.zeros((n, n), np.float32)
    for bb in range(b):
        for hh in range(h):
            h2 = hh + d
            if 0 <= h2 < h:
                m[bb * h + hh, bb * h + h2] = 1.0
    return jnp.asarray(m)


def _pool_row_matrix(b, h_old):
    h_new = h_old // 2
    m = np.zeros((b * h_new, b * h_old), np.float32)
    for bb in range(b):
        for ho in range(h_new):
            for j in range(2):
                m[bb * h_new + ho, bb * h_old + 2 * ho + j] = 0.5
    return jnp.asarray(m)


def _pool_col_matrix(w_old, c):
    w_new = w_old // 2
    m = np.zeros((w_old * c, w_new * c), np.float32)
    for wo in range(w_new):
        for j in range(2):
            for cc in range(c):
                m[(2 * wo + j) * c + cc, wo * c + cc] = 0.5
    return jnp.asarray(m)


def _spatial_mean_matrices(b, hc, wc, c):
    r = np.zeros((b, b * hc), np.float32)
    for bb in range(b):
        r[bb, bb * hc:(bb + 1) * hc] = 1.0 / hc
    g = np.zeros((wc * c, c), np.float32)
    for ww in range(wc):
        for cc in range(c):
            g[ww * c + cc, cc] = 1.0 / wc
    return jnp.asarray(r), jnp.asarray(g)


def _block_diag(*mats):
    tr = sum(m.shape[0] for m in mats)
    tc = sum(m.shape[1] for m in mats)
    out = jnp.zeros((tr, tc), jnp.float32)
    r = c = 0
    for m in mats:
        out = out.at[r:r + m.shape[0], c:c + m.shape[1]].set(m)
        r += m.shape[0]
        c += m.shape[1]
    return out


def init_params(key):
    params = {}
    keys = iter(jax.random.split(key, 64))

    in_ch = INPUT_CHANNELS + NUM_CLASSES            # posterior=True concatenates segm
    spatial = [H // (2 ** i) for i in range(len(NUM_FILTERS))]   # [16, 8, 4]
    # TODO(synk): AvgPool2d ceil_mode semantics for odd spatial sizes are not handled
    # (even sizes here, so identical to the reference).

    blocks = []
    prev_ch = in_ch
    for bi, nf in enumerate(NUM_FILTERS):
        sp_b = spatial[bi]
        blk = {}
        if bi > 0:
            blk["p_row"] = _pool_row_matrix(BATCH, spatial[bi - 1])
            blk["p_col"] = _pool_col_matrix(spatial[bi - 1], prev_ch)
        blk["s_m"] = _row_shift_matrix(BATCH, sp_b, -1)
        blk["s_p"] = _row_shift_matrix(BATCH, sp_b, +1)
        convs = []
        cin = prev_ch
        for _ in range(NO_CONVS_PER_BLOCK):
            fan_in = 9 * cin
            w_mat = _normal(next(keys), (9 * cin, nf), (2.0 / fan_in) ** 0.5)
            bias = _normal(next(keys), (nf,), 0.01)
            convs.append(dict(
                wd=[_pack_conv_weight(w_mat, cin, nf, sp_b, dy) for dy in range(3)],
                b=jnp.tile(bias, sp_b).reshape(1, sp_b * nf),
            ))
            cin = nf
        blk["convs"] = convs
        blocks.append(blk)
        prev_ch = nf
    params["blocks"] = blocks

    c_last = NUM_FILTERS[-1]
    hc = wc = spatial[-1]
    params["mean_r"], params["mean_g"] = _spatial_mean_matrices(BATCH, hc, wc, c_last)

    # 1x1 conv: kaiming_normal_(fan_in, relu) weight, normal_ bias (as in reference)
    conv1x1_w = _normal(next(keys), (c_last, 2 * LATENT_DIM), (2.0 / c_last) ** 0.5)
    conv1x1_b = _normal(next(keys), (2 * LATENT_DIM,), 1.0)

    def amor(out_dim):
        return dict(
            w1=_normal(next(keys), (c_last, out_dim), (2.0 / c_last) ** 0.5),
            b1=_normal(next(keys), (out_dim,), 0.01),
            w2=_normal(next(keys), (out_dim, out_dim), (1.0 / out_dim) ** 0.5),
            b2=_normal(next(keys), (out_dim,), 0.01),
            gamma=jnp.ones((out_dim,), jnp.float32),
            beta=jnp.zeros((out_dim,), jnp.float32),
        )

    nF_oP = NUM_FLOWS * LATENT_DIM
    au, aw, ab = amor(nF_oP), amor(nF_oP), amor(NUM_FLOWS)

    # fused first layer: [conv1x1 | amor_u.L1 | amor_w.L1 | amor_b.L1]  -> (c_last, 64)
    params["w1_cat"] = jnp.concatenate([conv1x1_w, au["w1"], aw["w1"], ab["w1"]], axis=1)
    params["b1_cat"] = jnp.concatenate([conv1x1_b, au["b1"], aw["b1"], ab["b1"]]).reshape(1, -1)
    # fused second layer (block diagonal) + fused BatchNorm1d params  -> 52 features
    params["w2_bd"] = _block_diag(au["w2"], aw["w2"], ab["w2"])
    params["b2_cat"] = jnp.concatenate([au["b2"], aw["b2"], ab["b2"]]).reshape(1, -1)
    params["gamma_cat"] = jnp.concatenate([au["gamma"], aw["gamma"], ab["gamma"]]).reshape(1, -1)
    params["beta_cat"] = jnp.concatenate([au["beta"], aw["beta"], ab["beta"]]).reshape(1, -1)
    return params


# ----------------------------- forward pass ------------------------------------
@jax.jit
def planar_flow_density_forward(params, x_nchw, segm_nchw, rng):
    B = x_nchw.shape[0]
    L = LATENT_DIM

    # base_density (AxisAlignedConvGaussian, posterior=True): concat segm on channels.
    inp = jnp.concatenate([x_nchw, segm_nchw], axis=1)          # NCHW, like torch.cat dim=1
    h = jnp.transpose(inp, (0, 2, 3, 1))                        # -> NHWC
    B_, Hh, Ww, Cin = h.shape
    h2 = h.reshape(B_ * Hh, Ww * Cin)                           # packed (B*H, W*C)

    # Encoder: one fused Pallas kernel per block ([AvgPool] + 2x conv3x3 + ReLU)
    for bi, blk in enumerate(params["blocks"]):
        h2 = conv_block(h2, blk, has_pool=(bi != 0))

    # Fused tail kernel: spatial mean, mu/log_sigma, rsample, amor MLPs + BN, planar flows
    eps = jax.random.normal(rng, (B, L), dtype=jnp.float32)
    packed = flow_tail(h2, params, eps)                         # (B, 1 + 4L)

    log_det_j = packed[:, 0]
    z0 = packed[:, 1:1 + L]
    z_k = packed[:, 1 + L:1 + 2 * L]
    mu = packed[:, 1 + 2 * L:1 + 3 * L]
    log_sigma = packed[:, 1 + 3 * L:1 + 4 * L]

    # Reference returns (log_det_j, z[0], z[-1], z0_density); the torch Distribution
    # object is represented here by its parameters (mu, log_sigma).
    return log_det_j, z0, z_k, (mu, log_sigma)


# ----------------------------- main --------------------------------------------
if __name__ == "__main__":
    key = jax.random.PRNGKey(0)
    pkey, xkey, skey, ekey = jax.random.split(key, 4)

    params = init_params(pkey)
    x = jax.random.normal(xkey, (BATCH, INPUT_CHANNELS, H, W), dtype=jnp.float32)
    segm = jax.random.normal(skey, (BATCH, NUM_CLASSES, H, W), dtype=jnp.float32)

    log_det_j, z0, zk, (mu, log_sigma) = planar_flow_density_forward(params, x, segm, ekey)
    jax.block_until_ready((log_det_j, z0, zk, mu, log_sigma))

    assert log_det_j.shape == (BATCH,)
    assert z0.shape == (BATCH, LATENT_DIM)
    assert zk.shape == (BATCH, LATENT_DIM)
    assert mu.shape == (BATCH, LATENT_DIM)
    assert log_sigma.shape == (BATCH, LATENT_DIM)
    print("KERNEL_OK")
</pallas_src>

<mosaic_0001>
module attributes {stable_mosaic.version = 11 : i64} {
  func.func @_conv_block_kernel(%arg0: i32, %arg1: memref<32x64xf32, #tpu.memory_space<vmem>>, %arg2: memref<16x32xf32, #tpu.memory_space<vmem>>, %arg3: memref<64x32xf32, #tpu.memory_space<vmem>>, %arg4: memref<32x64xf32, #tpu.memory_space<vmem>>, %arg5: memref<32x64xf32, #tpu.memory_space<vmem>>, %arg6: memref<32x64xf32, #tpu.memory_space<vmem>>, %arg7: memref<1x64xf32, #tpu.memory_space<vmem>>, %arg8: memref<64x64xf32, #tpu.memory_space<vmem>>, %arg9: memref<64x64xf32, #tpu.memory_space<vmem>>, %arg10: memref<64x64xf32, #tpu.memory_space<vmem>>, %arg11: memref<1x64xf32, #tpu.memory_space<vmem>>, %arg12: memref<16x16xf32, #tpu.memory_space<vmem>>, %arg13: memref<16x16xf32, #tpu.memory_space<vmem>>, %arg14: memref<16x64xf32, #tpu.memory_space<vmem>>) attributes {dimension_semantics = [#tpu.dimension_semantics<arbitrary>], iteration_bounds = array<i64: 1>, scalar_prefetch = 0 : i64, scratch_operands = 0 : i64, tpu.core_type = #tpu.core_type<tc>, window_params = [{pipeline_mode = #tpu.pipeline_mode<synchronous>, transform_indices = @transform_0, window_bounds = array<i64: 32, 64>}, {pipeline_mode = #tpu.pipeline_mode<synchronous>, transform_indices = @transform_1, window_bounds = array<i64: 16, 32>}, {pipeline_mode = #tpu.pipeline_mode<synchronous>, transform_indices = @transform_2, window_bounds = array<i64: 64, 32>}, {pipeline_mode = #tpu.pipeline_mode<synchronous>, transform_indices = @transform_3, window_bounds = array<i64: 32, 64>}, {pipeline_mode = #tpu.pipeline_mode<synchronous>, transform_indices = @transform_4, window_bounds = array<i64: 32, 64>}, {pipeline_mode = #tpu.pipeline_mode<synchronous>, transform_indices = @transform_5, window_bounds = array<i64: 32, 64>}, {pipeline_mode = #tpu.pipeline_mode<synchronous>, transform_indices = @transform_6, window_bounds = array<i64: 1, 64>}, {pipeline_mode = #tpu.pipeline_mode<synchronous>, transform_indices = @transform_7, window_bounds = array<i64: 64, 64>}, {pipeline_mode = #tpu.pipeline_mode<synchronous>, transform_indices = @transform_8, window_bounds = array<i64: 64, 64>}, {pipeline_mode = #tpu.pipeline_mode<synchronous>, transform_indices = @transform_9, window_bounds = array<i64: 64, 64>}, {pipeline_mode = #tpu.pipeline_mode<synchronous>, transform_indices = @transform_10, window_bounds = array<i64: 1, 64>}, {pipeline_mode = #tpu.pipeline_mode<synchronous>, transform_indices = @transform_11, window_bounds = array<i64: 16, 16>}, {pipeline_mode = #tpu.pipeline_mode<synchronous>, transform_indices = @transform_12, window_bounds = array<i64: 16, 16>}, {pipeline_mode = #tpu.pipeline_mode<synchronous>, transform_indices = @transform_13, window_bounds = array<i64: 16, 64>}]} {
    %c0 = arith.constant 0 : index
    %c0_0 = arith.constant 0 : index
    %0 = vector.load %arg1[%c0, %c0_0] : memref<32x64xf32, #tpu.memory_space<vmem>>, vector<32x64xf32>
    %c0_1 = arith.constant 0 : index
    %c0_2 = arith.constant 0 : index
    %1 = vector.load %arg2[%c0_1, %c0_2] : memref<16x32xf32, #tpu.memory_space<vmem>>, vector<16x32xf32>
    %c0_3 = arith.constant 0 : index
    %c0_4 = arith.constant 0 : index
    %2 = vector.load %arg3[%c0_3, %c0_4] : memref<64x32xf32, #tpu.memory_space<vmem>>, vector<64x32xf32>
    %cst = arith.constant dense<0.000000e+00> : vector<32x32xf32>
    %3 = tpu.matmul %0, %2, %cst {dimension_numbers = #tpu.dot_dimension_numbers<[1], [0], [0], [1], [0, 0, 1, 1], [], []>} : vector<32x64xf32>, vector<64x32xf32>, vector<32x32xf32> -> vector<32x32xf32>
    %cst_5 = arith.constant dense<0.000000e+00> : vector<16x32xf32>
    %4 = tpu.matmul %1, %3, %cst_5 {dimension_numbers = #tpu.dot_dimension_numbers<[1], [0], [0], [1], [0, 0, 1, 1], [], []>} : vector<16x32xf32>, vector<32x32xf32>, vector<16x32xf32> -> vector<16x32xf32>
    %c0_6 = arith.constant 0 : index
    %c0_7 = arith.constant 0 : index
    %5 = vector.load %arg12[%c0_6, %c0_7] : memref<16x16xf32, #tpu.memory_space<vmem>>, vector<16x16xf32>
    %c0_8 = arith.constant 0 : index
    %c0_9 = arith.constant 0 : index
    %6 = vector.load %arg13[%c0_8, %c0_9] : memref<16x16xf32, #tpu.memory_space<vmem>>, vector<16x16xf32>
    %c0_10 = arith.constant 0 : index
    %c0_11 = arith.constant 0 : index
    %7 = vector.load %arg4[%c0_10, %c0_11] : memref<32x64xf32, #tpu.memory_space<vmem>>, vector<32x64xf32>
    %cst_12 = arith.constant dense<0.000000e+00> : vector<16x64xf32>
    %8 = tpu.matmul %4, %7, %cst_12 {dimension_numbers = #tpu.dot_dimension_numbers<[1], [0], [0], [1], [0, 0, 1, 1], [], []>} : vector<16x32xf32>, vector<32x64xf32>, vector<16x64xf32> -> vector<16x64xf32>
    %c0_13 = arith.constant 0 : index
    %c0_14 = arith.constant 0 : index
    %9 = vector.load %arg5[%c0_13, %c0_14] : memref<32x64xf32, #tpu.memory_space<vmem>>, vector<32x64xf32>
    %cst_15 = arith.constant dense<0.000000e+00> : vector<16x64xf32>
    %10 = tpu.matmul %4, %9, %cst_15 {dimension_numbers = #tpu.dot_dimension_numbers<[1], [0], [0], [1], [0, 0, 1, 1], [], []>} : vector<16x32xf32>, vector<32x64xf32>, vector<16x64xf32> -> vector<16x64xf32>
    %c0_16 = arith.constant 0 : index
    %c0_17 = arith.constant 0 : index
    %11 = vector.load %arg6[%c0_16, %c0_17] : memref<32x64xf32, #tpu.memory_space<vmem>>, vector<32x64xf32>
    %cst_18 = arith.constant dense<0.000000e+00> : vector<16x64xf32>
    %12 = tpu.matmul %4, %11, %cst_18 {dimension_numbers = #tpu.dot_dimension_numbers<[1], [0], [0], [1], [0, 0, 1, 1], [], []>} : vector<16x32xf32>, vector<32x64xf32>, vector<16x64xf32> -> vector<16x64xf32>
    %cst_19 = arith.constant dense<0.000000e+00> : vector<16x64xf32>
    %13 = tpu.matmul %5, %8, %cst_19 {dimension_numbers = #tpu.dot_dimension_numbers<[1], [0], [0], [1], [0, 0, 1, 1], [], []>} : vector<16x16xf32>, vector<16x64xf32>, vector<16x64xf32> -> vector<16x64xf32>
    %14 = arith.addf %10, %13 : vector<16x64xf32>
    %cst_20 = arith.constant dense<0.000000e+00> : vector<16x64xf32>
    %15 = tpu.matmul %6, %12, %cst_20 {dimension_numbers = #tpu.dot_dimension_numbers<[1], [0], [0], [1], [0, 0, 1, 1], [], []>} : vector<16x16xf32>, vector<16x64xf32>, vector<16x64xf32> -> vector<16x64xf32>
    %16 = arith.addf %14, %15 : vector<16x64xf32>
    %c0_21 = arith.constant 0 : index
    %c0_22 = arith.constant 0 : index
    %17 = vector.load %arg7[%c0_21, %c0_22] : memref<1x64xf32, #tpu.memory_space<vmem>>, vector<1x64xf32>
    %18 = vector.broadcast %17 : vector<1x64xf32> to vector<16x64xf32>
    %19 = arith.addf %16, %18 : vector<16x64xf32>
    %cst_23 = arith.constant 0.000000e+00 : f32
    %20 = vector.broadcast %cst_23 : f32 to vector<16x64xf32>
    %21 = arith.maximumf %19, %20 : vector<16x64xf32>
    %c0_24 = arith.constant 0 : index
    %c0_25 = arith.constant 0 : index
    %22 = vector.load %arg8[%c0_24, %c0_25] : memref<64x64xf32, #tpu.memory_space<vmem>>, vector<64x64xf32>
    %cst_26 = arith.constant dense<0.000000e+00> : vector<16x64xf32>
    %23 = tpu.matmul %21, %22, %cst_26 {dimension_numbers = #tpu.dot_dimension_numbers<[1], [0], [0], [1], [0, 0, 1, 1], [], []>} : vector<16x64xf32>, vector<64x64xf32>, vector<16x64xf32> -> vector<16x64xf32>
    %c0_27 = arith.constant 0 : index
    %c0_28 = arith.constant 0 : index
    %24 = vector.load %arg9[%c0_27, %c0_28] : memref<64x64xf32, #tpu.memory_space<vmem>>, vector<64x64xf32>
    %cst_29 = arith.constant dense<0.000000e+00> : vector<16x64xf32>
    %25 = tpu.matmul %21, %24, %cst_29 {dimension_numbers = #tpu.dot_dimension_numbers<[1], [0], [0], [1], [0, 0, 1, 1], [], []>} : vector<16x64xf32>, vector<64x64xf32>, vector<16x64xf32> -> vector<16x64xf32>
    %c0_30 = arith.constant 0 : index
    %c0_31 = arith.constant 0 : index
    %26 = vector.load %arg10[%c0_30, %c0_31] : memref<64x64xf32, #tpu.memory_space<vmem>>, vector<64x64xf32>
    %cst_32 = arith.constant dense<0.000000e+00> : vector<16x64xf32>
    %27 = tpu.matmul %21, %26, %cst_32 {dimension_numbers = #tpu.dot_dimension_numbers<[1], [0], [0], [1], [0, 0, 1, 1], [], []>} : vector<16x64xf32>, vector<64x64xf32>, vector<16x64xf32> -> vector<16x64xf32>
    %cst_33 = arith.constant dense<0.000000e+00> : vector<16x64xf32>
    %28 = tpu.matmul %5, %23, %cst_33 {dimension_numbers = #tpu.dot_dimension_numbers<[1], [0], [0], [1], [0, 0, 1, 1], [], []>} : vector<16x16xf32>, vector<16x64xf32>, vector<16x64xf32> -> vector<16x64xf32>
    %29 = arith.addf %25, %28 : vector<16x64xf32>
    %cst_34 = arith.constant dense<0.000000e+00> : vector<16x64xf32>
    %30 = tpu.matmul %6, %27, %cst_34 {dimension_numbers = #tpu.dot_dimension_numbers<[1], [0], [0], [1], [0, 0, 1, 1], [], []>} : vector<16x16xf32>, vector<16x64xf32>, vector<16x64xf32> -> vector<16x64xf32>
    %31 = arith.addf %29, %30 : vector<16x64xf32>
    %c0_35 = arith.constant 0 : index
    %c0_36 = arith.constant 0 : index
    %32 = vector.load %arg11[%c0_35, %c0_36] : memref<1x64xf32, #tpu.memory_space<vmem>>, vector<1x64xf32>
    %33 = vector.broadcast %32 : vector<1x64xf32> to vector<16x64xf32>
    %34 = arith.addf %31, %33 : vector<16x64xf32>
    %cst_37 = arith.constant 0.000000e+00 : f32
    %35 = vector.broadcast %cst_37 : f32 to vector<16x64xf32>
    %36 = arith.maximumf %34, %35 : vector<16x64xf32>
    %c0_38 = arith.constant 0 : index
    %c0_39 = arith.constant 0 : index
    %37 = vector.load %arg14[%c0_38, %c0_39] : memref<16x64xf32, #tpu.memory_space<vmem>>, vector<16x64xf32>
    tpu.vector_store %arg14[%c0_38, %c0_39], %36 {strides = array<i32>} : memref<16x64xf32, #tpu.memory_space<vmem>>, vector<16x64xf32>,
    return
  }
  func.func @transform_0(%arg0: i32) -> (i32, i32) {
    %c0_i32 = arith.constant 0 : i32
    %c0_i32_0 = arith.constant 0 : i32
    %c0_i32_1 = arith.constant 0 : i32
    return %c0_i32, %c0_i32_0 : i32, i32
  }
  func.func @transform_1(%arg0: i32) -> (i32, i32) {
    %c0_i32 = arith.constant 0 : i32
    %c0_i32_0 = arith.constant 0 : i32
    %c0_i32_1 = arith.constant 0 : i32
    return %c0_i32, %c0_i32_0 : i32, i32
  }
  func.func @transform_2(%arg0: i32) -> (i32, i32) {
    %c0_i32 = arith.constant 0 : i32
    %c0_i32_0 = arith.constant 0 : i32
    %c0_i32_1 = arith.constant 0 : i32
    return %c0_i32, %c0_i32_0 : i32, i32
  }
  func.func @transform_3(%arg0: i32) -> (i32, i32) {
    %c0_i32 = arith.constant 0 : i32
    %c0_i32_0 = arith.constant 0 : i32
    %c0_i32_1 = arith.constant 0 : i32
    return %c0_i32, %c0_i32_0 : i32, i32
  }
  func.func @transform_4(%arg0: i32) -> (i32, i32) {
    %c0_i32 = arith.constant 0 : i32
    %c0_i32_0 = arith.constant 0 : i32
    %c0_i32_1 = arith.constant 0 : i32
    return %c0_i32, %c0_i32_0 : i32, i32
  }
  func.func @transform_5(%arg0: i32) -> (i32, i32) {
    %c0_i32 = arith.constant 0 : i32
    %c0_i32_0 = arith.constant 0 : i32
    %c0_i32_1 = arith.constant 0 : i32
    return %c0_i32, %c0_i32_0 : i32, i32
  }
  func.func @transform_6(%arg0: i32) -> (i32, i32) {
    %c0_i32 = arith.constant 0 : i32
    %c0_i32_0 = arith.constant 0 : i32
    %c0_i32_1 = arith.constant 0 : i32
    return %c0_i32, %c0_i32_0 : i32, i32
  }
  func.func @transform_7(%arg0: i32) -> (i32, i32) {
    %c0_i32 = arith.constant 0 : i32
    %c0_i32_0 = arith.constant 0 : i32
    %c0_i32_1 = arith.constant 0 : i32
    return %c0_i32, %c0_i32_0 : i32, i32
  }
  func.func @transform_8(%arg0: i32) -> (i32, i32) {
    %c0_i32 = arith.constant 0 : i32
    %c0_i32_0 = arith.constant 0 : i32
    %c0_i32_1 = arith.constant 0 : i32
    return %c0_i32, %c0_i32_0 : i32, i32
  }
  func.func @transform_9(%arg0: i32) -> (i32, i32) {
    %c0_i32 = arith.constant 0 : i32
    %c0_i32_0 = arith.constant 0 : i32
    %c0_i32_1 = arith.constant 0 : i32
    return %c0_i32, %c0_i32_0 : i32, i32
  }
  func.func @transform_10(%arg0: i32) -> (i32, i32) {
    %c0_i32 = arith.constant 0 : i32
    %c0_i32_0 = arith.constant 0 : i32
    %c0_i32_1 = arith.constant 0 : i32
    return %c0_i32, %c0_i32_0 : i32, i32
  }
  func.func @transform_11(%arg0: i32) -> (i32, i32) {
    %c0_i32 = arith.constant 0 : i32
    %c0_i32_0 = arith.constant 0 : i32
    %c0_i32_1 = arith.constant 0 : i32
    return %c0_i32, %c0_i32_0 : i32, i32
  }
  func.func @transform_12(%arg0: i32) -> (i32, i32) {
    %c0_i32 = arith.constant 0 : i32
    %c0_i32_0 = arith.constant 0 : i32
    %c0_i32_1 = arith.constant 0 : i32
    return %c0_i32, %c0_i32_0 : i32, i32
  }
  func.func @transform_13(%arg0: i32) -> (i32, i32) {
    %c0_i32 = arith.constant 0 : i32
    %c0_i32_0 = arith.constant 0 : i32
    %c0_i32_1 = arith.constant 0 : i32
    return %c0_i32, %c0_i32_0 : i32, i32
  }
}

module attributes {stable_mosaic.version = 11 : i64} {
  func.func @_conv_block_kernel(%arg0: i32, %arg1: memref<32x64xf32, #tpu.memory_space<vmem>>, %arg2: memref<64x64xf32, #tpu.memory_space<vmem>>, %arg3: memref<64x64xf32, #tpu.memory_space<vmem>>, %arg4: memref<64x64xf32, #tpu.memory_space<vmem>>, %arg5: memref<1x64xf32, #tpu.memory_space<vmem>>, %arg6: memref<64x64xf32, #tpu.memory_space<vmem>>, %arg7: memref<64x64xf32, #tpu.memory_space<vmem>>, %arg8: memref<64x64xf32, #tpu.memory_space<vmem>>, %arg9: memref<1x64xf32, #tpu.memory_space<vmem>>, %arg10: memref<32x32xf32, #tpu.memory_space<vmem>>, %arg11: memref<32x32xf32, #tpu.memory_space<vmem>>, %arg12: memref<32x64xf32, #tpu.memory_space<vmem>>) attributes {dimension_semantics = [#tpu.dimension_semantics<arbitrary>], iteration_bounds = array<i64: 1>, scalar_prefetch = 0 : i64, scratch_operands = 0 : i64, tpu.core_type = #tpu.core_type<tc>, window_params = [{pipeline_mode = #tpu.pipeline_mode<synchronous>, transform_indices = @transform_0, window_bounds = array<i64: 32, 64>}, {pipeline_mode = #tpu.pipeline_mode<synchronous>, transform_indices = @transform_1, window_bounds = array<i64: 64, 64>}, {pipeline_mode = #tpu.pipeline_mode<synchronous>, transform_indices = @transform_2, window_bounds = array<i64: 64, 64>}, {pipeline_mode = #tpu.pipeline_mode<synchronous>, transform_indices = @transform_3, window_bounds = array<i64: 64, 64>}, {pipeline_mode = #tpu.pipeline_mode<synchronous>, transform_indices = @transform_4, window_bounds = array<i64: 1, 64>}, {pipeline_mode = #tpu.pipeline_mode<synchronous>, transform_indices = @transform_5, window_bounds = array<i64: 64, 64>}, {pipeline_mode = #tpu.pipeline_mode<synchronous>, transform_indices = @transform_6, window_bounds = array<i64: 64, 64>}, {pipeline_mode = #tpu.pipeline_mode<synchronous>, transform_indices = @transform_7, window_bounds = array<i64: 64, 64>}, {pipeline_mode = #tpu.pipeline_mode<synchronous>, transform_indices = @transform_8, window_bounds = array<i64: 1, 64>}, {pipeline_mode = #tpu.pipeline_mode<synchronous>, transform_indices = @transform_9, window_bounds = array<i64: 32, 32>}, {pipeline_mode = #tpu.pipeline_mode<synchronous>, transform_indices = @transform_10, window_bounds = array<i64: 32, 32>}, {pipeline_mode = #tpu.pipeline_mode<synchronous>, transform_indices = @transform_11, window_bounds = array<i64: 32, 64>}]} {
    %c0 = arith.constant 0 : index
    %c0_0 = arith.constant 0 : index
    %0 = vector.load %arg1[%c0, %c0_0] : memref<32x64xf32, #tpu.memory_space<vmem>>, vector<32x64xf32>
    %c0_1 = arith.constant 0 : index
    %c0_2 = arith.constant 0 : index
    %1 = vector.load %arg10[%c0_1, %c0_2] : memref<32x32xf32, #tpu.memory_space<vmem>>, vector<32x32xf32>
    %c0_3 = arith.constant 0 : index
    %c0_4 = arith.constant 0 : index
    %2 = vector.load %arg11[%c0_3, %c0_4] : memref<32x32xf32, #tpu.memory_space<vmem>>, vector<32x32xf32>
    %c0_5 = arith.constant 0 : index
    %c0_6 = arith.constant 0 : index
    %3 = vector.load %arg2[%c0_5, %c0_6] : memref<64x64xf32, #tpu.memory_space<vmem>>, vector<64x64xf32>
    %cst = arith.constant dense<0.000000e+00> : vector<32x64xf32>
    %4 = tpu.matmul %0, %3, %cst {dimension_numbers = #tpu.dot_dimension_numbers<[1], [0], [0], [1], [0, 0, 1, 1], [], []>} : vector<32x64xf32>, vector<64x64xf32>, vector<32x64xf32> -> vector<32x64xf32>
    %c0_7 = arith.constant 0 : index
    %c0_8 = arith.constant 0 : index
    %5 = vector.load %arg3[%c0_7, %c0_8] : memref<64x64xf32, #tpu.memory_space<vmem>>, vector<64x64xf32>
    %cst_9 = arith.constant dense<0.000000e+00> : vector<32x64xf32>
    %6 = tpu.matmul %0, %5, %cst_9 {dimension_numbers = #tpu.dot_dimension_numbers<[1], [0], [0], [1], [0, 0, 1, 1], [], []>} : vector<32x64xf32>, vector<64x64xf32>, vector<32x64xf32> -> vector<32x64xf32>
    %c0_10 = arith.constant 0 : index
    %c0_11 = arith.constant 0 : index
    %7 = vector.load %arg4[%c0_10, %c0_11] : memref<64x64xf32, #tpu.memory_space<vmem>>, vector<64x64xf32>
    %cst_12 = arith.constant dense<0.000000e+00> : vector<32x64xf32>
    %8 = tpu.matmul %0, %7, %cst_12 {dimension_numbers = #tpu.dot_dimension_numbers<[1], [0], [0], [1], [0, 0, 1, 1], [], []>} : vector<32x64xf32>, vector<64x64xf32>, vector<32x64xf32> -> vector<32x64xf32>
    %cst_13 = arith.constant dense<0.000000e+00> : vector<32x64xf32>
    %9 = tpu.matmul %1, %4, %cst_13 {dimension_numbers = #tpu.dot_dimension_numbers<[1], [0], [0], [1], [0, 0, 1, 1], [], []>} : vector<32x32xf32>, vector<32x64xf32>, vector<32x64xf32> -> vector<32x64xf32>
    %10 = arith.addf %6, %9 : vector<32x64xf32>
    %cst_14 = arith.constant dense<0.000000e+00> : vector<32x64xf32>
    %11 = tpu.matmul %2, %8, %cst_14 {dimension_numbers = #tpu.dot_dimension_numbers<[1], [0], [0], [1], [0, 0, 1, 1], [], []>} : vector<32x32xf32>, vector<32x64xf32>, vector<32x64xf32> -> vector<32x64xf32>
    %12 = arith.addf %10, %11 : vector<32x64xf32>
    %c0_15 = arith.constant 0 : index
    %c0_16 = arith.constant 0 : index
    %13 = vector.load %arg5[%c0_15, %c0_16] : memref<1x64xf32, #tpu.memory_space<vmem>>, vector<1x64xf32>
    %14 = vector.broadcast %13 : vector<1x64xf32> to vector<32x64xf32>
    %15 = arith.addf %12, %14 : vector<32x64xf32>
    %cst_17 = arith.constant 0.000000e+00 : f32
    %16 = vector.broadcast %cst_17 : f32 to vector<32x64xf32>
    %17 = arith.maximumf %15, %16 : vector<32x64xf32>
    %c0_18 = arith.constant 0 : index
    %c0_19 = arith.constant 0 : index
    %18 = vector.load %arg6[%c0_18, %c0_19] : memref<64x64xf32, #tpu.memory_space<vmem>>, vector<64x64xf32>
    %cst_20 = arith.constant dense<0.000000e+00> : vector<32x64xf32>
    %19 = tpu.matmul %17, %18, %cst_20 {dimension_numbers = #tpu.dot_dimension_numbers<[1], [0], [0], [1], [0, 0, 1, 1], [], []>} : vector<32x64xf32>, vector<64x64xf32>, vector<32x64xf32> -> vector<32x64xf32>
    %c0_21 = arith.constant 0 : index
    %c0_22 = arith.constant 0 : index
    %20 = vector.load %arg7[%c0_21, %c0_22] : memref<64x64xf32, #tpu.memory_space<vmem>>, vector<64x64xf32>
    %cst_23 = arith.constant dense<0.000000e+00> : vector<32x64xf32>
    %21 = tpu.matmul %17, %20, %cst_23 {dimension_numbers = #tpu.dot_dimension_numbers<[1], [0], [0], [1], [0, 0, 1, 1], [], []>} : vector<32x64xf32>, vector<64x64xf32>, vector<32x64xf32> -> vector<32x64xf32>
    %c0_24 = arith.constant 0 : index
    %c0_25 = arith.constant 0 : index
    %22 = vector.load %arg8[%c0_24, %c0_25] : memref<64x64xf32, #tpu.memory_space<vmem>>, vector<64x64xf32>
    %cst_26 = arith.constant dense<0.000000e+00> : vector<32x64xf32>
    %23 = tpu.matmul %17, %22, %cst_26 {dimension_numbers = #tpu.dot_dimension_numbers<[1], [0], [0], [1], [0, 0, 1, 1], [], []>} : vector<32x64xf32>, vector<64x64xf32>, vector<32x64xf32> -> vector<32x64xf32>
    %cst_27 = arith.constant dense<0.000000e+00> : vector<32x64xf32>
    %24 = tpu.matmul %1, %19, %cst_27 {dimension_numbers = #tpu.dot_dimension_numbers<[1], [0], [0], [1], [0, 0, 1, 1], [], []>} : vector<32x32xf32>, vector<32x64xf32>, vector<32x64xf32> -> vector<32x64xf32>
    %25 = arith.addf %21, %24 : vector<32x64xf32>
    %cst_28 = arith.constant dense<0.000000e+00> : vector<32x64xf32>
    %26 = tpu.matmul %2, %23, %cst_28 {dimension_numbers = #tpu.dot_dimension_numbers<[1], [0], [0], [1], [0, 0, 1, 1], [], []>} : vector<32x32xf32>, vector<32x64xf32>, vector<32x64xf32> -> vector<32x64xf32>
    %27 = arith.addf %25, %26 : vector<32x64xf32>
    %c0_29 = arith.constant 0 : index
    %c0_30 = arith.constant 0 : index
    %28 = vector.load %arg9[%c0_29, %c0_30] : memref<1x64xf32, #tpu.memory_space<vmem>>, vector<1x64xf32>
    %29 = vector.broadcast %28 : vector<1x64xf32> to vector<32x64xf32>
    %30 = arith.addf %27, %29 : vector<32x64xf32>
    %cst_31 = arith.constant 0.000000e+00 : f32
    %31 = vector.broadcast %cst_31 : f32 to vector<32x64xf32>
    %32 = arith.maximumf %30, %31 : vector<32x64xf32>
    %c0_32 = arith.constant 0 : index
    %c0_33 = arith.constant 0 : index
    %33 = vector.load %arg12[%c0_32, %c0_33] : memref<32x64xf32, #tpu.memory_space<vmem>>, vector<32x64xf32>
    tpu.vector_store %arg12[%c0_32, %c0_33], %32 {strides = array<i32>} : memref<32x64xf32, #tpu.memory_space<vmem>>, vector<32x64xf32>,
    return
  }
  func.func @transform_0(%arg0: i32) -> (i32, i32) {
    %c0_i32 = arith.constant 0 : i32
    %c0_i32_0 = arith.constant 0 : i32
    %c0_i32_1 = arith.constant 0 : i32
    return %c0_i32, %c0_i32_0 : i32, i32
  }
  func.func @transform_1(%arg0: i32) -> (i32, i32) {
    %c0_i32 = arith.constant 0 : i32
    %c0_i32_0 = arith.constant 0 : i32
    %c0_i32_1 = arith.constant 0 : i32
    return %c0_i32, %c0_i32_0 : i32, i32
  }
  func.func @transform_2(%arg0: i32) -> (i32, i32) {
    %c0_i32 = arith.constant 0 : i32
    %c0_i32_0 = arith.constant 0 : i32
    %c0_i32_1 = arith.constant 0 : i32
    return %c0_i32, %c0_i32_0 : i32, i32
  }
  func.func @transform_3(%arg0: i32) -> (i32, i32) {
    %c0_i32 = arith.constant 0 : i32
    %c0_i32_0 = arith.constant 0 : i32
    %c0_i32_1 = arith.constant 0 : i32
    return %c0_i32, %c0_i32_0 : i32, i32
  }
  func.func @transform_4(%arg0: i32) -> (i32, i32) {
    %c0_i32 = arith.constant 0 : i32
    %c0_i32_0 = arith.constant 0 : i32
    %c0_i32_1 = arith.constant 0 : i32
    return %c0_i32, %c0_i32_0 : i32, i32
  }
  func.func @transform_5(%arg0: i32) -> (i32, i32) {
    %c0_i32 = arith.constant 0 : i32
    %c0_i32_0 = arith.constant 0 : i32
    %c0_i32_1 = arith.constant 0 : i32
    return %c0_i32, %c0_i32_0 : i32, i32
  }
  func.func @transform_6(%arg0: i32) -> (i32, i32) {
    %c0_i32 = arith.constant 0 : i32
    %c0_i32_0 = arith.constant 0 : i32
    %c0_i32_1 = arith.constant 0 : i32
    return %c0_i32, %c0_i32_0 : i32, i32
  }
  func.func @transform_7(%arg0: i32) -> (i32, i32) {
    %c0_i32 = arith.constant 0 : i32
    %c0_i32_0 = arith.constant 0 : i32
    %c0_i32_1 = arith.constant 0 : i32
    return %c0_i32, %c0_i32_0 : i32, i32
  }
  func.func @transform_8(%arg0: i32) -> (i32, i32) {
    %c0_i32 = arith.constant 0 : i32
    %c0_i32_0 = arith.constant 0 : i32
    %c0_i32_1 = arith.constant 0 : i32
    return %c0_i32, %c0_i32_0 : i32, i32
  }
  func.func @transform_9(%arg0: i32) -> (i32, i32) {
    %c0_i32 = arith.constant 0 : i32
    %c0_i32_0 = arith.constant 0 : i32
    %c0_i32_1 = arith.constant 0 : i32
    return %c0_i32, %c0_i32_0 : i32, i32
  }
  func.func @transform_10(%arg0: i32) -> (i32, i32) {
    %c0_i32 = arith.constant 0 : i32
    %c0_i32_0 = arith.constant 0 : i32
    %c0_i32_1 = arith.constant 0 : i32
    return %c0_i32, %c0_i32_0 : i32, i32
  }
  func.func @transform_11(%arg0: i32) -> (i32, i32) {
    %c0_i32 = arith.constant 0 : i32
    %c0_i32_0 = arith.constant 0 : i32
    %c0_i32_1 = arith.constant 0 : i32
    return %c0_i32, %c0_i32_0 : i32, i32
  }
}

module attributes {stable_mosaic.version = 11 : i64} {
  func.func @_conv_block_kernel(%arg0: i32, %arg1: memref<16x64xf32, #tpu.memory_space<vmem>>, %arg2: memref<8x16xf32, #tpu.memory_space<vmem>>, %arg3: memref<64x32xf32, #tpu.memory_space<vmem>>, %arg4: memref<32x32xf32, #tpu.memory_space<vmem>>, %arg5: memref<32x32xf32, #tpu.memory_space<vmem>>, %arg6: memref<32x32xf32, #tpu.memory_space<vmem>>, %arg7: memref<1x32xf32, #tpu.memory_space<vmem>>, %arg8: memref<32x32xf32, #tpu.memory_space<vmem>>, %arg9: memref<32x32xf32, #tpu.memory_space<vmem>>, %arg10: memref<32x32xf32, #tpu.memory_space<vmem>>, %arg11: memref<1x32xf32, #tpu.memory_space<vmem>>, %arg12: memref<8x8xf32, #tpu.memory_space<vmem>>, %arg13: memref<8x8xf32, #tpu.memory_space<vmem>>, %arg14: memref<8x32xf32, #tpu.memory_space<vmem>>) attributes {dimension_semantics = [#tpu.dimension_semantics<arbitrary>], iteration_bounds = array<i64: 1>, scalar_prefetch = 0 : i64, scratch_operands = 0 : i64, tpu.core_type = #tpu.core_type<tc>, window_params = [{pipeline_mode = #tpu.pipeline_mode<synchronous>, transform_indices = @transform_0, window_bounds = array<i64: 16, 64>}, {pipeline_mode = #tpu.pipeline_mode<synchronous>, transform_indices = @transform_1, window_bounds = array<i64: 8, 16>}, {pipeline_mode = #tpu.pipeline_mode<synchronous>, transform_indices = @transform_2, window_bounds = array<i64: 64, 32>}, {pipeline_mode = #tpu.pipeline_mode<synchronous>, transform_indices = @transform_3, window_bounds = array<i64: 32, 32>}, {pipeline_mode = #tpu.pipeline_mode<synchronous>, transform_indices = @transform_4, window_bounds = array<i64: 32, 32>}, {pipeline_mode = #tpu.pipeline_mode<synchronous>, transform_indices = @transform_5, window_bounds = array<i64: 32, 32>}, {pipeline_mode = #tpu.pipeline_mode<synchronous>, transform_indices = @transform_6, window_bounds = array<i64: 1, 32>}, {pipeline_mode = #tpu.pipeline_mode<synchronous>, transform_indices = @transform_7, window_bounds = array<i64: 32, 32>}, {pipeline_mode = #tpu.pipeline_mode<synchronous>, transform_indices = @transform_8, window_bounds = array<i64: 32, 32>}, {pipeline_mode = #tpu.pipeline_mode<synchronous>, transform_indices = @transform_9, window_bounds = array<i64: 32, 32>}, {pipeline_mode = #tpu.pipeline_mode<synchronous>, transform_indices = @transform_10, window_bounds = array<i64: 1, 32>}, {pipeline_mode = #tpu.pipeline_mode<synchronous>, transform_indices = @transform_11, window_bounds = array<i64: 8, 8>}, {pipeline_mode = #tpu.pipeline_mode<synchronous>, transform_indices = @transform_12, window_bounds = array<i64: 8, 8>}, {pipeline_mode = #tpu.pipeline_mode<synchronous>, transform_indices = @transform_13, window_bounds = array<i64: 8, 32>}]} {
    %c0 = arith.constant 0 : index
    %c0_0 = arith.constant 0 : index
    %0 = vector.load %arg1[%c0, %c0_0] : memref<16x64xf32, #tpu.memory_space<vmem>>, vector<16x64xf32>
    %c0_1 = arith.constant 0 : index
    %c0_2 = arith.constant 0 : index
    %1 = vector.load %arg2[%c0_1, %c0_2] : memref<8x16xf32, #tpu.memory_space<vmem>>, vector<8x16xf32>
    %c0_3 = arith.constant 0 : index
    %c0_4 = arith.constant 0 : index
    %2 = vector.load %arg3[%c0_3, %c0_4] : memref<64x32xf32, #tpu.memory_space<vmem>>, vector<64x32xf32>
    %cst = arith.constant dense<0.000000e+00> : vector<16x32xf32>
    %3 = tpu.matmul %0, %2, %cst {dimension_numbers = #tpu.dot_dimension_numbers<[1], [0], [0], [1], [0, 0, 1, 1], [], []>} : vector<16x64xf32>, vector<64x32xf32>, vector<16x32xf32> -> vector<16x32xf32>
    %cst_5 = arith.constant dense<0.000000e+00> : vector<8x32xf32>
    %4 = tpu.matmul %1, %3, %cst_5 {dimension_numbers = #tpu.dot_dimension_numbers<[1], [0], [0], [1], [0, 0, 1, 1], [], []>} : vector<8x16xf32>, vector<16x32xf32>, vector<8x32xf32> -> vector<8x32xf32>
    %c0_6 = arith.constant 0 : index
    %c0_7 = arith.constant 0 : index
    %5 = vector.load %arg12[%c0_6, %c0_7] : memref<8x8xf32, #tpu.memory_space<vmem>>, vector<8x8xf32>
    %c0_8 = arith.constant 0 : index
    %c0_9 = arith.constant 0 : index
    %6 = vector.load %arg13[%c0_8, %c0_9] : memref<8x8xf32, #tpu.memory_space<vmem>>, vector<8x8xf32>
    %c0_10 = arith.constant 0 : index
    %c0_11 = arith.constant 0 : index
    %7 = vector.load %arg4[%c0_10, %c0_11] : memref<32x32xf32, #tpu.memory_space<vmem>>, vector<32x32xf32>
    %cst_12 = arith.constant dense<0.000000e+00> : vector<8x32xf32>
    %8 = tpu.matmul %4, %7, %cst_12 {dimension_numbers = #tpu.dot_dimension_numbers<[1], [0], [0], [1], [0, 0, 1, 1], [], []>} : vector<8x32xf32>, vector<32x32xf32>, vector<8x32xf32> -> vector<8x32xf32>
    %c0_13 = arith.constant 0 : index
    %c0_14 = arith.constant 0 : index
    %9 = vector.load %arg5[%c0_13, %c0_14] : memref<32x32xf32, #tpu.memory_space<vmem>>, vector<32x32xf32>
    %cst_15 = arith.constant dense<0.000000e+00> : vector<8x32xf32>
    %10 = tpu.matmul %4, %9, %cst_15 {dimension_numbers = #tpu.dot_dimension_numbers<[1], [0], [0], [1], [0, 0, 1, 1], [], []>} : vector<8x32xf32>, vector<32x32xf32>, vector<8x32xf32> -> vector<8x32xf32>
    %c0_16 = arith.constant 0 : index
    %c0_17 = arith.constant 0 : index
    %11 = vector.load %arg6[%c0_16, %c0_17] : memref<32x32xf32, #tpu.memory_space<vmem>>, vector<32x32xf32>
    %cst_18 = arith.constant dense<0.000000e+00> : vector<8x32xf32>
    %12 = tpu.matmul %4, %11, %cst_18 {dimension_numbers = #tpu.dot_dimension_numbers<[1], [0], [0], [1], [0, 0, 1, 1], [], []>} : vector<8x32xf32>, vector<32x32xf32>, vector<8x32xf32> -> vector<8x32xf32>
    %cst_19 = arith.constant dense<0.000000e+00> : vector<8x32xf32>
    %13 = tpu.matmul %5, %8, %cst_19 {dimension_numbers = #tpu.dot_dimension_numbers<[1], [0], [0], [1], [0, 0, 1, 1], [], []>} : vector<8x8xf32>, vector<8x32xf32>, vector<8x32xf32> -> vector<8x32xf32>
    %14 = arith.addf %10, %13 : vector<8x32xf32>
    %cst_20 = arith.constant dense<0.000000e+00> : vector<8x32xf32>
    %15 = tpu.matmul %6, %12, %cst_20 {dimension_numbers = #tpu.dot_dimension_numbers<[1], [0], [0], [1], [0, 0, 1, 1], [], []>} : vector<8x8xf32>, vector<8x32xf32>, vector<8x32xf32> -> vector<8x32xf32>
    %16 = arith.addf %14, %15 : vector<8x32xf32>
    %c0_21 = arith.constant 0 : index
    %c0_22 = arith.constant 0 : index
    %17 = vector.load %arg7[%c0_21, %c0_22] : memref<1x32xf32, #tpu.memory_space<vmem>>, vector<1x32xf32>
    %18 = vector.broadcast %17 : vector<1x32xf32> to vector<8x32xf32>
    %19 = arith.addf %16, %18 : vector<8x32xf32>
    %cst_23 = arith.constant 0.000000e+00 : f32
    %20 = vector.broadcast %cst_23 : f32 to vector<8x32xf32>
    %21 = arith.maximumf %19, %20 : vector<8x32xf32>
    %c0_24 = arith.constant 0 : index
    %c0_25 = arith.constant 0 : index
    %22 = vector.load %arg8[%c0_24, %c0_25] : memref<32x32xf32, #tpu.memory_space<vmem>>, vector<32x32xf32>
    %cst_26 = arith.constant dense<0.000000e+00> : vector<8x32xf32>
    %23 = tpu.matmul %21, %22, %cst_26 {dimension_numbers = #tpu.dot_dimension_numbers<[1], [0], [0], [1], [0, 0, 1, 1], [], []>} : vector<8x32xf32>, vector<32x32xf32>, vector<8x32xf32> -> vector<8x32xf32>
    %c0_27 = arith.constant 0 : index
    %c0_28 = arith.constant 0 : index
    %24 = vector.load %arg9[%c0_27, %c0_28] : memref<32x32xf32, #tpu.memory_space<vmem>>, vector<32x32xf32>
    %cst_29 = arith.constant dense<0.000000e+00> : vector<8x32xf32>
    %25 = tpu.matmul %21, %24, %cst_29 {dimension_numbers = #tpu.dot_dimension_numbers<[1], [0], [0], [1], [0, 0, 1, 1], [], []>} : vector<8x32xf32>, vector<32x32xf32>, vector<8x32xf32> -> vector<8x32xf32>
    %c0_30 = arith.constant 0 : index
    %c0_31 = arith.constant 0 : index
    %26 = vector.load %arg10[%c0_30, %c0_31] : memref<32x32xf32, #tpu.memory_space<vmem>>, vector<32x32xf32>
    %cst_32 = arith.constant dense<0.000000e+00> : vector<8x32xf32>
    %27 = tpu.matmul %21, %26, %cst_32 {dimension_numbers = #tpu.dot_dimension_numbers<[1], [0], [0], [1], [0, 0, 1, 1], [], []>} : vector<8x32xf32>, vector<32x32xf32>, vector<8x32xf32> -> vector<8x32xf32>
    %cst_33 = arith.constant dense<0.000000e+00> : vector<8x32xf32>
    %28 = tpu.matmul %5, %23, %cst_33 {dimension_numbers = #tpu.dot_dimension_numbers<[1], [0], [0], [1], [0, 0, 1, 1], [], []>} : vector<8x8xf32>, vector<8x32xf32>, vector<8x32xf32> -> vector<8x32xf32>
    %29 = arith.addf %25, %28 : vector<8x32xf32>
    %cst_34 = arith.constant dense<0.000000e+00> : vector<8x32xf32>
    %30 = tpu.matmul %6, %27, %cst_34 {dimension_numbers = #tpu.dot_dimension_numbers<[1], [0], [0], [1], [0, 0, 1, 1], [], []>} : vector<8x8xf32>, vector<8x32xf32>, vector<8x32xf32> -> vector<8x32xf32>
    %31 = arith.addf %29, %30 : vector<8x32xf32>
    %c0_35 = arith.constant 0 : index
    %c0_36 = arith.constant 0 : index
    %32 = vector.load %arg11[%c0_35, %c0_36] : memref<1x32xf32, #tpu.memory_space<vmem>>, vector<1x32xf32>
    %33 = vector.broadcast %32 : vector<1x32xf32> to vector<8x32xf32>
    %34 = arith.addf %31, %33 : vector<8x32xf32>
    %cst_37 = arith.constant 0.000000e+00 : f32
    %35 = vector.broadcast %cst_37 : f32 to vector<8x32xf32>
    %36 = arith.maximumf %34, %35 : vector<8x32xf32>
    %c0_38 = arith.constant 0 : index
    %c0_39 = arith.constant 0 : index
    %37 = vector.load %arg14[%c0_38, %c0_39] : memref<8x32xf32, #tpu.memory_space<vmem>>, vector<8x32xf32>
    tpu.vector_store %arg14[%c0_38, %c0_39], %36 {strides = array<i32>} : memref<8x32xf32, #tpu.memory_space<vmem>>, vector<8x32xf32>,
    return
  }
  func.func @transform_0(%arg0: i32) -> (i32, i32) {
    %c0_i32 = arith.constant 0 : i32
    %c0_i32_0 = arith.constant 0 : i32
    %c0_i32_1 = arith.constant 0 : i32
    return %c0_i32, %c0_i32_0 : i32, i32
  }
  func.func @transform_1(%arg0: i32) -> (i32, i32) {
    %c0_i32 = arith.constant 0 : i32
    %c0_i32_0 = arith.constant 0 : i32
    %c0_i32_1 = arith.constant 0 : i32
    return %c0_i32, %c0_i32_0 : i32, i32
  }
  func.func @transform_2(%arg0: i32) -> (i32, i32) {
    %c0_i32 = arith.constant 0 : i32
    %c0_i32_0 = arith.constant 0 : i32
    %c0_i32_1 = arith.constant 0 : i32
    return %c0_i32, %c0_i32_0 : i32, i32
  }
  func.func @transform_3(%arg0: i32) -> (i32, i32) {
    %c0_i32 = arith.constant 0 : i32
    %c0_i32_0 = arith.constant 0 : i32
    %c0_i32_1 = arith.constant 0 : i32
    return %c0_i32, %c0_i32_0 : i32, i32
  }
  func.func @transform_4(%arg0: i32) -> (i32, i32) {
    %c0_i32 = arith.constant 0 : i32
    %c0_i32_0 = arith.constant 0 : i32
    %c0_i32_1 = arith.constant 0 : i32
    return %c0_i32, %c0_i32_0 : i32, i32
  }
  func.func @transform_5(%arg0: i32) -> (i32, i32) {
    %c0_i32 = arith.constant 0 : i32
    %c0_i32_0 = arith.constant 0 : i32
    %c0_i32_1 = arith.constant 0 : i32
    return %c0_i32, %c0_i32_0 : i32, i32
  }
  func.func @transform_6(%arg0: i32) -> (i32, i32) {
    %c0_i32 = arith.constant 0 : i32
    %c0_i32_0 = arith.constant 0 : i32
    %c0_i32_1 = arith.constant 0 : i32
    return %c0_i32, %c0_i32_0 : i32, i32
  }
  func.func @transform_7(%arg0: i32) -> (i32, i32) {
    %c0_i32 = arith.constant 0 : i32
    %c0_i32_0 = arith.constant 0 : i32
    %c0_i32_1 = arith.constant 0 : i32
    return %c0_i32, %c0_i32_0 : i32, i32
  }
  func.func @transform_8(%arg0: i32) -> (i32, i32) {
    %c0_i32 = arith.constant 0 : i32
    %c0_i32_0 = arith.constant 0 : i32
    %c0_i32_1 = arith.constant 0 : i32
    return %c0_i32, %c0_i32_0 : i32, i32
  }
  func.func @transform_9(%arg0: i32) -> (i32, i32) {
    %c0_i32 = arith.constant 0 : i32
    %c0_i32_0 = arith.constant 0 : i32
    %c0_i32_1 = arith.constant 0 : i32
    return %c0_i32, %c0_i32_0 : i32, i32
  }
  func.func @transform_10(%arg0: i32) -> (i32, i32) {
    %c0_i32 = arith.constant 0 : i32
    %c0_i32_0 = arith.constant 0 : i32
    %c0_i32_1 = arith.constant 0 : i32
    return %c0_i32, %c0_i32_0 : i32, i32
  }
  func.func @transform_11(%arg0: i32) -> (i32, i32) {
    %c0_i32 = arith.constant 0 : i32
    %c0_i32_0 = arith.constant 0 : i32
    %c0_i32_1 = arith.constant 0 : i32
    return %c0_i32, %c0_i32_0 : i32, i32
  }
  func.func @transform_12(%arg0: i32) -> (i32, i32) {
    %c0_i32 = arith.constant 0 : i32
    %c0_i32_0 = arith.constant 0 : i32
    %c0_i32_1 = arith.constant 0 : i32
    return %c0_i32, %c0_i32_0 : i32, i32
  }
  func.func @transform_13(%arg0: i32) -> (i32, i32) {
    %c0_i32 = arith.constant 0 : i32
    %c0_i32_0 = arith.constant 0 : i32
    %c0_i32_1 = arith.constant 0 : i32
    return %c0_i32, %c0_i32_0 : i32, i32
  }
}

module attributes {stable_mosaic.version = 11 : i64} {
  func.func @_tail_kernel(%arg0: i32, %arg1: memref<8x32xf32, #tpu.memory_space<vmem>>, %arg2: memref<2x8xf32, #tpu.memory_space<vmem>>, %arg3: memref<32x8xf32, #tpu.memory_space<vmem>>, %arg4: memref<8x64xf32, #tpu.memory_space<vmem>>, %arg5: memref<1x64xf32, #tpu.memory_space<vmem>>, %arg6: memref<52x52xf32, #tpu.memory_space<vmem>>, %arg7: memref<1x52xf32, #tpu.memory_space<vmem>>, %arg8: memref<1x52xf32, #tpu.memory_space<vmem>>, %arg9: memref<1x52xf32, #tpu.memory_space<vmem>>, %arg10: memref<2x6xf32, #tpu.memory_space<vmem>>, %arg11: memref<2x25xf32, #tpu.memory_space<vmem>>) attributes {dimension_semantics = [#tpu.dimension_semantics<arbitrary>], iteration_bounds = array<i64: 1>, scalar_prefetch = 0 : i64, scratch_operands = 0 : i64, tpu.core_type = #tpu.core_type<tc>, window_params = [{pipeline_mode = #tpu.pipeline_mode<synchronous>, transform_indices = @transform_0, window_bounds = array<i64: 8, 32>}, {pipeline_mode = #tpu.pipeline_mode<synchronous>, transform_indices = @transform_1, window_bounds = array<i64: 2, 8>}, {pipeline_mode = #tpu.pipeline_mode<synchronous>, transform_indices = @transform_2, window_bounds = array<i64: 32, 8>}, {pipeline_mode = #tpu.pipeline_mode<synchronous>, transform_indices = @transform_3, window_bounds = array<i64: 8, 64>}, {pipeline_mode = #tpu.pipeline_mode<synchronous>, transform_indices = @transform_4, window_bounds = array<i64: 1, 64>}, {pipeline_mode = #tpu.pipeline_mode<synchronous>, transform_indices = @transform_5, window_bounds = array<i64: 52, 52>}, {pipeline_mode = #tpu.pipeline_mode<synchronous>, transform_indices = @transform_6, window_bounds = array<i64: 1, 52>}, {pipeline_mode = #tpu.pipeline_mode<synchronous>, transform_indices = @transform_7, window_bounds = array<i64: 1, 52>}, {pipeline_mode = #tpu.pipeline_mode<synchronous>, transform_indices = @transform_8, window_bounds = array<i64: 1, 52>}, {pipeline_mode = #tpu.pipeline_mode<synchronous>, transform_indices = @transform_9, window_bounds = array<i64: 2, 6>}, {pipeline_mode = #tpu.pipeline_mode<synchronous>, transform_indices = @transform_10, window_bounds = array<i64: 2, 25>}]} {
    %c0 = arith.constant 0 : index
    %c0_0 = arith.constant 0 : index
    %0 = vector.load %arg1[%c0, %c0_0] : memref<8x32xf32, #tpu.memory_space<vmem>>, vector<8x32xf32>
    %c0_1 = arith.constant 0 : index
    %c0_2 = arith.constant 0 : index
    %1 = vector.load %arg2[%c0_1, %c0_2] : memref<2x8xf32, #tpu.memory_space<vmem>>, vector<2x8xf32>
    %c0_3 = arith.constant 0 : index
    %c0_4 = arith.constant 0 : index
    %2 = vector.load %arg3[%c0_3, %c0_4] : memref<32x8xf32, #tpu.memory_space<vmem>>, vector<32x8xf32>
    %cst = arith.constant dense<0.000000e+00> : vector<8x8xf32>
    %3 = tpu.matmul %0, %2, %cst {dimension_numbers = #tpu.dot_dimension_numbers<[1], [0], [0], [1], [0, 0, 1, 1], [], []>} : vector<8x32xf32>, vector<32x8xf32>, vector<8x8xf32> -> vector<8x8xf32>
    %cst_5 = arith.constant dense<0.000000e+00> : vector<2x8xf32>
    %4 = tpu.matmul %1, %3, %cst_5 {dimension_numbers = #tpu.dot_dimension_numbers<[1], [0], [0], [1], [0, 0, 1, 1], [], []>} : vector<2x8xf32>, vector<8x8xf32>, vector<2x8xf32> -> vector<2x8xf32>
    %c0_6 = arith.constant 0 : index
    %c0_7 = arith.constant 0 : index
    %5 = vector.load %arg4[%c0_6, %c0_7] : memref<8x64xf32, #tpu.memory_space<vmem>>, vector<8x64xf32>
    %cst_8 = arith.constant dense<0.000000e+00> : vector<2x64xf32>
    %6 = tpu.matmul %4, %5, %cst_8 {dimension_numbers = #tpu.dot_dimension_numbers<[1], [0], [0], [1], [0, 0, 1, 1], [], []>} : vector<2x8xf32>, vector<8x64xf32>, vector<2x64xf32> -> vector<2x64xf32>
    %c0_9 = arith.constant 0 : index
    %c0_10 = arith.constant 0 : index
    %7 = vector.load %arg5[%c0_9, %c0_10] : memref<1x64xf32, #tpu.memory_space<vmem>>, vector<1x64xf32>
    %8 = vector.broadcast %7 : vector<1x64xf32> to vector<2x64xf32>
    %9 = arith.addf %6, %8 : vector<2x64xf32>
    %10 = vector.extract_strided_slice %9 {offsets = [0, 0], sizes = [2, 6], strides = [1, 1]} : vector<2x64xf32> to vector<2x6xf32>
    %11 = vector.extract_strided_slice %9 {offsets = [0, 6], sizes = [2, 6], strides = [1, 1]} : vector<2x64xf32> to vector<2x6xf32>
    %12 = vector.extract_strided_slice %9 {offsets = [0, 12], sizes = [2, 52], strides = [1, 1]} : vector<2x64xf32> to vector<2x52xf32>
    %cst_11 = arith.constant 0.000000e+00 : f32
    %13 = vector.broadcast %cst_11 : f32 to vector<2x52xf32>
    %14 = arith.maximumf %12, %13 : vector<2x52xf32>
    %c0_12 = arith.constant 0 : index
    %c0_13 = arith.constant 0 : index
    %15 = vector.load %arg6[%c0_12, %c0_13] : memref<52x52xf32, #tpu.memory_space<vmem>>, vector<52x52xf32>
    %cst_14 = arith.constant dense<0.000000e+00> : vector<2x52xf32>
    %16 = tpu.matmul %14, %15, %cst_14 {dimension_numbers = #tpu.dot_dimension_numbers<[1], [0], [0], [1], [0, 0, 1, 1], [], []>} : vector<2x52xf32>, vector<52x52xf32>, vector<2x52xf32> -> vector<2x52xf32>
    %c0_15 = arith.constant 0 : index
    %c0_16 = arith.constant 0 : index
    %17 = vector.load %arg7[%c0_15, %c0_16] : memref<1x52xf32, #tpu.memory_space<vmem>>, vector<1x52xf32>
    %18 = vector.broadcast %17 : vector<1x52xf32> to vector<2x52xf32>
    %19 = arith.addf %16, %18 : vector<2x52xf32>
    %cst_17 = arith.constant dense<0.000000e+00> : vector<52xf32>
    %20 = vector.multi_reduction <add>, %19, %cst_17 [0] : vector<2x52xf32> to vector<52xf32>
    %21 = vector.shape_cast %20 : vector<52xf32> to vector<1x52xf32>
    %cst_18 = arith.constant 2.000000e+00 : f32
    %22 = vector.broadcast %cst_18 : f32 to vector<1x52xf32>
    %23 = arith.divf %21, %22 : vector<1x52xf32>
    %24 = vector.broadcast %23 : vector<1x52xf32> to vector<2x52xf32>
    %25 = arith.subf %19, %24 : vector<2x52xf32>
    %26 = arith.mulf %25, %25 : vector<2x52xf32>
    %cst_19 = arith.constant dense<0.000000e+00> : vector<52xf32>
    %27 = vector.multi_reduction <add>, %26, %cst_19 [0] : vector<2x52xf32> to vector<52xf32>
    %28 = vector.shape_cast %27 : vector<52xf32> to vector<1x52xf32>
    %cst_20 = arith.constant 2.000000e+00 : f32
    %29 = vector.broadcast %cst_20 : f32 to vector<1x52xf32>
    %30 = arith.divf %28, %29 : vector<1x52xf32>
    %31 = vector.broadcast %23 : vector<1x52xf32> to vector<2x52xf32>
    %32 = arith.subf %19, %31 : vector<2x52xf32>
    %cst_21 = arith.constant 9.99999974E-6 : f32
    %33 = vector.broadcast %cst_21 : f32 to vector<1x52xf32>
    %34 = arith.addf %30, %33 : vector<1x52xf32>
    %35 = math.rsqrt %34 : vector<1x52xf32>
    %36 = vector.broadcast %35 : vector<1x52xf32> to vector<2x52xf32>
    %37 = arith.mulf %32, %36 : vector<2x52xf32>
    %c0_22 = arith.constant 0 : index
    %c0_23 = arith.constant 0 : index
    %38 = vector.load %arg8[%c0_22, %c0_23] : memref<1x52xf32, #tpu.memory_space<vmem>>, vector<1x52xf32>
    %39 = vector.broadcast %38 : vector<1x52xf32> to vector<2x52xf32>
    %40 = arith.mulf %37, %39 : vector<2x52xf32>
    %c0_24 = arith.constant 0 : index
    %c0_25 = arith.constant 0 : index
    %41 = vector.load %arg9[%c0_24, %c0_25] : memref<1x52xf32, #tpu.memory_space<vmem>>, vector<1x52xf32>
    %42 = vector.broadcast %41 : vector<1x52xf32> to vector<2x52xf32>
    %43 = arith.addf %40, %42 : vector<2x52xf32>
    %44 = vector.extract_strided_slice %43 {offsets = [0, 0], sizes = [2, 24], strides = [1, 1]} : vector<2x52xf32> to vector<2x24xf32>
    %45 = vector.extract_strided_slice %43 {offsets = [0, 24], sizes = [2, 24], strides = [1, 1]} : vector<2x52xf32> to vector<2x24xf32>
    %46 = vector.extract_strided_slice %43 {offsets = [0, 48], sizes = [2, 4], strides = [1, 1]} : vector<2x52xf32> to vector<2x4xf32>
    %47 = math.exp %11 : vector<2x6xf32>
    %c0_26 = arith.constant 0 : index
    %c0_27 = arith.constant 0 : index
    %48 = vector.load %arg10[%c0_26, %c0_27] : memref<2x6xf32, #tpu.memory_space<vmem>>, vector<2x6xf32>
    %49 = arith.mulf %47, %48 : vector<2x6xf32>
    %50 = arith.addf %10, %49 : vector<2x6xf32>
    %cst_28 = arith.constant 0.000000e+00 : f32
    %51 = vector.broadcast %cst_28 : f32 to vector<2x1xf32>
    %52 = vector.extract_strided_slice %44 {offsets = [0, 0], sizes = [2, 6], strides = [1, 1]} : vector<2x24xf32> to vector<2x6xf32>
    %53 = vector.extract_strided_slice %45 {offsets = [0, 0], sizes = [2, 6], strides = [1, 1]} : vector<2x24xf32> to vector<2x6xf32>
    %54 = vector.extract_strided_slice %46 {offsets = [0, 0], sizes = [2, 1], strides = [1, 1]} : vector<2x4xf32> to vector<2x1xf32>
    %55 = arith.mulf %53, %52 : vector<2x6xf32>
    %cst_29 = arith.constant dense<0.000000e+00> : vector<2xf32>
    %56 = vector.multi_reduction <add>, %55, %cst_29 [1] : vector<2x6xf32> to vector<2xf32>
    %57 = vector.shape_cast %56 : vector<2xf32> to vector<2x1xf32>
    %cst_30 = arith.constant 0.000000e+00 : f32
    %58 = vector.broadcast %cst_30 : f32 to vector<2x1xf32>
    %59 = arith.maximumf %57, %58 : vector<2x1xf32>
    %60 = math.absf %57 : vector<2x1xf32>
    %cst_31 = arith.constant 0.000000e+00 : f32
    %61 = vector.broadcast %cst_31 : f32 to vector<2x1xf32>
    %62 = arith.subf %61, %60 : vector<2x1xf32>
    %63 = math.exp %62 : vector<2x1xf32>
    %64 = math.log1p %63 : vector<2x1xf32>
    %65 = arith.addf %59, %64 : vector<2x1xf32>
    %cst_32 = arith.constant -1.000000e+00 : f32
    %66 = vector.broadcast %cst_32 : f32 to vector<2x1xf32>
    %67 = arith.addf %66, %65 : vector<2x1xf32>
    %68 = arith.mulf %53, %53 : vector<2x6xf32>
    %cst_33 = arith.constant dense<0.000000e+00> : vector<2xf32>
    %69 = vector.multi_reduction <add>, %68, %cst_33 [1] : vector<2x6xf32> to vector<2xf32>
    %70 = vector.shape_cast %69 : vector<2xf32> to vector<2x1xf32>
    %71 = arith.subf %67, %57 : vector<2x1xf32>
    %72 = vector.broadcast %71 : vector<2x1xf32> to vector<2x6xf32>
    %73 = arith.mulf %72, %53 : vector<2x6xf32>
    %74 = vector.broadcast %70 : vector<2x1xf32> to vector<2x6xf32>
    %75 = arith.divf %73, %74 : vector<2x6xf32>
    %76 = arith.addf %52, %75 : vector<2x6xf32>
    %77 = arith.mulf %53, %50 : vector<2x6xf32>
    %cst_34 = arith.constant dense<0.000000e+00> : vector<2xf32>
    %78 = vector.multi_reduction <add>, %77, %cst_34 [1] : vector<2x6xf32> to vector<2xf32>
    %79 = vector.shape_cast %78 : vector<2xf32> to vector<2x1xf32>
    %80 = arith.addf %79, %54 : vector<2x1xf32>
    %81 = math.tanh %80 : vector<2x1xf32>
    %82 = vector.broadcast %81 : vector<2x1xf32> to vector<2x6xf32>
    %83 = arith.mulf %76, %82 : vector<2x6xf32>
    %84 = arith.addf %50, %83 : vector<2x6xf32>
    %85 = arith.mulf %81, %81 : vector<2x1xf32>
    %cst_35 = arith.constant 1.000000e+00 : f32
    %86 = vector.broadcast %cst_35 : f32 to vector<2x1xf32>
    %87 = arith.subf %86, %85 : vector<2x1xf32>
    %88 = vector.broadcast %87 : vector<2x1xf32> to vector<2x6xf32>
    %89 = arith.mulf %53, %88 : vector<2x6xf32>
    %90 = arith.mulf %89, %76 : vector<2x6xf32>
    %cst_36 = arith.constant dense<0.000000e+00> : vector<2xf32>
    %91 = vector.multi_reduction <add>, %90, %cst_36 [1] : vector<2x6xf32> to vector<2xf32>
    %92 = vector.shape_cast %91 : vector<2xf32> to vector<2x1xf32>
    %cst_37 = arith.constant 1.000000e+00 : f32
    %93 = vector.broadcast %cst_37 : f32 to vector<2x1xf32>
    %94 = arith.addf %93, %92 : vector<2x1xf32>
    %95 = math.absf %94 : vector<2x1xf32>
    %96 = math.log %95 : vector<2x1xf32>
    %97 = arith.addf %51, %96 : vector<2x1xf32>
    %98 = vector.extract_strided_slice %44 {offsets = [0, 6], sizes = [2, 6], strides = [1, 1]} : vector<2x24xf32> to vector<2x6xf32>
    %99 = vector.extract_strided_slice %45 {offsets = [0, 6], sizes = [2, 6], strides = [1, 1]} : vector<2x24xf32> to vector<2x6xf32>
    %100 = vector.extract_strided_slice %46 {offsets = [0, 1], sizes = [2, 1], strides = [1, 1]} : vector<2x4xf32> to vector<2x1xf32>
    %101 = arith.mulf %99, %98 : vector<2x6xf32>
    %cst_38 = arith.constant dense<0.000000e+00> : vector<2xf32>
    %102 = vector.multi_reduction <add>, %101, %cst_38 [1] : vector<2x6xf32> to vector<2xf32>
    %103 = vector.shape_cast %102 : vector<2xf32> to vector<2x1xf32>
    %cst_39 = arith.constant 0.000000e+00 : f32
    %104 = vector.broadcast %cst_39 : f32 to vector<2x1xf32>
    %105 = arith.maximumf %103, %104 : vector<2x1xf32>
    %106 = math.absf %103 : vector<2x1xf32>
    %cst_40 = arith.constant 0.000000e+00 : f32
    %107 = vector.broadcast %cst_40 : f32 to vector<2x1xf32>
    %108 = arith.subf %107, %106 : vector<2x1xf32>
    %109 = math.exp %108 : vector<2x1xf32>
    %110 = math.log1p %109 : vector<2x1xf32>
    %111 = arith.addf %105, %110 : vector<2x1xf32>
    %cst_41 = arith.constant -1.000000e+00 : f32
    %112 = vector.broadcast %cst_41 : f32 to vector<2x1xf32>
    %113 = arith.addf %112, %111 : vector<2x1xf32>
    %114 = arith.mulf %99, %99 : vector<2x6xf32>
    %cst_42 = arith.constant dense<0.000000e+00> : vector<2xf32>
    %115 = vector.multi_reduction <add>, %114, %cst_42 [1] : vector<2x6xf32> to vector<2xf32>
    %116 = vector.shape_cast %115 : vector<2xf32> to vector<2x1xf32>
    %117 = arith.subf %113, %103 : vector<2x1xf32>
    %118 = vector.broadcast %117 : vector<2x1xf32> to vector<2x6xf32>
    %119 = arith.mulf %118, %99 : vector<2x6xf32>
    %120 = vector.broadcast %116 : vector<2x1xf32> to vector<2x6xf32>
    %121 = arith.divf %119, %120 : vector<2x6xf32>
    %122 = arith.addf %98, %121 : vector<2x6xf32>
    %123 = arith.mulf %99, %84 : vector<2x6xf32>
    %cst_43 = arith.constant dense<0.000000e+00> : vector<2xf32>
    %124 = vector.multi_reduction <add>, %123, %cst_43 [1] : vector<2x6xf32> to vector<2xf32>
    %125 = vector.shape_cast %124 : vector<2xf32> to vector<2x1xf32>
    %126 = arith.addf %125, %100 : vector<2x1xf32>
    %127 = math.tanh %126 : vector<2x1xf32>
    %128 = vector.broadcast %127 : vector<2x1xf32> to vector<2x6xf32>
    %129 = arith.mulf %122, %128 : vector<2x6xf32>
    %130 = arith.addf %84, %129 : vector<2x6xf32>
    %131 = arith.mulf %127, %127 : vector<2x1xf32>
    %cst_44 = arith.constant 1.000000e+00 : f32
    %132 = vector.broadcast %cst_44 : f32 to vector<2x1xf32>
    %133 = arith.subf %132, %131 : vector<2x1xf32>
    %134 = vector.broadcast %133 : vector<2x1xf32> to vector<2x6xf32>
    %135 = arith.mulf %99, %134 : vector<2x6xf32>
    %136 = arith.mulf %135, %122 : vector<2x6xf32>
    %cst_45 = arith.constant dense<0.000000e+00> : vector<2xf32>
    %137 = vector.multi_reduction <add>, %136, %cst_45 [1] : vector<2x6xf32> to vector<2xf32>
    %138 = vector.shape_cast %137 : vector<2xf32> to vector<2x1xf32>
    %cst_46 = arith.constant 1.000000e+00 : f32
    %139 = vector.broadcast %cst_46 : f32 to vector<2x1xf32>
    %140 = arith.addf %139, %138 : vector<2x1xf32>
    %141 = math.absf %140 : vector<2x1xf32>
    %142 = math.log %141 : vector<2x1xf32>
    %143 = arith.addf %97, %142 : vector<2x1xf32>
    %144 = vector.extract_strided_slice %44 {offsets = [0, 12], sizes = [2, 6], strides = [1, 1]} : vector<2x24xf32> to vector<2x6xf32>
    %145 = vector.extract_strided_slice %45 {offsets = [0, 12], sizes = [2, 6], strides = [1, 1]} : vector<2x24xf32> to vector<2x6xf32>
    %146 = vector.extract_strided_slice %46 {offsets = [0, 2], sizes = [2, 1], strides = [1, 1]} : vector<2x4xf32> to vector<2x1xf32>
    %147 = arith.mulf %145, %144 : vector<2x6xf32>
    %cst_47 = arith.constant dense<0.000000e+00> : vector<2xf32>
    %148 = vector.multi_reduction <add>, %147, %cst_47 [1] : vector<2x6xf32> to vector<2xf32>
    %149 = vector.shape_cast %148 : vector<2xf32> to vector<2x1xf32>
    %cst_48 = arith.constant 0.000000e+00 : f32
    %150 = vector.broadcast %cst_48 : f32 to vector<2x1xf32>
    %151 = arith.maximumf %149, %150 : vector<2x1xf32>
    %152 = math.absf %149 : vector<2x1xf32>
    %cst_49 = arith.constant 0.000000e+00 : f32
    %153 = vector.broadcast %cst_49 : f32 to vector<2x1xf32>
    %154 = arith.subf %153, %152 : vector<2x1xf32>
    %155 = math.exp %154 : vector<2x1xf32>
    %156 = math.log1p %155 : vector<2x1xf32>
    %157 = arith.addf %151, %156 : vector<2x1xf32>
    %cst_50 = arith.constant -1.000000e+00 : f32
    %158 = vector.broadcast %cst_50 : f32 to vector<2x1xf32>
    %159 = arith.addf %158, %157 : vector<2x1xf32>
    %160 = arith.mulf %145, %145 : vector<2x6xf32>
    %cst_51 = arith.constant dense<0.000000e+00> : vector<2xf32>
    %161 = vector.multi_reduction <add>, %160, %cst_51 [1] : vector<2x6xf32> to vector<2xf32>
    %162 = vector.shape_cast %161 : vector<2xf32> to vector<2x1xf32>
    %163 = arith.subf %159, %149 : vector<2x1xf32>
    %164 = vector.broadcast %163 : vector<2x1xf32> to vector<2x6xf32>
    %165 = arith.mulf %164, %145 : vector<2x6xf32>
    %166 = vector.broadcast %162 : vector<2x1xf32> to vector<2x6xf32>
    %167 = arith.divf %165, %166 : vector<2x6xf32>
    %168 = arith.addf %144, %167 : vector<2x6xf32>
    %169 = arith.mulf %145, %130 : vector<2x6xf32>
    %cst_52 = arith.constant dense<0.000000e+00> : vector<2xf32>
    %170 = vector.multi_reduction <add>, %169, %cst_52 [1] : vector<2x6xf32> to vector<2xf32>
    %171 = vector.shape_cast %170 : vector<2xf32> to vector<2x1xf32>
    %172 = arith.addf %171, %146 : vector<2x1xf32>
    %173 = math.tanh %172 : vector<2x1xf32>
    %174 = vector.broadcast %173 : vector<2x1xf32> to vector<2x6xf32>
    %175 = arith.mulf %168, %174 : vector<2x6xf32>
    %176 = arith.addf %130, %175 : vector<2x6xf32>
    %177 = arith.mulf %173, %173 : vector<2x1xf32>
    %cst_53 = arith.constant 1.000000e+00 : f32
    %178 = vector.broadcast %cst_53 : f32 to vector<2x1xf32>
    %179 = arith.subf %178, %177 : vector<2x1xf32>
    %180 = vector.broadcast %179 : vector<2x1xf32> to vector<2x6xf32>
    %181 = arith.mulf %145, %180 : vector<2x6xf32>
    %182 = arith.mulf %181, %168 : vector<2x6xf32>
    %cst_54 = arith.constant dense<0.000000e+00> : vector<2xf32>
    %183 = vector.multi_reduction <add>, %182, %cst_54 [1] : vector<2x6xf32> to vector<2xf32>
    %184 = vector.shape_cast %183 : vector<2xf32> to vector<2x1xf32>
    %cst_55 = arith.constant 1.000000e+00 : f32
    %185 = vector.broadcast %cst_55 : f32 to vector<2x1xf32>
    %186 = arith.addf %185, %184 : vector<2x1xf32>
    %187 = math.absf %186 : vector<2x1xf32>
    %188 = math.log %187 : vector<2x1xf32>
    %189 = arith.addf %143, %188 : vector<2x1xf32>
    %190 = vector.extract_strided_slice %44 {offsets = [0, 18], sizes = [2, 6], strides = [1, 1]} : vector<2x24xf32> to vector<2x6xf32>
    %191 = vector.extract_strided_slice %45 {offsets = [0, 18], sizes = [2, 6], strides = [1, 1]} : vector<2x24xf32> to vector<2x6xf32>
    %192 = vector.extract_strided_slice %46 {offsets = [0, 3], sizes = [2, 1], strides = [1, 1]} : vector<2x4xf32> to vector<2x1xf32>
    %193 = arith.mulf %191, %190 : vector<2x6xf32>
    %cst_56 = arith.constant dense<0.000000e+00> : vector<2xf32>
    %194 = vector.multi_reduction <add>, %193, %cst_56 [1] : vector<2x6xf32> to vector<2xf32>
    %195 = vector.shape_cast %194 : vector<2xf32> to vector<2x1xf32>
    %cst_57 = arith.constant 0.000000e+00 : f32
    %196 = vector.broadcast %cst_57 : f32 to vector<2x1xf32>
    %197 = arith.maximumf %195, %196 : vector<2x1xf32>
    %198 = math.absf %195 : vector<2x1xf32>
    %cst_58 = arith.constant 0.000000e+00 : f32
    %199 = vector.broadcast %cst_58 : f32 to vector<2x1xf32>
    %200 = arith.subf %199, %198 : vector<2x1xf32>
    %201 = math.exp %200 : vector<2x1xf32>
    %202 = math.log1p %201 : vector<2x1xf32>
    %203 = arith.addf %197, %202 : vector<2x1xf32>
    %cst_59 = arith.constant -1.000000e+00 : f32
    %204 = vector.broadcast %cst_59 : f32 to vector<2x1xf32>
    %205 = arith.addf %204, %203 : vector<2x1xf32>
    %206 = arith.mulf %191, %191 : vector<2x6xf32>
    %cst_60 = arith.constant dense<0.000000e+00> : vector<2xf32>
    %207 = vector.multi_reduction <add>, %206, %cst_60 [1] : vector<2x6xf32> to vector<2xf32>
    %208 = vector.shape_cast %207 : vector<2xf32> to vector<2x1xf32>
    %209 = arith.subf %205, %195 : vector<2x1xf32>
    %210 = vector.broadcast %209 : vector<2x1xf32> to vector<2x6xf32>
    %211 = arith.mulf %210, %191 : vector<2x6xf32>
    %212 = vector.broadcast %208 : vector<2x1xf32> to vector<2x6xf32>
    %213 = arith.divf %211, %212 : vector<2x6xf32>
    %214 = arith.addf %190, %213 : vector<2x6xf32>
    %215 = arith.mulf %191, %176 : vector<2x6xf32>
    %cst_61 = arith.constant dense<0.000000e+00> : vector<2xf32>
    %216 = vector.multi_reduction <add>, %215, %cst_61 [1] : vector<2x6xf32> to vector<2xf32>
    %217 = vector.shape_cast %216 : vector<2xf32> to vector<2x1xf32>
    %218 = arith.addf %217, %192 : vector<2x1xf32>
    %219 = math.tanh %218 : vector<2x1xf32>
    %220 = vector.broadcast %219 : vector<2x1xf32> to vector<2x6xf32>
    %221 = arith.mulf %214, %220 : vector<2x6xf32>
    %222 = arith.addf %176, %221 : vector<2x6xf32>
    %223 = arith.mulf %219, %219 : vector<2x1xf32>
    %cst_62 = arith.constant 1.000000e+00 : f32
    %224 = vector.broadcast %cst_62 : f32 to vector<2x1xf32>
    %225 = arith.subf %224, %223 : vector<2x1xf32>
    %226 = vector.broadcast %225 : vector<2x1xf32> to vector<2x6xf32>
    %227 = arith.mulf %191, %226 : vector<2x6xf32>
    %228 = arith.mulf %227, %214 : vector<2x6xf32>
    %cst_63 = arith.constant dense<0.000000e+00> : vector<2xf32>
    %229 = vector.multi_reduction <add>, %228, %cst_63 [1] : vector<2x6xf32> to vector<2xf32>
    %230 = vector.shape_cast %229 : vector<2xf32> to vector<2x1xf32>
    %cst_64 = arith.constant 1.000000e+00 : f32
    %231 = vector.broadcast %cst_64 : f32 to vector<2x1xf32>
    %232 = arith.addf %231, %230 : vector<2x1xf32>
    %233 = math.absf %232 : vector<2x1xf32>
    %234 = math.log %233 : vector<2x1xf32>
    %235 = arith.addf %189, %234 : vector<2x1xf32>
    %236 = tpu.concatenate %235, %50, %222, %10, %11 in 1 : vector<2x1xf32>, vector<2x6xf32>, vector<2x6xf32>, vector<2x6xf32>, vector<2x6xf32> -> vector<2x25xf32>
    %c0_65 = arith.constant 0 : index
    %c0_66 = arith.constant 0 : index
    %237 = vector.load %arg11[%c0_65, %c0_66] : memref<2x25xf32, #tpu.memory_space<vmem>>, vector<2x25xf32>
    tpu.vector_store %arg11[%c0_65, %c0_66], %236 {strides = array<i32>} : memref<2x25xf32, #tpu.memory_space<vmem>>, vector<2x25xf32>,
    return
  }
  func.func @transform_0(%arg0: i32) -> (i32, i32) {
    %c0_i32 = arith.constant 0 : i32
    %c0_i32_0 = arith.constant 0 : i32
    %c0_i32_1 = arith.constant 0 : i32
    return %c0_i32, %c0_i32_0 : i32, i32
  }
  func.func @transform_1(%arg0: i32) -> (i32, i32) {
    %c0_i32 = arith.constant 0 : i32
    %c0_i32_0 = arith.constant 0 : i32
    %c0_i32_1 = arith.constant 0 : i32
    return %c0_i32, %c0_i32_0 : i32, i32
  }
  func.func @transform_2(%arg0: i32) -> (i32, i32) {
    %c0_i32 = arith.constant 0 : i32
    %c0_i32_0 = arith.constant 0 : i32
    %c0_i32_1 = arith.constant 0 : i32
    return %c0_i32, %c0_i32_0 : i32, i32
  }
  func.func @transform_3(%arg0: i32) -> (i32, i32) {
    %c0_i32 = arith.constant 0 : i32
    %c0_i32_0 = arith.constant 0 : i32
    %c0_i32_1 = arith.constant 0 : i32
    return %c0_i32, %c0_i32_0 : i32, i32
  }
  func.func @transform_4(%arg0: i32) -> (i32, i32) {
    %c0_i32 = arith.constant 0 : i32
    %c0_i32_0 = arith.constant 0 : i32
    %c0_i32_1 = arith.constant 0 : i32
    return %c0_i32, %c0_i32_0 : i32, i32
  }
  func.func @transform_5(%arg0: i32) -> (i32, i32) {
    %c0_i32 = arith.constant 0 : i32
    %c0_i32_0 = arith.constant 0 : i32
    %c0_i32_1 = arith.constant 0 : i32
    return %c0_i32, %c0_i32_0 : i32, i32
  }
  func.func @transform_6(%arg0: i32) -> (i32, i32) {
    %c0_i32 = arith.constant 0 : i32
    %c0_i32_0 = arith.constant 0 : i32
    %c0_i32_1 = arith.constant 0 : i32
    return %c0_i32, %c0_i32_0 : i32, i32
  }
  func.func @transform_7(%arg0: i32) -> (i32, i32) {
    %c0_i32 = arith.constant 0 : i32
    %c0_i32_0 = arith.constant 0 : i32
    %c0_i32_1 = arith.constant 0 : i32
    return %c0_i32, %c0_i32_0 : i32, i32
  }
  func.func @transform_8(%arg0: i32) -> (i32, i32) {
    %c0_i32 = arith.constant 0 : i32
    %c0_i32_0 = arith.constant 0 : i32
    %c0_i32_1 = arith.constant 0 : i32
    return %c0_i32, %c0_i32_0 : i32, i32
  }
  func.func @transform_9(%arg0: i32) -> (i32, i32) {
    %c0_i32 = arith.constant 0 : i32
    %c0_i32_0 = arith.constant 0 : i32
    %c0_i32_1 = arith.constant 0 : i32
    return %c0_i32, %c0_i32_0 : i32, i32
  }
  func.func @transform_10(%arg0: i32) -> (i32, i32) {
    %c0_i32 = arith.constant 0 : i32
    %c0_i32_0 = arith.constant 0 : i32
    %c0_i32_1 = arith.constant 0 : i32
    return %c0_i32, %c0_i32_0 : i32, i32
  }
}

</mosaic_0001>

<llo_original>
// kernel: planar_flow_density_forward.5
$region0: #{planar_flow_density_forward.5}
  #allocation0 [shape = 'u32[]', space=smem, size = 0x4, offset = 0x4, fixed_abs, tag = 'smem constant byte address 0x4 - core index']
  #allocation1 [shape = 'u32[144,128]{1,0:T(1,128)}', space=vmem, size = 0x12000, scoped, tag = 'internal scratch']
  %s0 = inlined_call_operand.vmem [shape: f32[32,64], index: 0, kind: input, shape index: {}]
  %s1 = inlined_call_operand.vmem [shape: f32[16,32], index: 1, kind: input, shape index: {}]
  %s2 = inlined_call_operand.vmem [shape: f32[64,32], index: 2, kind: input, shape index: {}]
  %s3 = inlined_call_operand.vmem [shape: f32[32,64], index: 3, kind: input, shape index: {}]
  %s4 = inlined_call_operand.vmem [shape: f32[32,64], index: 4, kind: input, shape index: {}]
  %s5 = inlined_call_operand.vmem [shape: f32[32,64], index: 5, kind: input, shape index: {}]
  %s6 = inlined_call_operand.vmem [shape: f32[1,64], index: 6, kind: input, shape index: {}]
  %s7 = inlined_call_operand.vmem [shape: f32[64,64], index: 7, kind: input, shape index: {}]
  %s8 = inlined_call_operand.vmem [shape: f32[64,64], index: 8, kind: input, shape index: {}]
  %s9 = inlined_call_operand.vmem [shape: f32[64,64], index: 9, kind: input, shape index: {}]
  %s10 = inlined_call_operand.vmem [shape: f32[1,64], index: 10, kind: input, shape index: {}]
  %s11 = inlined_call_operand.vmem [shape: f32[16,16], index: 11, kind: input, shape index: {}]
  %s12 = inlined_call_operand.vmem [shape: f32[16,16], index: 12, kind: input, shape index: {}]
  %s13 = inlined_call_operand.vmem [shape: f32[16,64], index: 13, kind: output, shape index: {}]
  %s14 = sld [smem:[#allocation0]]
  $region62: #{planar_flow_density_forward.5} parent=0
    _
  %s16 = ssub.s32 1, %s14
  %s17 = scalar_select 0, %s16, %s14
  // Predicated region
  $region2: #{planar_flow_density_forward.5} parent=0 // pred_check
    _
  $region3: #{planar_flow_density_forward.5} parent=0 // pred_check_branch
    %19 = sbr.rel (0) target = $region5
  $region4: #{planar_flow_density_forward.5} parent=0 // pred_region
    _
  $region5: #{planar_flow_density_forward.5} parent=0 // pred_fallthru
    _
  // Predicated region
  $region6: #{planar_flow_density_forward.5} parent=0 // pred_check
    _
  $region7: #{planar_flow_density_forward.5} parent=0 // pred_check_branch
    %21 = sbr.rel (0) target = $region9
  $region8: #{planar_flow_density_forward.5} parent=0 // pred_region
    _
  $region9: #{planar_flow_density_forward.5} parent=0 // pred_fallthru
    _
  // Predicated region
  $region10: #{planar_flow_density_forward.5} parent=0 // pred_check
    _
  $region11: #{planar_flow_density_forward.5} parent=0 // pred_check_branch
    %23 = sbr.rel (0) target = $region13
  $region12: #{planar_flow_density_forward.5} parent=0 // pred_region
    _
  $region13: #{planar_flow_density_forward.5} parent=0 // pred_fallthru
    _
  // Predicated region
  $region14: #{planar_flow_density_forward.5} parent=0 // pred_check
    _
  $region15: #{planar_flow_density_forward.5} parent=0 // pred_check_branch
    %25 = sbr.rel (0) target = $region17
  $region16: #{planar_flow_density_forward.5} parent=0 // pred_region
    _
  $region17: #{planar_flow_density_forward.5} parent=0 // pred_fallthru
    _
  // Predicated region
  $region18: #{planar_flow_density_forward.5} parent=0 // pred_check
    _
  $region19: #{planar_flow_density_forward.5} parent=0 // pred_check_branch
    %27 = sbr.rel (0) target = $region21
  $region20: #{planar_flow_density_forward.5} parent=0 // pred_region
    _
  $region21: #{planar_flow_density_forward.5} parent=0 // pred_fallthru
    _
  // Predicated region
  $region22: #{planar_flow_density_forward.5} parent=0 // pred_check
    _
  $region23: #{planar_flow_density_forward.5} parent=0 // pred_check_branch
    %29 = sbr.rel (0) target = $region25
  $region24: #{planar_flow_density_forward.5} parent=0 // pred_region
    _
  $region25: #{planar_flow_density_forward.5} parent=0 // pred_fallthru
    _
  // Predicated region
  $region26: #{planar_flow_density_forward.5} parent=0 // pred_check
    _
  $region27: #{planar_flow_density_forward.5} parent=0 // pred_check_branch
    %31 = sbr.rel (0) target = $region29
  $region28: #{planar_flow_density_forward.5} parent=0 // pred_region
    _
  $region29: #{planar_flow_density_forward.5} parent=0 // pred_fallthru
    _
  // Predicated region
  $region30: #{planar_flow_density_forward.5} parent=0 // pred_check
    _
  $region31: #{planar_flow_density_forward.5} parent=0 // pred_check_branch
    %33 = sbr.rel (0) target = $region33
  $region32: #{planar_flow_density_forward.5} parent=0 // pred_region
    _
  $region33: #{planar_flow_density_forward.5} parent=0 // pred_fallthru
    _
  // Predicated region
  $region34: #{planar_flow_density_forward.5} parent=0 // pred_check
    _
  $region35: #{planar_flow_density_forward.5} parent=0 // pred_check_branch
    %35 = sbr.rel (0) target = $region37
  $region36: #{planar_flow_density_forward.5} parent=0 // pred_region
    _
  $region37: #{planar_flow_density_forward.5} parent=0 // pred_fallthru
    _
  // Predicated region
  $region38: #{planar_flow_density_forward.5} parent=0 // pred_check
    _
  $region39: #{planar_flow_density_forward.5} parent=0 // pred_check_branch
    %37 = sbr.rel (0) target = $region41
  $region40: #{planar_flow_density_forward.5} parent=0 // pred_region
    _
  $region41: #{planar_flow_density_forward.5} parent=0 // pred_fallthru
    _
  // Predicated region
  $region42: #{planar_flow_density_forward.5} parent=0 // pred_check
    _
  $region43: #{planar_flow_density_forward.5} parent=0 // pred_check_branch
    %39 = sbr.rel (0) target = $region45
  $region44: #{planar_flow_density_forward.5} parent=0 // pred_region
    _
  $region45: #{planar_flow_density_forward.5} parent=0 // pred_fallthru
    _
  // Predicated region
  $region46: #{planar_flow_density_forward.5} parent=0 // pred_check
    _
  $region47: #{planar_flow_density_forward.5} parent=0 // pred_check_branch
    %41 = sbr.rel (0) target = $region49
  $region48: #{planar_flow_density_forward.5} parent=0 // pred_region
    _
  $region49: #{planar_flow_density_forward.5} parent=0 // pred_fallthru
    _
  // Predicated region
  $region50: #{planar_flow_density_forward.5} parent=0 // pred_check
    _
  $region51: #{planar_flow_density_forward.5} parent=0 // pred_check_branch
    %43 = sbr.rel (0) target = $region53
  $region52: #{planar_flow_density_forward.5} parent=0 // pred_region
    _
  $region53: #{planar_flow_density_forward.5} parent=0 // pred_fallthru
    _
  %v44 = vld [vmem:[%s0] sm:$0xff]
  %v45 = vld [vmem:[%s0 + $0x8] sm:$0xff]
  %v46 = vld [vmem:[%s0 + $0x10] sm:$0xff]
  %v47 = vld [vmem:[%s0 + $0x18] sm:$0xff]
  %v48 = vld [vmem:[%s1] sm:$0xff]
  %v49 = vld [vmem:[%s1 + $0x8] sm:$0xff]
  %v50 = vld [vmem:[%s2] sm:$0xff]
  %v51 = vld [vmem:[%s2 + $0x8] sm:$0xff]
  %v52 = vld [vmem:[%s2 + $0x10] sm:$0xff]
  %v53 = vld [vmem:[%s2 + $0x18] sm:$0xff]
  %v54 = vld [vmem:[%s2 + $0x20] sm:$0xff]
  %v55 = vld [vmem:[%s2 + $0x28] sm:$0xff]
  %v56 = vld [vmem:[%s2 + $0x30] sm:$0xff]
  %v57 = vld [vmem:[%s2 + $0x38] sm:$0xff]
  %vm58 = vcmask 523264
  %v60 = vsel %vm58, %v44, 0
  %v63 = vsel %vm58, %v45, 0
  %v66 = vsel %vm58, %v46, 0
  %v69 = vsel %vm58, %v47, 0
  %71 = vmatprep.subr.mxu0 0.0
  %72 = vmatpush1.msra.mxu0 %v50
  %73 = vmatprep.subr.mxu0 0.0
  %74 = vmatpush1.msra.mxu0 %v51
  %75 = vmatprep.subr.mxu0 0.0
  %76 = vmatpush1.msra.mxu0 %v52
  %77 = vmatprep.subr.mxu0 0.0
  %78 = vmatpush1.msra.mxu0 %v53
  %79 = vmatprep.subr.mxu0 0.0
  %80 = vmatpush1.msra.mxu0 %v54
  %81 = vmatprep.subr.mxu0 0.0
  %82 = vmatpush1.msra.mxu0 %v55
  %83 = vmatprep.subr.mxu0 0.0
  %84 = vmatpush1.msra.mxu0 %v56
  %85 = vmatprep.subr.mxu0 0.0
  %86 = vmatpush1.msra.mxu0 %v57
  %87 = vmatprep.subr.mxu0 0.0
  %88 = vmatpush1.msra.mxu0 0.0
  %89 = vmatprep.subr.mxu0 0.0
  %90 = vmatpush1.msra.mxu0 0.0
  %91 = vmatprep.subr.mxu0 0.0
  %92 = vmatpush1.msra.mxu0 0.0
  %93 = vmatprep.subr.mxu0 0.0
  %94 = vmatpush1.msra.mxu0 0.0
  %95 = vmatprep.subr.mxu0 0.0
  %96 = vmatpush1.msra.mxu0 0.0
  %97 = vmatprep.subr.mxu0 0.0
  %98 = vmatpush1.msra.mxu0 0.0
  %99 = vmatprep.subr.mxu0 0.0
  %100 = vmatpush1.msra.mxu0 0.0
  %101 = vmatprep.subr.mxu0 0.0
  %102 = vmatpush1.msra.mxu0 0.0
  %103 = vmatprep.subr.mxu0 0.0
  %104 = vmatpush1.msra.mxu0 0.0
  %105 = vmatprep.subr.mxu0 0.0
  %106 = vmatpush1.msra.mxu0 0.0
  %107 = vmatprep.subr.mxu0 0.0
  %108 = vmatpush1.msra.mxu0 0.0
  %109 = vmatprep.subr.mxu0 0.0
  %110 = vmatpush1.msra.mxu0 0.0
  %111 = vmatprep.subr.mxu0 0.0
  %112 = vmatpush1.msra.mxu0 0.0
  %113 = vmatprep.subr.mxu0 0.0
  %114 = vmatpush1.msra.mxu0 0.0
  %115 = vmatprep.subr.mxu0 0.0
  %116 = vmatpush1.msra.mxu0 0.0
  %117 = vmatprep.subr.mxu0 0.0
  %118 = vmatpush1.msra.mxu0 0.0
  %119 = vmatprep.subr.mxu0 0.0
  %120 = vmatpush1.msra.mxu0 0.0
  %121 = vmatprep.subr.mxu0 0.0
  %122 = vmatpush1.msra.mxu0 0.0
  %123 = vmatprep.subr.mxu0 0.0
  %124 = vmatpush1.msra.mxu0 0.0
  %125 = vmatprep.subr.mxu0 0.0
  %126 = vmatpush1.msra.mxu0 0.0
  %127 = vmatprep.subr.mxu0 0.0
  %128 = vmatpush1.msra.mxu0 0.0
  %129 = vmatprep.subr.mxu0 0.0
  %130 = vmatpush1.msra.mxu0 0.0
  %131 = vmatprep.subr.mxu0 0.0
  %132 = vmatpush1.msra.mxu0 0.0
  %133 = vmatprep.subr.mxu0 0.0
  %134 = vmatpush1.msra.mxu0 0.0
  %135 = vmatprep.mubr.f32.mxu0 0.0
  %136 = vmatmul.mubr.f32.gmra.mrb[0].mxu0 %v60
  %v137 = vpop.f32.mrb[0].mxu0
  %v138 = vadd.f32 0.0, %v137
  %v139 = vpop.f32.mrb[0].mxu0
  %140 = vmatprep.mubr.f32.mxu0 0.0
  %141 = vmatmul.mubr.f32.gmra.mrb[0].mxu0 %v63
  %v142 = vpop.f32.mrb[0].mxu0
  %v143 = vadd.f32 0.0, %v142
  %v144 = vpop.f32.mrb[0].mxu0
  %145 = vmatprep.mubr.f32.mxu0 0.0
  %146 = vmatmul.mubr.f32.gmra.mrb[0].mxu0 %v66
  %v147 = vpop.f32.mrb[0].mxu0
  %v148 = vadd.f32 0.0, %v147
  %v149 = vpop.f32.mrb[0].mxu0
  %150 = vmatprep.mubr.f32.mxu0 0.0
  %151 = vmatmul.mubr.f32.gmra.mrb[0].mxu0 %v69
  %v152 = vpop.f32.mrb[0].mxu0
  %v153 = vadd.f32 0.0, %v152
  %v154 = vpop.f32.mrb[0].mxu0
  %155 = vdwg.mxu0
  %vm156 = vcmask 261120
  %v158 = vsel %vm156, %v48, 0
  %v161 = vsel %vm156, %v49, 0
  %163 = vmatprep.subr.mxu0 0.0
  %164 = vmatpush1.msra.mxu0 %v138
  %165 = vmatprep.subr.mxu0 0.0
  %166 = vmatpush1.msra.mxu0 %v143
  %167 = vmatprep.subr.mxu0 0.0
  %168 = vmatpush1.msra.mxu0 %v148
  %169 = vmatprep.subr.mxu0 0.0
  %170 = vmatpush1.msra.mxu0 %v153
  %171 = vmatprep.subr.mxu0 0.0
  %172 = vmatpush1.msra.mxu0 0.0
  %173 = vmatprep.subr.mxu0 0.0
  %174 = vmatpush1.msra.mxu0 0.0
  %175 = vmatprep.subr.mxu0 0.0
  %176 = vmatpush1.msra.mxu0 0.0
  %177 = vmatprep.subr.mxu0 0.0
  %178 = vmatpush1.msra.mxu0 0.0
  %179 = vmatprep.subr.mxu0 0.0
  %180 = vmatpush1.msra.mxu0 0.0
  %181 = vmatprep.subr.mxu0 0.0
  %182 = vmatpush1.msra.mxu0 0.0
  %183 = vmatprep.subr.mxu0 0.0
  %184 = vmatpush1.msra.mxu0 0.0
  %185 = vmatprep.subr.mxu0 0.0
  %186 = vmatpush1.msra.mxu0 0.0
  %187 = vmatprep.subr.mxu0 0.0
  %188 = vmatpush1.msra.mxu0 0.0
  %189 = vmatprep.subr.mxu0 0.0
  %190 = vmatpush1.msra.mxu0 0.0
  %191 = vmatprep.subr.mxu0 0.0
  %192 = vmatpush1.msra.mxu0 0.0
  %193 = vmatprep.subr.mxu0 0.0
  %194 = vmatpush1.msra.mxu0 0.0
  %195 = vmatprep.subr.mxu0 0.0
  %196 = vmatpush1.msra.mxu0 0.0
  %197 = vmatprep.subr.mxu0 0.0
  %198 = vmatpush1.msra.mxu0 0.0
  %199 = vmatprep.subr.mxu0 0.0
  %200 = vmatpush1.msra.mxu0 0.0
  %201 = vmatprep.subr.mxu0 0.0
  %202 = vmatpush1.msra.mxu0 0.0
  %203 = vmatprep.subr.mxu0 0.0
  %204 = vmatpush1.msra.mxu0 0.0
  %205 = vmatprep.subr.mxu0 0.0
  %206 = vmatpush1.msra.mxu0 0.0
  %207 = vmatprep.subr.mxu0 0.0
  %208 = vmatpush1.msra.mxu0 0.0
  %209 = vmatprep.subr.mxu0 0.0
  %210 = vmatpush1.msra.mxu0 0.0
  %211 = vmatprep.subr.mxu0 0.0
  %212 = vmatpush1.msra.mxu0 0.0
  %213 = vmatprep.subr.mxu0 0.0
  %214 = vmatpush1.msra.mxu0 0.0
  %215 = vmatprep.subr.mxu0 0.0
  %216 = vmatpush1.msra.mxu0 0.0
  %217 = vmatprep.subr.mxu0 0.0
  %218 = vmatpush1.msra.mxu0 0.0
  %219 = vmatprep.subr.mxu0 0.0
  %220 = vmatpush1.msra.mxu0 0.0
  %221 = vmatprep.subr.mxu0 0.0
  %222 = vmatpush1.msra.mxu0 0.0
  %223 = vmatprep.subr.mxu0 0.0
  %224 = vmatpush1.msra.mxu0 0.0
  %225 = vmatprep.subr.mxu0 0.0
  %226 = vmatpush1.msra.mxu0 0.0
  %227 = vmatprep.mubr.f32.mxu0 0.0
  %228 = vmatmul.mubr.f32.gmra.mrb[0].mxu0 %v158
  %v229 = vpop.f32.mrb[0].mxu0
  %v230 = vadd.f32 0.0, %v229
  %v231 = vpop.f32.mrb[0].mxu0
  %232 = vmatprep.mubr.f32.mxu0 0.0
  %233 = vmatmul.mubr.f32.gmra.mrb[0].mxu0 %v161
  %v234 = vpop.f32.mrb[0].mxu0
  %v235 = vadd.f32 0.0, %v234
  %v236 = vpop.f32.mrb[0].mxu0
  %237 = vdwg.mxu0
  %v238 = vld [vmem:[%s11] sm:$0xff]
  %v239 = vld [vmem:[%s11 + $0x8] sm:$0xff]
  %v240 = vld [vmem:[%s12] sm:$0xff]
  %v241 = vld [vmem:[%s12 + $0x8] sm:$0xff]
  %v242 = vld [vmem:[%s3] sm:$0xff]
  %v243 = vld [vmem:[%s3 + $0x8] sm:$0xff]
  %v244 = vld [vmem:[%s3 + $0x10] sm:$0xff]
  %v245 = vld [vmem:[%s3 + $0x18] sm:$0xff]
  %v247 = vsel %vm156, %v230, 0
  %v250 = vsel %vm156, %v235, 0
  %252 = vmatprep.subr.mxu0 0.0
  %253 = vmatpush1.msra.mxu0 %v242
  %254 = vmatprep.subr.mxu0 0.0
  %255 = vmatpush1.msra.mxu0 %v243
  %256 = vmatprep.subr.mxu0 0.0
  %257 = vmatpush1.msra.mxu0 %v244
  %258 = vmatprep.subr.mxu0 0.0
  %259 = vmatpush1.msra.mxu0 %v245
  %260 = vmatprep.subr.mxu0 0.0
  %261 = vmatpush1.msra.mxu0 0.0
  %262 = vmatprep.subr.mxu0 0.0
  %263 = vmatpush1.msra.mxu0 0.0
  %264 = vmatprep.subr.mxu0 0.0
  %265 = vmatpush1.msra.mxu0 0.0
  %266 = vmatprep.subr.mxu0 0.0
  %267 = vmatpush1.msra.mxu0 0.0
  %268 = vmatprep.subr.mxu0 0.0
  %269 = vmatpush1.msra.mxu0 0.0
  %270 = vmatprep.subr.mxu0 0.0
  %271 = vmatpush1.msra.mxu0 0.0
  %272 = vmatprep.subr.mxu0 0.0
  %273 = vmatpush1.msra.mxu0 0.0
  %274 = vmatprep.subr.mxu0 0.0
  %275 = vmatpush1.msra.mxu0 0.0
  %276 = vmatprep.subr.mxu0 0.0
  %277 = vmatpush1.msra.mxu0 0.0
  %278 = vmatprep.subr.mxu0 0.0
  %279 = vmatpush1.msra.mxu0 0.0
  %280 = vmatprep.subr.mxu0 0.0
  %281 = vmatpush1.msra.mxu0 0.0
  %282 = vmatprep.subr.mxu0 0.0
  %283 = vmatpush1.msra.mxu0 0.0
  %284 = vmatprep.subr.mxu0 0.0
  %285 = vmatpush1.msra.mxu0 0.0
  %286 = vmatprep.subr.mxu0 0.0
  %287 = vmatpush1.msra.mxu0 0.0
  %288 = vmatprep.subr.mxu0 0.0
  %289 = vmatpush1.msra.mxu0 0.0
  %290 = vmatprep.subr.mxu0 0.0
  %291 = vmatpush1.msra.mxu0 0.0
  %292 = vmatprep.subr.mxu0 0.0
  %293 = vmatpush1.msra.mxu0 0.0
  %294 = vmatprep.subr.mxu0 0.0
  %295 = vmatpush1.msra.mxu0 0.0
  %296 = vmatprep.subr.mxu0 0.0
  %297 = vmatpush1.msra.mxu0 0.0
  %298 = vmatprep.subr.mxu0 0.0
  %299 = vmatpush1.msra.mxu0 0.0
  %300 = vmatprep.subr.mxu0 0.0
  %301 = vmatpush1.msra.mxu0 0.0
  %302 = vmatprep.subr.mxu0 0.0
  %303 = vmatpush1.msra.mxu0 0.0
  %304 = vmatprep.subr.mxu0 0.0
  %305 = vmatpush1.msra.mxu0 0.0
  %306 = vmatprep.subr.mxu0 0.0
  %307 = vmatpush1.msra.mxu0 0.0
  %308 = vmatprep.subr.mxu0 0.0
  %309 = vmatpush1.msra.mxu0 0.0
  %310 = vmatprep.subr.mxu0 0.0
  %311 = vmatpush1.msra.mxu0 0.0
  %312 = vmatprep.subr.mxu0 0.0
  %313 = vmatpush1.msra.mxu0 0.0
  %314 = vmatprep.subr.mxu0 0.0
  %315 = vmatpush1.msra.mxu0 0.0
  %316 = vmatprep.mubr.f32.mxu0 0.0
  %317 = vmatmul.mubr.f32.gmra.mrb[0].mxu0 %v247
  %v318 = vpop.f32.mrb[0].mxu0
  %v319 = vadd.f32 0.0, %v318
  %v320 = vpop.f32.mrb[0].mxu0
  %321 = vmatprep.mubr.f32.mxu0 0.0
  %322 = vmatmul.mubr.f32.gmra.mrb[0].mxu0 %v250
  %v323 = vpop.f32.mrb[0].mxu0
  %v324 = vadd.f32 0.0, %v323
  %v325 = vpop.f32.mrb[0].mxu0
  %326 = vdwg.mxu0
  %v327 = vld [vmem:[%s4] sm:$0xff]
  %v328 = vld [vmem:[%s4 + $0x8] sm:$0xff]
  %v329 = vld [vmem:[%s4 + $0x10] sm:$0xff]
  %v330 = vld [vmem:[%s4 + $0x18] sm:$0xff]
  %v331 = vld [vmem:[%s5] sm:$0xff]
  %v332 = vld [vmem:[%s5 + $0x8] sm:$0xff]
  %v333 = vld [vmem:[%s5 + $0x10] sm:$0xff]
  %v334 = vld [vmem:[%s5 + $0x18] sm:$0xff]
  %335 = vmatprep.subr.mxu0 0.0
  %336 = vmatpush1.msra.mxu0 %v331
  %337 = vmatprep.subr.mxu0 0.0
  %338 = vmatpush1.msra.mxu0 %v332
  %339 = vmatprep.subr.mxu0 0.0
  %340 = vmatpush1.msra.mxu0 %v333
  %341 = vmatprep.subr.mxu0 0.0
  %342 = vmatpush1.msra.mxu0 %v334
  %343 = vmatprep.subr.mxu0 0.0
  %344 = vmatpush1.msra.mxu0 0.0
  %345 = vmatprep.subr.mxu0 0.0
  %346 = vmatpush1.msra.mxu0 0.0
  %347 = vmatprep.subr.mxu0 0.0
  %348 = vmatpush1.msra.mxu0 0.0
  %349 = vmatprep.subr.mxu0 0.0
  %350 = vmatpush1.msra.mxu0 0.0
  %351 = vmatprep.subr.mxu0 0.0
  %352 = vmatpush1.msra.mxu0 0.0
  %353 = vmatprep.subr.mxu0 0.0
  %354 = vmatpush1.msra.mxu0 0.0
  %355 = vmatprep.subr.mxu0 0.0
  %356 = vmatpush1.msra.mxu0 0.0
  %357 = vmatprep.subr.mxu0 0.0
  %358 = vmatpush1.msra.mxu0 0.0
  %359 = vmatprep.subr.mxu0 0.0
  %360 = vmatpush1.msra.mxu0 0.0
  %361 = vmatprep.subr.mxu0 0.0
  %362 = vmatpush1.msra.mxu0 0.0
  %363 = vmatprep.subr.mxu0 0.0
  %364 = vmatpush1.msra.mxu0 0.0
  %365 = vmatprep.subr.mxu0 0.0
  %366 = vmatpush1.msra.mxu0 0.0
  %367 = vmatprep.subr.mxu0 0.0
  %368 = vmatpush1.msra.mxu0 0.0
  %369 = vmatprep.subr.mxu0 0.0
  %370 = vmatpush1.msra.mxu0 0.0
  %371 = vmatprep.subr.mxu0 0.0
  %372 = vmatpush1.msra.mxu0 0.0
  %373 = vmatprep.subr.mxu0 0.0
  %374 = vmatpush1.msra.mxu0 0.0
  %375 = vmatprep.subr.mxu0 0.0
  %376 = vmatpush1.msra.mxu0 0.0
  %377 = vmatprep.subr.mxu0 0.0
  %378 = vmatpush1.msra.mxu0 0.0
  %379 = vmatprep.subr.mxu0 0.0
  %380 = vmatpush1.msra.mxu0 0.0
  %381 = vmatprep.subr.mxu0 0.0
  %382 = vmatpush1.msra.mxu0 0.0
  %383 = vmatprep.subr.mxu0 0.0
  %384 = vmatpush1.msra.mxu0 0.0
  %385 = vmatprep.subr.mxu0 0.0
  %386 = vmatpush1.msra.mxu0 0.0
  %387 = vmatprep.subr.mxu0 0.0
  %388 = vmatpush1.msra.mxu0 0.0
  %389 = vmatprep.subr.mxu0 0.0
  %390 = vmatpush1.msra.mxu0 0.0
  %391 = vmatprep.subr.mxu0 0.0
  %392 = vmatpush1.msra.mxu0 0.0
  %393 = vmatprep.subr.mxu0 0.0
  %394 = vmatpush1.msra.mxu0 0.0
  %395 = vmatprep.subr.mxu0 0.0
  %396 = vmatpush1.msra.mxu0 0.0
  %397 = vmatprep.subr.mxu0 0.0
  %398 = vmatpush1.msra.mxu0 0.0
  %399 = vmatprep.mubr.f32.mxu0 0.0
  %400 = vmatmul.mubr.f32.gmra.mrb[0].mxu0 %v247
  %v401 = vpop.f32.mrb[0].mxu0
  %v402 = vadd.f32 0.0, %v401
  %v403 = vpop.f32.mrb[0].mxu0
  %404 = vmatprep.mubr.f32.mxu0 0.0
  %405 = vmatmul.mubr.f32.gmra.mrb[0].mxu0 %v250
  %v406 = vpop.f32.mrb[0].mxu0
  %v407 = vadd.f32 0.0, %v406
  %v408 = vpop.f32.mrb[0].mxu0
  %409 = vdwg.mxu0
  %vm410 = vcmask 130048
  %v412 = vsel %vm410, %v238, 0
  %v415 = vsel %vm410, %v239, 0
  %417 = vmatprep.subr.mxu0 0.0
  %418 = vmatpush1.msra.mxu0 %v319
  %419 = vmatprep.subr.mxu0 0.0
  %420 = vmatpush1.msra.mxu0 %v324
  %421 = vmatprep.subr.mxu0 0.0
  %422 = vmatpush1.msra.mxu0 0.0
  %423 = vmatprep.subr.mxu0 0.0
  %424 = vmatpush1.msra.mxu0 0.0
  %425 = vmatprep.subr.mxu0 0.0
  %426 = vmatpush1.msra.mxu0 0.0
  %427 = vmatprep.subr.mxu0 0.0
  %428 = vmatpush1.msra.mxu0 0.0
  %429 = vmatprep.subr.mxu0 0.0
  %430 = vmatpush1.msra.mxu0 0.0
  %431 = vmatprep.subr.mxu0 0.0
  %432 = vmatpush1.msra.mxu0 0.0
  %433 = vmatprep.subr.mxu0 0.0
  %434 = vmatpush1.msra.mxu0 0.0
  %435 = vmatprep.subr.mxu0 0.0
  %436 = vmatpush1.msra.mxu0 0.0
  %437 = vmatprep.subr.mxu0 0.0
  %438 = vmatpush1.msra.mxu0 0.0
  %439 = vmatprep.subr.mxu0 0.0
  %440 = vmatpush1.msra.mxu0 0.0
  %441 = vmatprep.subr.mxu0 0.0
  %442 = vmatpush1.msra.mxu0 0.0
  %443 = vmatprep.subr.mxu0 0.0
  %444 = vmatpush1.msra.mxu0 0.0
  %445 = vmatprep.subr.mxu0 0.0
  %446 = vmatpush1.msra.mxu0 0.0
  %447 = vmatprep.subr.mxu0 0.0
  %448 = vmatpush1.msra.mxu0 0.0
  %449 = vmatprep.subr.mxu0 0.0
  %450 = vmatpush1.msra.mxu0 0.0
  %451 = vmatprep.subr.mxu0 0.0
  %452 = vmatpush1.msra.mxu0 0.0
  %453 = vmatprep.subr.mxu0 0.0
  %454 = vmatpush1.msra.mxu0 0.0
  %455 = vmatprep.subr.mxu0 0.0
  %456 = vmatpush1.msra.mxu0 0.0
  %457 = vmatprep.subr.mxu0 0.0
  %458 = vmatpush1.msra.mxu0 0.0
  %459 = vmatprep.subr.mxu0 0.0
  %460 = vmatpush1.msra.mxu0 0.0
  %461 = vmatprep.subr.mxu0 0.0
  %462 = vmatpush1.msra.mxu0 0.0
  %463 = vmatprep.subr.mxu0 0.0
  %464 = vmatpush1.msra.mxu0 0.0
  %465 = vmatprep.subr.mxu0 0.0
  %466 = vmatpush1.msra.mxu0 0.0
  %467 = vmatprep.subr.mxu0 0.0
  %468 = vmatpush1.msra.mxu0 0.0
  %469 = vmatprep.subr.mxu0 0.0
  %470 = vmatpush1.msra.mxu0 0.0
  %471 = vmatprep.subr.mxu0 0.0
  %472 = vmatpush1.msra.mxu0 0.0
  %473 = vmatprep.subr.mxu0 0.0
  %474 = vmatpush1.msra.mxu0 0.0
  %475 = vmatprep.subr.mxu0 0.0
  %476 = vmatpush1.msra.mxu0 0.0
  %477 = vmatprep.subr.mxu0 0.0
  %478 = vmatpush1.msra.mxu0 0.0
  %479 = vmatprep.subr.mxu0 0.0
  %480 = vmatpush1.msra.mxu0 0.0
  %481 = vmatprep.mubr.f32.mxu0 0.0
  %482 = vmatmul.mubr.f32.gmra.mrb[0].mxu0 %v412
  %v483 = vpop.f32.mrb[0].mxu0
  %v484 = vadd.f32 0.0, %v483
  %v485 = vpop.f32.mrb[0].mxu0
  %486 = vmatprep.mubr.f32.mxu0 0.0
  %487 = vmatmul.mubr.f32.gmra.mrb[0].mxu0 %v415
  %v488 = vpop.f32.mrb[0].mxu0
  %v489 = vadd.f32 0.0, %v488
  %v490 = vpop.f32.mrb[0].mxu0
  %491 = vdwg.mxu0
  %492 = vmatprep.subr.mxu0 0.0
  %493 = vmatpush1.msra.mxu0 %v327
  %494 = vmatprep.subr.mxu0 0.0
  %495 = vmatpush1.msra.mxu0 %v328
  %496 = vmatprep.subr.mxu0 0.0
  %497 = vmatpush1.msra.mxu0 %v329
  %498 = vmatprep.subr.mxu0 0.0
  %499 = vmatpush1.msra.mxu0 %v330
  %500 = vmatprep.subr.mxu0 0.0
  %501 = vmatpush1.msra.mxu0 0.0
  %502 = vmatprep.subr.mxu0 0.0
  %503 = vmatpush1.msra.mxu0 0.0
  %504 = vmatprep.subr.mxu0 0.0
  %505 = vmatpush1.msra.mxu0 0.0
  %506 = vmatprep.subr.mxu0 0.0
  %507 = vmatpush1.msra.mxu0 0.0
  %508 = vmatprep.subr.mxu0 0.0
  %509 = vmatpush1.msra.mxu0 0.0
  %510 = vmatprep.subr.mxu0 0.0
  %511 = vmatpush1.msra.mxu0 0.0
  %512 = vmatprep.subr.mxu0 0.0
  %513 = vmatpush1.msra.mxu0 0.0
  %514 = vmatprep.subr.mxu0 0.0
  %515 = vmatpush1.msra.mxu0 0.0
  %516 = vmatprep.subr.mxu0 0.0
  %517 = vmatpush1.msra.mxu0 0.0
  %518 = vmatprep.subr.mxu0 0.0
  %519 = vmatpush1.msra.mxu0 0.0
  %520 = vmatprep.subr.mxu0 0.0
  %521 = vmatpush1.msra.mxu0 0.0
  %522 = vmatprep.subr.mxu0 0.0
  %523 = vmatpush1.msra.mxu0 0.0
  %524 = vmatprep.subr.mxu0 0.0
  %525 = vmatpush1.msra.mxu0 0.0
  %526 = vmatprep.subr.mxu0 0.0
  %527 = vmatpush1.msra.mxu0 0.0
  %528 = vmatprep.subr.mxu0 0.0
  %529 = vmatpush1.msra.mxu0 0.0
  %530 = vmatprep.subr.mxu0 0.0
  %531 = vmatpush1.msra.mxu0 0.0
  %532 = vmatprep.subr.mxu0 0.0
  %533 = vmatpush1.msra.mxu0 0.0
  %534 = vmatprep.subr.mxu0 0.0
  %535 = vmatpush1.msra.mxu0 0.0
  %536 = vmatprep.subr.mxu0 0.0
  %537 = vmatpush1.msra.mxu0 0.0
  %538 = vmatprep.subr.mxu0 0.0
  %539 = vmatpush1.msra.mxu0 0.0
  %540 = vmatprep.subr.mxu0 0.0
  %541 = vmatpush1.msra.mxu0 0.0
  %542 = vmatprep.subr.mxu0 0.0
  %543 = vmatpush1.msra.mxu0 0.0
  %544 = vmatprep.subr.mxu0 0.0
  %545 = vmatpush1.msra.mxu0 0.0
  %546 = vmatprep.subr.mxu0 0.0
  %547 = vmatpush1.msra.mxu0 0.0
  %548 = vmatprep.subr.mxu0 0.0
  %549 = vmatpush1.msra.mxu0 0.0
  %550 = vmatprep.subr.mxu0 0.0
  %551 = vmatpush1.msra.mxu0 0.0
  %552 = vmatprep.subr.mxu0 0.0
  %553 = vmatpush1.msra.mxu0 0.0
  %554 = vmatprep.subr.mxu0 0.0
  %555 = vmatpush1.msra.mxu0 0.0
  %556 = vmatprep.mubr.f32.mxu0 0.0
  %557 = vmatmul.mubr.f32.gmra.mrb[0].mxu0 %v247
  %v558 = vpop.f32.mrb[0].mxu0
  %v559 = vadd.f32 %v484, %v558
  %v560 = vpop.f32.mrb[0].mxu0
  %561 = vmatprep.mubr.f32.mxu0 0.0
  %562 = vmatmul.mubr.f32.gmra.mrb[0].mxu0 %v250
  %v563 = vpop.f32.mrb[0].mxu0
  %v564 = vadd.f32 %v489, %v563
  %v565 = vpop.f32.mrb[0].mxu0
  %566 = vdwg.mxu0
  %v568 = vsel %vm410, %v240, 0
  %v571 = vsel %vm410, %v241, 0
  %573 = vmatprep.subr.mxu0 0.0
  %574 = vmatpush1.msra.mxu0 %v402
  %575 = vmatprep.subr.mxu0 0.0
  %576 = vmatpush1.msra.mxu0 %v407
  %577 = vmatprep.subr.mxu0 0.0
  %578 = vmatpush1.msra.mxu0 0.0
  %579 = vmatprep.subr.mxu0 0.0
  %580 = vmatpush1.msra.mxu0 0.0
  %581 = vmatprep.subr.mxu0 0.0
  %582 = vmatpush1.msra.mxu0 0.0
  %583 = vmatprep.subr.mxu0 0.0
  %584 = vmatpush1.msra.mxu0 0.0
  %585 = vmatprep.subr.mxu0 0.0
  %586 = vmatpush1.msra.mxu0 0.0
  %587 = vmatprep.subr.mxu0 0.0
  %588 = vmatpush1.msra.mxu0 0.0
  %589 = vmatprep.subr.mxu0 0.0
  %590 = vmatpush1.msra.mxu0 0.0
  %591 = vmatprep.subr.mxu0 0.0
  %592 = vmatpush1.msra.mxu0 0.0
  %593 = vmatprep.subr.mxu0 0.0
  %594 = vmatpush1.msra.mxu0 0.0
  %595 = vmatprep.subr.mxu0 0.0
  %596 = vmatpush1.msra.mxu0 0.0
  %597 = vmatprep.subr.mxu0 0.0
  %598 = vmatpush1.msra.mxu0 0.0
  %599 = vmatprep.subr.mxu0 0.0
  %600 = vmatpush1.msra.mxu0 0.0
  %601 = vmatprep.subr.mxu0 0.0
  %602 = vmatpush1.msra.mxu0 0.0
  %603 = vmatprep.subr.mxu0 0.0
  %604 = vmatpush1.msra.mxu0 0.0
  %605 = vmatprep.subr.mxu0 0.0
  %606 = vmatpush1.msra.mxu0 0.0
  %607 = vmatprep.subr.mxu0 0.0
  %608 = vmatpush1.msra.mxu0 0.0
  %609 = vmatprep.subr.mxu0 0.0
  %610 = vmatpush1.msra.mxu0 0.0
  %611 = vmatprep.subr.mxu0 0.0
  %612 = vmatpush1.msra.mxu0 0.0
  %613 = vmatprep.subr.mxu0 0.0
  %614 = vmatpush1.msra.mxu0 0.0
  %615 = vmatprep.subr.mxu0 0.0
  %616 = vmatpush1.msra.mxu0 0.0
  %617 = vmatprep.subr.mxu0 0.0
  %618 = vmatpush1.msra.mxu0 0.0
  %619 = vmatprep.subr.mxu0 0.0
  %620 = vmatpush1.msra.mxu0 0.0
  %621 = vmatprep.subr.mxu0 0.0
  %622 = vmatpush1.msra.mxu0 0.0
  %623 = vmatprep.subr.mxu0 0.0
  %624 = vmatpush1.msra.mxu0 0.0
  %625 = vmatprep.subr.mxu0 0.0
  %626 = vmatpush1.msra.mxu0 0.0
  %627 = vmatprep.subr.mxu0 0.0
  %628 = vmatpush1.msra.mxu0 0.0
  %629 = vmatprep.subr.mxu0 0.0
  %630 = vmatpush1.msra.mxu0 0.0
  %631 = vmatprep.subr.mxu0 0.0
  %632 = vmatpush1.msra.mxu0 0.0
  %633 = vmatprep.subr.mxu0 0.0
  %634 = vmatpush1.msra.mxu0 0.0
  %635 = vmatprep.subr.mxu0 0.0
  %636 = vmatpush1.msra.mxu0 0.0
  %637 = vmatprep.mubr.f32.mxu0 0.0
  %638 = vmatmul.mubr.f32.gmra.mrb[0].mxu0 %v568
  %v639 = vpop.f32.mrb[0].mxu0
  %v640 = vadd.f32 0.0, %v639
  %v641 = vpop.f32.mrb[0].mxu0
  %642 = vmatprep.mubr.f32.mxu0 0.0
  %643 = vmatmul.mubr.f32.gmra.mrb[0].mxu0 %v571
  %v644 = vpop.f32.mrb[0].mxu0
  %v645 = vadd.f32 0.0, %v644
  %v646 = vpop.f32.mrb[0].mxu0
  %647 = vdwg.mxu0
  %v648 = vadd.f32 %v559, %v640
  %v649 = vadd.f32 %v564, %v645
  %v650 = vld [vmem:[%s6] sm:$0x1]
  %v652 = vlaneseq
  %v653 = vshrl.u32 %v652, 7
  %v654 = vsub.s32 0, %v653
  %v655 = vrot.slane %v650, %v654
  %v657 = vadd.f32 %v648, %v655
  %v658 = vadd.f32 %v649, %v655
  %v659 = vmax.f32 %v657, 0.0
  %v660 = vmax.f32 %v658, 0.0
  %v661 = vld [vmem:[%s7] sm:$0xff]
  %v662 = vld [vmem:[%s7 + $0x8] sm:$0xff]
  %v663 = vld [vmem:[%s7 + $0x10] sm:$0xff]
  %v664 = vld [vmem:[%s7 + $0x18] sm:$0xff]
  %v665 = vld [vmem:[%s7 + $0x20] sm:$0xff]
  %v666 = vld [vmem:[%s7 + $0x28] sm:$0xff]
  %v667 = vld [vmem:[%s7 + $0x30] sm:$0xff]
  %v668 = vld [vmem:[%s7 + $0x38] sm:$0xff]
  %v670 = vsel %vm58, %v659, 0
  %v673 = vsel %vm58, %v660, 0
  %675 = vmatprep.subr.mxu0 0.0
  %676 = vmatpush1.msra.mxu0 %v661
  %677 = vmatprep.subr.mxu0 0.0
  %678 = vmatpush1.msra.mxu0 %v662
  %679 = vmatprep.subr.mxu0 0.0
  %680 = vmatpush1.msra.mxu0 %v663
  %681 = vmatprep.subr.mxu0 0.0
  %682 = vmatpush1.msra.mxu0 %v664
  %683 = vmatprep.subr.mxu0 0.0
  %684 = vmatpush1.msra.mxu0 %v665
  %685 = vmatprep.subr.mxu0 0.0
  %686 = vmatpush1.msra.mxu0 %v666
  %687 = vmatprep.subr.mxu0 0.0
  %688 = vmatpush1.msra.mxu0 %v667
  %689 = vmatprep.subr.mxu0 0.0
  %690 = vmatpush1.msra.mxu0 %v668
  %691 = vmatprep.subr.mxu0 0.0
  %692 = vmatpush1.msra.mxu0 0.0
  %693 = vmatprep.subr.mxu0 0.0
  %694 = vmatpush1.msra.mxu0 0.0
  %695 = vmatprep.subr.mxu0 0.0
  %696 = vmatpush1.msra.mxu0 0.0
  %697 = vmatprep.subr.mxu0 0.0
  %698 = vmatpush1.msra.mxu0 0.0
  %699 = vmatprep.subr.mxu0 0.0
  %700 = vmatpush1.msra.mxu0 0.0
  %701 = vmatprep.subr.mxu0 0.0
  %702 = vmatpush1.msra.mxu0 0.0
  %703 = vmatprep.subr.mxu0 0.0
  %704 = vmatpush1.msra.mxu0 0.0
  %705 = vmatprep.subr.mxu0 0.0
  %706 = vmatpush1.msra.mxu0 0.0
  %707 = vmatprep.subr.mxu0 0.0
  %708 = vmatpush1.msra.mxu0 0.0
  %709 = vmatprep.subr.mxu0 0.0
  %710 = vmatpush1.msra.mxu0 0.0
  %711 = vmatprep.subr.mxu0 0.0
  %712 = vmatpush1.msra.mxu0 0.0
  %713 = vmatprep.subr.mxu0 0.0
  %714 = vmatpush1.msra.mxu0 0.0
  %715 = vmatprep.subr.mxu0 0.0
  %716 = vmatpush1.msra.mxu0 0.0
  %717 = vmatprep.subr.mxu0 0.0
  %718 = vmatpush1.msra.mxu0 0.0
  %719 = vmatprep.subr.mxu0 0.0
  %720 = vmatpush1.msra.mxu0 0.0
  %721 = vmatprep.subr.mxu0 0.0
  %722 = vmatpush1.msra.mxu0 0.0
  %723 = vmatprep.subr.mxu0 0.0
  %724 = vmatpush1.msra.mxu0 0.0
  %725 = vmatprep.subr.mxu0 0.0
  %726 = vmatpush1.msra.mxu0 0.0
  %727 = vmatprep.subr.mxu0 0.0
  %728 = vmatpush1.msra.mxu0 0.0
  %729 = vmatprep.subr.mxu0 0.0
  %730 = vmatpush1.msra.mxu0 0.0
  %731 = vmatprep.subr.mxu0 0.0
  %732 = vmatpush1.msra.mxu0 0.0
  %733 = vmatprep.subr.mxu0 0.0
  %734 = vmatpush1.msra.mxu0 0.0
  %735 = vmatprep.subr.mxu0 0.0
  %736 = vmatpush1.msra.mxu0 0.0
  %737 = vmatprep.subr.mxu0 0.0
  %738 = vmatpush1.msra.mxu0 0.0
  %739 = vmatprep.mubr.f32.mxu0 0.0
  %740 = vmatmul.mubr.f32.gmra.mrb[0].mxu0 %v670
  %v741 = vpop.f32.mrb[0].mxu0
  %v742 = vadd.f32 0.0, %v741
  %v743 = vpop.f32.mrb[0].mxu0
  %744 = vmatprep.mubr.f32.mxu0 0.0
  %745 = vmatmul.mubr.f32.gmra.mrb[0].mxu0 %v673
  %v746 = vpop.f32.mrb[0].mxu0
  %v747 = vadd.f32 0.0, %v746
  %v748 = vpop.f32.mrb[0].mxu0
  %749 = vdwg.mxu0
  %v750 = vld [vmem:[%s8] sm:$0xff]
  %v751 = vld [vmem:[%s8 + $0x8] sm:$0xff]
  %v752 = vld [vmem:[%s8 + $0x10] sm:$0xff]
  %v753 = vld [vmem:[%s8 + $0x18] sm:$0xff]
  %v754 = vld [vmem:[%s8 + $0x20] sm:$0xff]
  %v755 = vld [vmem:[%s8 + $0x28] sm:$0xff]
  %v756 = vld [vmem:[%s8 + $0x30] sm:$0xff]
  %v757 = vld [vmem:[%s8 + $0x38] sm:$0xff]
  %v758 = vld [vmem:[%s9] sm:$0xff]
  %v759 = vld [vmem:[%s9 + $0x8] sm:$0xff]
  %v760 = vld [vmem:[%s9 + $0x10] sm:$0xff]
  %v761 = vld [vmem:[%s9 + $0x18] sm:$0xff]
  %v762 = vld [vmem:[%s9 + $0x20] sm:$0xff]
  %v763 = vld [vmem:[%s9 + $0x28] sm:$0xff]
  %v764 = vld [vmem:[%s9 + $0x30] sm:$0xff]
  %v765 = vld [vmem:[%s9 + $0x38] sm:$0xff]
  %766 = vmatprep.subr.mxu0 0.0
  %767 = vmatpush1.msra.mxu0 %v758
  %768 = vmatprep.subr.mxu0 0.0
  %769 = vmatpush1.msra.mxu0 %v759
  %770 = vmatprep.subr.mxu0 0.0
  %771 = vmatpush1.msra.mxu0 %v760
  %772 = vmatprep.subr.mxu0 0.0
  %773 = vmatpush1.msra.mxu0 %v761
  %774 = vmatprep.subr.mxu0 0.0
  %775 = vmatpush1.msra.mxu0 %v762
  %776 = vmatprep.subr.mxu0 0.0
  %777 = vmatpush1.msra.mxu0 %v763
  %778 = vmatprep.subr.mxu0 0.0
  %779 = vmatpush1.msra.mxu0 %v764
  %780 = vmatprep.subr.mxu0 0.0
  %781 = vmatpush1.msra.mxu0 %v765
  %782 = vmatprep.subr.mxu0 0.0
  %783 = vmatpush1.msra.mxu0 0.0
  %784 = vmatprep.subr.mxu0 0.0
  %785 = vmatpush1.msra.mxu0 0.0
  %786 = vmatprep.subr.mxu0 0.0
  %787 = vmatpush1.msra.mxu0 0.0
  %788 = vmatprep.subr.mxu0 0.0
  %789 = vmatpush1.msra.mxu0 0.0
  %790 = vmatprep.subr.mxu0 0.0
  %791 = vmatpush1.msra.mxu0 0.0
  %792 = vmatprep.subr.mxu0 0.0
  %793 = vmatpush1.msra.mxu0 0.0
  %794 = vmatprep.subr.mxu0 0.0
  %795 = vmatpush1.msra.mxu0 0.0
  %796 = vmatprep.subr.mxu0 0.0
  %797 = vmatpush1.msra.mxu0 0.0
  %798 = vmatprep.subr.mxu0 0.0
  %799 = vmatpush1.msra.mxu0 0.0
  %800 = vmatprep.subr.mxu0 0.0
  %801 = vmatpush1.msra.mxu0 0.0
  %802 = vmatprep.subr.mxu0 0.0
  %803 = vmatpush1.msra.mxu0 0.0
  %804 = vmatprep.subr.mxu0 0.0
  %805 = vmatpush1.msra.mxu0 0.0
  %806 = vmatprep.subr.mxu0 0.0
  %807 = vmatpush1.msra.mxu0 0.0
  %808 = vmatprep.subr.mxu0 0.0
  %809 = vmatpush1.msra.mxu0 0.0
  %810 = vmatprep.subr.mxu0 0.0
  %811 = vmatpush1.msra.mxu0 0.0
  %812 = vmatprep.subr.mxu0 0.0
  %813 = vmatpush1.msra.mxu0 0.0
  %814 = vmatprep.subr.mxu0 0.0
  %815 = vmatpush1.msra.mxu0 0.0
  %816 = vmatprep.subr.mxu0 0.0
  %817 = vmatpush1.msra.mxu0 0.0
  %818 = vmatprep.subr.mxu0 0.0
  %819 = vmatpush1.msra.mxu0 0.0
  %820 = vmatprep.subr.mxu0 0.0
  %821 = vmatpush1.msra.mxu0 0.0
  %822 = vmatprep.subr.mxu0 0.0
  %823 = vmatpush1.msra.mxu0 0.0
  %824 = vmatprep.subr.mxu0 0.0
  %825 = vmatpush1.msra.mxu0 0.0
  %826 = vmatprep.subr.mxu0 0.0
  %827 = vmatpush1.msra.mxu0 0.0
  %828 = vmatprep.subr.mxu0 0.0
  %829 = vmatpush1.msra.mxu0 0.0
  %830 = vmatprep.mubr.f32.mxu0 0.0
  %831 = vmatmul.mubr.f32.gmra.mrb[0].mxu0 %v670
  %v832 = vpop.f32.mrb[0].mxu0
  %v833 = vadd.f32 0.0, %v832
  %v834 = vpop.f32.mrb[0].mxu0
  %835 = vmatprep.mubr.f32.mxu0 0.0
  %836 = vmatmul.mubr.f32.gmra.mrb[0].mxu0 %v673
  %v837 = vpop.f32.mrb[0].mxu0
  %v838 = vadd.f32 0.0, %v837
  %v839 = vpop.f32.mrb[0].mxu0
  %840 = vdwg.mxu0
  %841 = vmatprep.subr.mxu0 0.0
  %842 = vmatpush1.msra.mxu0 %v742
  %843 = vmatprep.subr.mxu0 0.0
  %844 = vmatpush1.msra.mxu0 %v747
  %845 = vmatprep.subr.mxu0 0.0
  %846 = vmatpush1.msra.mxu0 0.0
  %847 = vmatprep.subr.mxu0 0.0
  %848 = vmatpush1.msra.mxu0 0.0
  %849 = vmatprep.subr.mxu0 0.0
  %850 = vmatpush1.msra.mxu0 0.0
  %851 = vmatprep.subr.mxu0 0.0
  %852 = vmatpush1.msra.mxu0 0.0
  %853 = vmatprep.subr.mxu0 0.0
  %854 = vmatpush1.msra.mxu0 0.0
  %855 = vmatprep.subr.mxu0 0.0
  %856 = vmatpush1.msra.mxu0 0.0
  %857 = vmatprep.subr.mxu0 0.0
  %858 = vmatpush1.msra.mxu0 0.0
  %859 = vmatprep.subr.mxu0 0.0
  %860 = vmatpush1.msra.mxu0 0.0
  %861 = vmatprep.subr.mxu0 0.0
  %862 = vmatpush1.msra.mxu0 0.0
  %863 = vmatprep.subr.mxu0 0.0
  %864 = vmatpush1.msra.mxu0 0.0
  %865 = vmatprep.subr.mxu0 0.0
  %866 = vmatpush1.msra.mxu0 0.0
  %867 = vmatprep.subr.mxu0 0.0
  %868 = vmatpush1.msra.mxu0 0.0
  %869 = vmatprep.subr.mxu0 0.0
  %870 = vmatpush1.msra.mxu0 0.0
  %871 = vmatprep.subr.mxu0 0.0
  %872 = vmatpush1.msra.mxu0 0.0
  %873 = vmatprep.subr.mxu0 0.0
  %874 = vmatpush1.msra.mxu0 0.0
  %875 = vmatprep.subr.mxu0 0.0
  %876 = vmatpush1.msra.mxu0 0.0
  %877 = vmatprep.subr.mxu0 0.0
  %878 = vmatpush1.msra.mxu0 0.0
  %879 = vmatprep.subr.mxu0 0.0
  %880 = vmatpush1.msra.mxu0 0.0
  %881 = vmatprep.subr.mxu0 0.0
  %882 = vmatpush1.msra.mxu0 0.0
  %883 = vmatprep.subr.mxu0 0.0
  %884 = vmatpush1.msra.mxu0 0.0
  %885 = vmatprep.subr.mxu0 0.0
  %886 = vmatpush1.msra.mxu0 0.0
  %887 = vmatprep.subr.mxu0 0.0
  %888 = vmatpush1.msra.mxu0 0.0
  %889 = vmatprep.subr.mxu0 0.0
  %890 = vmatpush1.msra.mxu0 0.0
  %891 = vmatprep.subr.mxu0 0.0
  %892 = vmatpush1.msra.mxu0 0.0
  %893 = vmatprep.subr.mxu0 0.0
  %894 = vmatpush1.msra.mxu0 0.0
  %895 = vmatprep.subr.mxu0 0.0
  %896 = vmatpush1.msra.mxu0 0.0
  %897 = vmatprep.subr.mxu0 0.0
  %898 = vmatpush1.msra.mxu0 0.0
  %899 = vmatprep.subr.mxu0 0.0
  %900 = vmatpush1.msra.mxu0 0.0
  %901 = vmatprep.subr.mxu0 0.0
  %902 = vmatpush1.msra.mxu0 0.0
  %903 = vmatprep.subr.mxu0 0.0
  %904 = vmatpush1.msra.mxu0 0.0
  %905 = vmatprep.mubr.f32.mxu0 0.0
  %906 = vmatmul.mubr.f32.gmra.mrb[0].mxu0 %v412
  %v907 = vpop.f32.mrb[0].mxu0
  %v908 = vadd.f32 0.0, %v907
  %v909 = vpop.f32.mrb[0].mxu0
  %910 = vmatprep.mubr.f32.mxu0 0.0
  %911 = vmatmul.mubr.f32.gmra.mrb[0].mxu0 %v415
  %v912 = vpop.f32.mrb[0].mxu0
  %v913 = vadd.f32 0.0, %v912
  %v914 = vpop.f32.mrb[0].mxu0
  %915 = vdwg.mxu0
  %916 = vmatprep.subr.mxu0 0.0
  %917 = vmatpush1.msra.mxu0 %v750
  %918 = vmatprep.subr.mxu0 0.0
  %919 = vmatpush1.msra.mxu0 %v751
  %920 = vmatprep.subr.mxu0 0.0
  %921 = vmatpush1.msra.mxu0 %v752
  %922 = vmatprep.subr.mxu0 0.0
  %923 = vmatpush1.msra.mxu0 %v753
  %924 = vmatprep.subr.mxu0 0.0
  %925 = vmatpush1.msra.mxu0 %v754
  %926 = vmatprep.subr.mxu0 0.0
  %927 = vmatpush1.msra.mxu0 %v755
  %928 = vmatprep.subr.mxu0 0.0
  %929 = vmatpush1.msra.mxu0 %v756
  %930 = vmatprep.subr.mxu0 0.0
  %931 = vmatpush1.msra.mxu0 %v757
  %932 = vmatprep.subr.mxu0 0.0
  %933 = vmatpush1.msra.mxu0 0.0
  %934 = vmatprep.subr.mxu0 0.0
  %935 = vmatpush1.msra.mxu0 0.0
  %936 = vmatprep.subr.mxu0 0.0
  %937 = vmatpush1.msra.mxu0 0.0
  %938 = vmatprep.subr.mxu0 0.0
  %939 = vmatpush1.msra.mxu0 0.0
  %940 = vmatprep.subr.mxu0 0.0
  %941 = vmatpush1.msra.mxu0 0.0
  %942 = vmatprep.subr.mxu0 0.0
  %943 = vmatpush1.msra.mxu0 0.0
  %944 = vmatprep.subr.mxu0 0.0
  %945 = vmatpush1.msra.mxu0 0.0
  %946 = vmatprep.subr.mxu0 0.0
  %947 = vmatpush1.msra.mxu0 0.0
  %948 = vmatprep.subr.mxu0 0.0
  %949 = vmatpush1.msra.mxu0 0.0
  %950 = vmatprep.subr.mxu0 0.0
  %951 = vmatpush1.msra.mxu0 0.0
  %952 = vmatprep.subr.mxu0 0.0
  %953 = vmatpush1.msra.mxu0 0.0
  %954 = vmatprep.subr.mxu0 0.0
  %955 = vmatpush1.msra.mxu0 0.0
  %956 = vmatprep.subr.mxu0 0.0
  %957 = vmatpush1.msra.mxu0 0.0
  %958 = vmatprep.subr.mxu0 0.0
  %959 = vmatpush1.msra.mxu0 0.0
  %960 = vmatprep.subr.mxu0 0.0
  %961 = vmatpush1.msra.mxu0 0.0
  %962 = vmatprep.subr.mxu0 0.0
  %963 = vmatpush1.msra.mxu0 0.0
  %964 = vmatprep.subr.mxu0 0.0
  %965 = vmatpush1.msra.mxu0 0.0
  %966 = vmatprep.subr.mxu0 0.0
  %967 = vmatpush1.msra.mxu0 0.0
  %968 = vmatprep.subr.mxu0 0.0
  %969 = vmatpush1.msra.mxu0 0.0
  %970 = vmatprep.subr.mxu0 0.0
  %971 = vmatpush1.msra.mxu0 0.0
  %972 = vmatprep.subr.mxu0 0.0
  %973 = vmatpush1.msra.mxu0 0.0
  %974 = vmatprep.subr.mxu0 0.0
  %975 = vmatpush1.msra.mxu0 0.0
  %976 = vmatprep.subr.mxu0 0.0
  %977 = vmatpush1.msra.mxu0 0.0
  %978 = vmatprep.subr.mxu0 0.0
  %979 = vmatpush1.msra.mxu0 0.0
  %980 = vmatprep.mubr.f32.mxu0 0.0
  %981 = vmatmul.mubr.f32.gmra.mrb[0].mxu0 %v670
  %v982 = vpop.f32.mrb[0].mxu0
  %v983 = vadd.f32 %v908, %v982
  %v984 = vpop.f32.mrb[0].mxu0
  %985 = vmatprep.mubr.f32.mxu0 0.0
  %986 = vmatmul.mubr.f32.gmra.mrb[0].mxu0 %v673
  %v987 = vpop.f32.mrb[0].mxu0
  %v988 = vadd.f32 %v913, %v987
  %v989 = vpop.f32.mrb[0].mxu0
  %990 = vdwg.mxu0
  %991 = vmatprep.subr.mxu0 0.0
  %992 = vmatpush1.msra.mxu0 %v833
  %993 = vmatprep.subr.mxu0 0.0
  %994 = vmatpush1.msra.mxu0 %v838
  %995 = vmatprep.subr.mxu0 0.0
  %996 = vmatpush1.msra.mxu0 0.0
  %997 = vmatprep.subr.mxu0 0.0
  %998 = vmatpush1.msra.mxu0 0.0
  %999 = vmatprep.subr.mxu0 0.0
  %1000 = vmatpush1.msra.mxu0 0.0
  %1001 = vmatprep.subr.mxu0 0.0
  %1002 = vmatpush1.msra.mxu0 0.0
  %1003 = vmatprep.subr.mxu0 0.0
  %1004 = vmatpush1.msra.mxu0 0.0
  %1005 = vmatprep.subr.mxu0 0.0
  %1006 = vmatpush1.msra.mxu0 0.0
  %1007 = vmatprep.subr.mxu0 0.0
  %1008 = vmatpush1.msra.mxu0 0.0
  %1009 = vmatprep.subr.mxu0 0.0
  %1010 = vmatpush1.msra.mxu0 0.0
  %1011 = vmatprep.subr.mxu0 0.0
  %1012 = vmatpush1.msra.mxu0 0.0
  %1013 = vmatprep.subr.mxu0 0.0
  %1014 = vmatpush1.msra.mxu0 0.0
  %1015 = vmatprep.subr.mxu0 0.0
  %1016 = vmatpush1.msra.mxu0 0.0
  %1017 = vmatprep.subr.mxu0 0.0
  %1018 = vmatpush1.msra.mxu0 0.0
  %1019 = vmatprep.subr.mxu0 0.0
  %1020 = vmatpush1.msra.mxu0 0.0
  %1021 = vmatprep.subr.mxu0 0.0
  %1022 = vmatpush1.msra.mxu0 0.0
  %1023 = vmatprep.subr.mxu0 0.0
  %1024 = vmatpush1.msra.mxu0 0.0
  %1025 = vmatprep.subr.mxu0 0.0
  %1026 = vmatpush1.msra.mxu0 0.0
  %1027 = vmatprep.subr.mxu0 0.0
  %1028 = vmatpush1.msra.mxu0 0.0
  %1029 = vmatprep.subr.mxu0 0.0
  %1030 = vmatpush1.msra.mxu0 0.0
  %1031 = vmatprep.subr.mxu0 0.0
  %1032 = vmatpush1.msra.mxu0 0.0
  %1033 = vmatprep.subr.mxu0 0.0
  %1034 = vmatpush1.msra.mxu0 0.0
  %1035 = vmatprep.subr.mxu0 0.0
  %1036 = vmatpush1.msra.mxu0 0.0
  %1037 = vmatprep.subr.mxu0 0.0
  %1038 = vmatpush1.msra.mxu0 0.0
  %1039 = vmatprep.subr.mxu0 0.0
  %1040 = vmatpush1.msra.mxu0 0.0
  %1041 = vmatprep.subr.mxu0 0.0
  %1042 = vmatpush1.msra.mxu0 0.0
  %1043 = vmatprep.subr.mxu0 0.0
  %1044 = vmatpush1.msra.mxu0 0.0
  %1045 = vmatprep.subr.mxu0 0.0
  %1046 = vmatpush1.msra.mxu0 0.0
  %1047 = vmatprep.subr.mxu0 0.0
  %1048 = vmatpush1.msra.mxu0 0.0
  %1049 = vmatprep.subr.mxu0 0.0
  %1050 = vmatpush1.msra.mxu0 0.0
  %1051 = vmatprep.subr.mxu0 0.0
  %1052 = vmatpush1.msra.mxu0 0.0
  %1053 = vmatprep.subr.mxu0 0.0
  %1054 = vmatpush1.msra.mxu0 0.0
  %1055 = vmatprep.mubr.f32.mxu0 0.0
  %1056 = vmatmul.mubr.f32.gmra.mrb[0].mxu0 %v568
  %v1057 = vpop.f32.mrb[0].mxu0
  %v1058 = vadd.f32 0.0, %v1057
  %v1059 = vpop.f32.mrb[0].mxu0
  %1060 = vmatprep.mubr.f32.mxu0 0.0
  %1061 = vmatmul.mubr.f32.gmra.mrb[0].mxu0 %v571
  %v1062 = vpop.f32.mrb[0].mxu0
  %v1063 = vadd.f32 0.0, %v1062
  %v1064 = vpop.f32.mrb[0].mxu0
  %1065 = vdwg.mxu0
  %v1066 = vadd.f32 %v983, %v1058
  %v1067 = vadd.f32 %v988, %v1063
  %v1068 = vld [vmem:[%s10] sm:$0x1]
  %v1070 = vlaneseq
  %v1071 = vshrl.u32 %v1070, 7
  %v1072 = vsub.s32 0, %v1071
  %v1073 = vrot.slane %v1068, %v1072
  %v1075 = vadd.f32 %v1066, %v1073
  %v1076 = vadd.f32 %v1067, %v1073
  %v1077 = vmax.f32 %v1075, 0.0
  %v1078 = vmax.f32 %v1076, 0.0
  %1079 = vst.msk [vmem:[%s13] sm:$0xff] %vm58, %v1077
  %1080 = vst.msk [vmem:[%s13 + $0x8] sm:$0xff] %vm58, %v1078
  // Predicated region
  $region54: #{planar_flow_density_forward.5} parent=0 // pred_check
    _
  $region55: #{planar_flow_density_forward.5} parent=0 // pred_check_branch
    %1082 = sbr.rel (0) target = $region57
  $region56: #{planar_flow_density_forward.5} parent=0 // pred_region
    _
  $region57: #{planar_flow_density_forward.5} parent=0 // pred_fallthru
    _
  // Predicated region
  $region58: #{planar_flow_density_forward.5} parent=0 // pred_check
    _
  $region59: #{planar_flow_density_forward.5} parent=0 // pred_check_branch
    %1084 = sbr.rel (0) target = $region61
  $region60: #{planar_flow_density_forward.5} parent=0 // pred_region
    _
  $region61: #{planar_flow_density_forward.5} parent=0 // pred_fallthru
    _

// kernel: planar_flow_density_forward.4
$region0: #{planar_flow_density_forward.4}
  #allocation0 [shape = 'u32[]', space=smem, size = 0x4, offset = 0x4, fixed_abs, tag = 'smem constant byte address 0x4 - core index']
  #allocation1 [shape = 'u32[144,128]{1,0:T(1,128)}', space=vmem, size = 0x12000, scoped, tag = 'internal scratch']
  %s0 = inlined_call_operand.vmem [shape: f32[32,64], index: 0, kind: input, shape index: {}]
  %s1 = inlined_call_operand.vmem [shape: f32[64,64], index: 1, kind: input, shape index: {}]
  %s2 = inlined_call_operand.vmem [shape: f32[64,64], index: 2, kind: input, shape index: {}]
  %s3 = inlined_call_operand.vmem [shape: f32[64,64], index: 3, kind: input, shape index: {}]
  %s4 = inlined_call_operand.vmem [shape: f32[1,64], index: 4, kind: input, shape index: {}]
  %s5 = inlined_call_operand.vmem [shape: f32[64,64], index: 5, kind: input, shape index: {}]
  %s6 = inlined_call_operand.vmem [shape: f32[64,64], index: 6, kind: input, shape index: {}]
  %s7 = inlined_call_operand.vmem [shape: f32[64,64], index: 7, kind: input, shape index: {}]
  %s8 = inlined_call_operand.vmem [shape: f32[1,64], index: 8, kind: input, shape index: {}]
  %s9 = inlined_call_operand.vmem [shape: f32[32,32], index: 9, kind: input, shape index: {}]
  %s10 = inlined_call_operand.vmem [shape: f32[32,32], index: 10, kind: input, shape index: {}]
  %s11 = inlined_call_operand.vmem [shape: f32[32,64], index: 11, kind: output, shape index: {}]
  %s12 = sld [smem:[#allocation0]]
  $region54: #{planar_flow_density_forward.4} parent=0
    _
  %s14 = ssub.s32 1, %s12
  %s15 = scalar_select 0, %s14, %s12
  // Predicated region
  $region2: #{planar_flow_density_forward.4} parent=0 // pred_check
    _
  $region3: #{planar_flow_density_forward.4} parent=0 // pred_check_branch
    %17 = sbr.rel (0) target = $region5
  $region4: #{planar_flow_density_forward.4} parent=0 // pred_region
    _
  $region5: #{planar_flow_density_forward.4} parent=0 // pred_fallthru
    _
  // Predicated region
  $region6: #{planar_flow_density_forward.4} parent=0 // pred_check
    _
  $region7: #{planar_flow_density_forward.4} parent=0 // pred_check_branch
    %19 = sbr.rel (0) target = $region9
  $region8: #{planar_flow_density_forward.4} parent=0 // pred_region
    _
  $region9: #{planar_flow_density_forward.4} parent=0 // pred_fallthru
    _
  // Predicated region
  $region10: #{planar_flow_density_forward.4} parent=0 // pred_check
    _
  $region11: #{planar_flow_density_forward.4} parent=0 // pred_check_branch
    %21 = sbr.rel (0) target = $region13
  $region12: #{planar_flow_density_forward.4} parent=0 // pred_region
    _
  $region13: #{planar_flow_density_forward.4} parent=0 // pred_fallthru
    _
  // Predicated region
  $region14: #{planar_flow_density_forward.4} parent=0 // pred_check
    _
  $region15: #{planar_flow_density_forward.4} parent=0 // pred_check_branch
    %23 = sbr.rel (0) target = $region17
  $region16: #{planar_flow_density_forward.4} parent=0 // pred_region
    _
  $region17: #{planar_flow_density_forward.4} parent=0 // pred_fallthru
    _
  // Predicated region
  $region18: #{planar_flow_density_forward.4} parent=0 // pred_check
    _
  $region19: #{planar_flow_density_forward.4} parent=0 // pred_check_branch
    %25 = sbr.rel (0) target = $region21
  $region20: #{planar_flow_density_forward.4} parent=0 // pred_region
    _
  $region21: #{planar_flow_density_forward.4} parent=0 // pred_fallthru
    _
  // Predicated region
  $region22: #{planar_flow_density_forward.4} parent=0 // pred_check
    _
  $region23: #{planar_flow_density_forward.4} parent=0 // pred_check_branch
    %27 = sbr.rel (0) target = $region25
  $region24: #{planar_flow_density_forward.4} parent=0 // pred_region
    _
  $region25: #{planar_flow_density_forward.4} parent=0 // pred_fallthru
    _
  // Predicated region
  $region26: #{planar_flow_density_forward.4} parent=0 // pred_check
    _
  $region27: #{planar_flow_density_forward.4} parent=0 // pred_check_branch
    %29 = sbr.rel (0) target = $region29
  $region28: #{planar_flow_density_forward.4} parent=0 // pred_region
    _
  $region29: #{planar_flow_density_forward.4} parent=0 // pred_fallthru
    _
  // Predicated region
  $region30: #{planar_flow_density_forward.4} parent=0 // pred_check
    _
  $region31: #{planar_flow_density_forward.4} parent=0 // pred_check_branch
    %31 = sbr.rel (0) target = $region33
  $region32: #{planar_flow_density_forward.4} parent=0 // pred_region
    _
  $region33: #{planar_flow_density_forward.4} parent=0 // pred_fallthru
    _
  // Predicated region
  $region34: #{planar_flow_density_forward.4} parent=0 // pred_check
    _
  $region35: #{planar_flow_density_forward.4} parent=0 // pred_check_branch
    %33 = sbr.rel (0) target = $region37
  $region36: #{planar_flow_density_forward.4} parent=0 // pred_region
    _
  $region37: #{planar_flow_density_forward.4} parent=0 // pred_fallthru
    _
  // Predicated region
  $region38: #{planar_flow_density_forward.4} parent=0 // pred_check
    _
  $region39: #{planar_flow_density_forward.4} parent=0 // pred_check_branch
    %35 = sbr.rel (0) target = $region41
  $region40: #{planar_flow_density_forward.4} parent=0 // pred_region
    _
  $region41: #{planar_flow_density_forward.4} parent=0 // pred_fallthru
    _
  // Predicated region
  $region42: #{planar_flow_density_forward.4} parent=0 // pred_check
    _
  $region43: #{planar_flow_density_forward.4} parent=0 // pred_check_branch
    %37 = sbr.rel (0) target = $region45
  $region44: #{planar_flow_density_forward.4} parent=0 // pred_region
    _
  $region45: #{planar_flow_density_forward.4} parent=0 // pred_fallthru
    _
  %v38 = vld [vmem:[%s0] sm:$0xff]
  %v39 = vld [vmem:[%s0 + $0x8] sm:$0xff]
  %v40 = vld [vmem:[%s0 + $0x10] sm:$0xff]
  %v41 = vld [vmem:[%s0 + $0x18] sm:$0xff]
  %v42 = vld [vmem:[%s9] sm:$0xff]
  %v43 = vld [vmem:[%s9 + $0x8] sm:$0xff]
  %v44 = vld [vmem:[%s9 + $0x10] sm:$0xff]
  %v45 = vld [vmem:[%s9 + $0x18] sm:$0xff]
  %v46 = vld [vmem:[%s10] sm:$0xff]
  %v47 = vld [vmem:[%s10 + $0x8] sm:$0xff]
  %v48 = vld [vmem:[%s10 + $0x10] sm:$0xff]
  %v49 = vld [vmem:[%s10 + $0x18] sm:$0xff]
  %v50 = vld [vmem:[%s1] sm:$0xff]
  %v51 = vld [vmem:[%s1 + $0x8] sm:$0xff]
  %v52 = vld [vmem:[%s1 + $0x10] sm:$0xff]
  %v53 = vld [vmem:[%s1 + $0x18] sm:$0xff]
  %v54 = vld [vmem:[%s1 + $0x20] sm:$0xff]
  %v55 = vld [vmem:[%s1 + $0x28] sm:$0xff]
  %v56 = vld [vmem:[%s1 + $0x30] sm:$0xff]
  %v57 = vld [vmem:[%s1 + $0x38] sm:$0xff]
  %vm58 = vcmask 523264
  %v60 = vsel %vm58, %v38, 0
  %v63 = vsel %vm58, %v39, 0
  %v66 = vsel %vm58, %v40, 0
  %v69 = vsel %vm58, %v41, 0
  %71 = vmatprep.subr.mxu0 0.0
  %72 = vmatpush1.msra.mxu0 %v50
  %73 = vmatprep.subr.mxu0 0.0
  %74 = vmatpush1.msra.mxu0 %v51
  %75 = vmatprep.subr.mxu0 0.0
  %76 = vmatpush1.msra.mxu0 %v52
  %77 = vmatprep.subr.mxu0 0.0
  %78 = vmatpush1.msra.mxu0 %v53
  %79 = vmatprep.subr.mxu0 0.0
  %80 = vmatpush1.msra.mxu0 %v54
  %81 = vmatprep.subr.mxu0 0.0
  %82 = vmatpush1.msra.mxu0 %v55
  %83 = vmatprep.subr.mxu0 0.0
  %84 = vmatpush1.msra.mxu0 %v56
  %85 = vmatprep.subr.mxu0 0.0
  %86 = vmatpush1.msra.mxu0 %v57
  %87 = vmatprep.subr.mxu0 0.0
  %88 = vmatpush1.msra.mxu0 0.0
  %89 = vmatprep.subr.mxu0 0.0
  %90 = vmatpush1.msra.mxu0 0.0
  %91 = vmatprep.subr.mxu0 0.0
  %92 = vmatpush1.msra.mxu0 0.0
  %93 = vmatprep.subr.mxu0 0.0
  %94 = vmatpush1.msra.mxu0 0.0
  %95 = vmatprep.subr.mxu0 0.0
  %96 = vmatpush1.msra.mxu0 0.0
  %97 = vmatprep.subr.mxu0 0.0
  %98 = vmatpush1.msra.mxu0 0.0
  %99 = vmatprep.subr.mxu0 0.0
  %100 = vmatpush1.msra.mxu0 0.0
  %101 = vmatprep.subr.mxu0 0.0
  %102 = vmatpush1.msra.mxu0 0.0
  %103 = vmatprep.subr.mxu0 0.0
  %104 = vmatpush1.msra.mxu0 0.0
  %105 = vmatprep.subr.mxu0 0.0
  %106 = vmatpush1.msra.mxu0 0.0
  %107 = vmatprep.subr.mxu0 0.0
  %108 = vmatpush1.msra.mxu0 0.0
  %109 = vmatprep.subr.mxu0 0.0
  %110 = vmatpush1.msra.mxu0 0.0
  %111 = vmatprep.subr.mxu0 0.0
  %112 = vmatpush1.msra.mxu0 0.0
  %113 = vmatprep.subr.mxu0 0.0
  %114 = vmatpush1.msra.mxu0 0.0
  %115 = vmatprep.subr.mxu0 0.0
  %116 = vmatpush1.msra.mxu0 0.0
  %117 = vmatprep.subr.mxu0 0.0
  %118 = vmatpush1.msra.mxu0 0.0
  %119 = vmatprep.subr.mxu0 0.0
  %120 = vmatpush1.msra.mxu0 0.0
  %121 = vmatprep.subr.mxu0 0.0
  %122 = vmatpush1.msra.mxu0 0.0
  %123 = vmatprep.subr.mxu0 0.0
  %124 = vmatpush1.msra.mxu0 0.0
  %125 = vmatprep.subr.mxu0 0.0
  %126 = vmatpush1.msra.mxu0 0.0
  %127 = vmatprep.subr.mxu0 0.0
  %128 = vmatpush1.msra.mxu0 0.0
  %129 = vmatprep.subr.mxu0 0.0
  %130 = vmatpush1.msra.mxu0 0.0
  %131 = vmatprep.subr.mxu0 0.0
  %132 = vmatpush1.msra.mxu0 0.0
  %133 = vmatprep.subr.mxu0 0.0
  %134 = vmatpush1.msra.mxu0 0.0
  %135 = vmatprep.mubr.f32.mxu0 0.0
  %136 = vmatmul.mubr.f32.gmra.mrb[0].mxu0 %v60
  %v137 = vpop.f32.mrb[0].mxu0
  %v138 = vadd.f32 0.0, %v137
  %v139 = vpop.f32.mrb[0].mxu0
  %140 = vmatprep.mubr.f32.mxu0 0.0
  %141 = vmatmul.mubr.f32.gmra.mrb[0].mxu0 %v63
  %v142 = vpop.f32.mrb[0].mxu0
  %v143 = vadd.f32 0.0, %v142
  %v144 = vpop.f32.mrb[0].mxu0
  %145 = vmatprep.mubr.f32.mxu0 0.0
  %146 = vmatmul.mubr.f32.gmra.mrb[0].mxu0 %v66
  %v147 = vpop.f32.mrb[0].mxu0
  %v148 = vadd.f32 0.0, %v147
  %v149 = vpop.f32.mrb[0].mxu0
  %150 = vmatprep.mubr.f32.mxu0 0.0
  %151 = vmatmul.mubr.f32.gmra.mrb[0].mxu0 %v69
  %v152 = vpop.f32.mrb[0].mxu0
  %v153 = vadd.f32 0.0, %v152
  %v154 = vpop.f32.mrb[0].mxu0
  %155 = vdwg.mxu0
  %v156 = vld [vmem:[%s2] sm:$0xff]
  %v157 = vld [vmem:[%s2 + $0x8] sm:$0xff]
  %v158 = vld [vmem:[%s2 + $0x10] sm:$0xff]
  %v159 = vld [vmem:[%s2 + $0x18] sm:$0xff]
  %v160 = vld [vmem:[%s2 + $0x20] sm:$0xff]
  %v161 = vld [vmem:[%s2 + $0x28] sm:$0xff]
  %v162 = vld [vmem:[%s2 + $0x30] sm:$0xff]
  %v163 = vld [vmem:[%s2 + $0x38] sm:$0xff]
  %v164 = vld [vmem:[%s3] sm:$0xff]
  %v165 = vld [vmem:[%s3 + $0x8] sm:$0xff]
  %v166 = vld [vmem:[%s3 + $0x10] sm:$0xff]
  %v167 = vld [vmem:[%s3 + $0x18] sm:$0xff]
  %v168 = vld [vmem:[%s3 + $0x20] sm:$0xff]
  %v169 = vld [vmem:[%s3 + $0x28] sm:$0xff]
  %v170 = vld [vmem:[%s3 + $0x30] sm:$0xff]
  %v171 = vld [vmem:[%s3 + $0x38] sm:$0xff]
  %172 = vmatprep.subr.mxu0 0.0
  %173 = vmatpush1.msra.mxu0 %v164
  %174 = vmatprep.subr.mxu0 0.0
  %175 = vmatpush1.msra.mxu0 %v165
  %176 = vmatprep.subr.mxu0 0.0
  %177 = vmatpush1.msra.mxu0 %v166
  %178 = vmatprep.subr.mxu0 0.0
  %179 = vmatpush1.msra.mxu0 %v167
  %180 = vmatprep.subr.mxu0 0.0
  %181 = vmatpush1.msra.mxu0 %v168
  %182 = vmatprep.subr.mxu0 0.0
  %183 = vmatpush1.msra.mxu0 %v169
  %184 = vmatprep.subr.mxu0 0.0
  %185 = vmatpush1.msra.mxu0 %v170
  %186 = vmatprep.subr.mxu0 0.0
  %187 = vmatpush1.msra.mxu0 %v171
  %188 = vmatprep.subr.mxu0 0.0
  %189 = vmatpush1.msra.mxu0 0.0
  %190 = vmatprep.subr.mxu0 0.0
  %191 = vmatpush1.msra.mxu0 0.0
  %192 = vmatprep.subr.mxu0 0.0
  %193 = vmatpush1.msra.mxu0 0.0
  %194 = vmatprep.subr.mxu0 0.0
  %195 = vmatpush1.msra.mxu0 0.0
  %196 = vmatprep.subr.mxu0 0.0
  %197 = vmatpush1.msra.mxu0 0.0
  %198 = vmatprep.subr.mxu0 0.0
  %199 = vmatpush1.msra.mxu0 0.0
  %200 = vmatprep.subr.mxu0 0.0
  %201 = vmatpush1.msra.mxu0 0.0
  %202 = vmatprep.subr.mxu0 0.0
  %203 = vmatpush1.msra.mxu0 0.0
  %204 = vmatprep.subr.mxu0 0.0
  %205 = vmatpush1.msra.mxu0 0.0
  %206 = vmatprep.subr.mxu0 0.0
  %207 = vmatpush1.msra.mxu0 0.0
  %208 = vmatprep.subr.mxu0 0.0
  %209 = vmatpush1.msra.mxu0 0.0
  %210 = vmatprep.subr.mxu0 0.0
  %211 = vmatpush1.msra.mxu0 0.0
  %212 = vmatprep.subr.mxu0 0.0
  %213 = vmatpush1.msra.mxu0 0.0
  %214 = vmatprep.subr.mxu0 0.0
  %215 = vmatpush1.msra.mxu0 0.0
  %216 = vmatprep.subr.mxu0 0.0
  %217 = vmatpush1.msra.mxu0 0.0
  %218 = vmatprep.subr.mxu0 0.0
  %219 = vmatpush1.msra.mxu0 0.0
  %220 = vmatprep.subr.mxu0 0.0
  %221 = vmatpush1.msra.mxu0 0.0
  %222 = vmatprep.subr.mxu0 0.0
  %223 = vmatpush1.msra.mxu0 0.0
  %224 = vmatprep.subr.mxu0 0.0
  %225 = vmatpush1.msra.mxu0 0.0
  %226 = vmatprep.subr.mxu0 0.0
  %227 = vmatpush1.msra.mxu0 0.0
  %228 = vmatprep.subr.mxu0 0.0
  %229 = vmatpush1.msra.mxu0 0.0
  %230 = vmatprep.subr.mxu0 0.0
  %231 = vmatpush1.msra.mxu0 0.0
  %232 = vmatprep.subr.mxu0 0.0
  %233 = vmatpush1.msra.mxu0 0.0
  %234 = vmatprep.subr.mxu0 0.0
  %235 = vmatpush1.msra.mxu0 0.0
  %236 = vmatprep.mubr.f32.mxu0 0.0
  %237 = vmatmul.mubr.f32.gmra.mrb[0].mxu0 %v60
  %v238 = vpop.f32.mrb[0].mxu0
  %v239 = vadd.f32 0.0, %v238
  %v240 = vpop.f32.mrb[0].mxu0
  %241 = vmatprep.mubr.f32.mxu0 0.0
  %242 = vmatmul.mubr.f32.gmra.mrb[0].mxu0 %v63
  %v243 = vpop.f32.mrb[0].mxu0
  %v244 = vadd.f32 0.0, %v243
  %v245 = vpop.f32.mrb[0].mxu0
  %246 = vmatprep.mubr.f32.mxu0 0.0
  %247 = vmatmul.mubr.f32.gmra.mrb[0].mxu0 %v66
  %v248 = vpop.f32.mrb[0].mxu0
  %v249 = vadd.f32 0.0, %v248
  %v250 = vpop.f32.mrb[0].mxu0
  %251 = vmatprep.mubr.f32.mxu0 0.0
  %252 = vmatmul.mubr.f32.gmra.mrb[0].mxu0 %v69
  %v253 = vpop.f32.mrb[0].mxu0
  %v254 = vadd.f32 0.0, %v253
  %v255 = vpop.f32.mrb[0].mxu0
  %256 = vdwg.mxu0
  %vm257 = vcmask 261120
  %v259 = vsel %vm257, %v42, 0
  %v262 = vsel %vm257, %v43, 0
  %v265 = vsel %vm257, %v44, 0
  %v268 = vsel %vm257, %v45, 0
  %270 = vmatprep.subr.mxu0 0.0
  %271 = vmatpush1.msra.mxu0 %v138
  %272 = vmatprep.subr.mxu0 0.0
  %273 = vmatpush1.msra.mxu0 %v143
  %274 = vmatprep.subr.mxu0 0.0
  %275 = vmatpush1.msra.mxu0 %v148
  %276 = vmatprep.subr.mxu0 0.0
  %277 = vmatpush1.msra.mxu0 %v153
  %278 = vmatprep.subr.mxu0 0.0
  %279 = vmatpush1.msra.mxu0 0.0
  %280 = vmatprep.subr.mxu0 0.0
  %281 = vmatpush1.msra.mxu0 0.0
  %282 = vmatprep.subr.mxu0 0.0
  %283 = vmatpush1.msra.mxu0 0.0
  %284 = vmatprep.subr.mxu0 0.0
  %285 = vmatpush1.msra.mxu0 0.0
  %286 = vmatprep.subr.mxu0 0.0
  %287 = vmatpush1.msra.mxu0 0.0
  %288 = vmatprep.subr.mxu0 0.0
  %289 = vmatpush1.msra.mxu0 0.0
  %290 = vmatprep.subr.mxu0 0.0
  %291 = vmatpush1.msra.mxu0 0.0
  %292 = vmatprep.subr.mxu0 0.0
  %293 = vmatpush1.msra.mxu0 0.0
  %294 = vmatprep.subr.mxu0 0.0
  %295 = vmatpush1.msra.mxu0 0.0
  %296 = vmatprep.subr.mxu0 0.0
  %297 = vmatpush1.msra.mxu0 0.0
  %298 = vmatprep.subr.mxu0 0.0
  %299 = vmatpush1.msra.mxu0 0.0
  %300 = vmatprep.subr.mxu0 0.0
  %301 = vmatpush1.msra.mxu0 0.0
  %302 = vmatprep.subr.mxu0 0.0
  %303 = vmatpush1.msra.mxu0 0.0
  %304 = vmatprep.subr.mxu0 0.0
  %305 = vmatpush1.msra.mxu0 0.0
  %306 = vmatprep.subr.mxu0 0.0
  %307 = vmatpush1.msra.mxu0 0.0
  %308 = vmatprep.subr.mxu0 0.0
  %309 = vmatpush1.msra.mxu0 0.0
  %310 = vmatprep.subr.mxu0 0.0
  %311 = vmatpush1.msra.mxu0 0.0
  %312 = vmatprep.subr.mxu0 0.0
  %313 = vmatpush1.msra.mxu0 0.0
  %314 = vmatprep.subr.mxu0 0.0
  %315 = vmatpush1.msra.mxu0 0.0
  %316 = vmatprep.subr.mxu0 0.0
  %317 = vmatpush1.msra.mxu0 0.0
  %318 = vmatprep.subr.mxu0 0.0
  %319 = vmatpush1.msra.mxu0 0.0
  %320 = vmatprep.subr.mxu0 0.0
  %321 = vmatpush1.msra.mxu0 0.0
  %322 = vmatprep.subr.mxu0 0.0
  %323 = vmatpush1.msra.mxu0 0.0
  %324 = vmatprep.subr.mxu0 0.0
  %325 = vmatpush1.msra.mxu0 0.0
  %326 = vmatprep.subr.mxu0 0.0
  %327 = vmatpush1.msra.mxu0 0.0
  %328 = vmatprep.subr.mxu0 0.0
  %329 = vmatpush1.msra.mxu0 0.0
  %330 = vmatprep.subr.mxu0 0.0
  %331 = vmatpush1.msra.mxu0 0.0
  %332 = vmatprep.subr.mxu0 0.0
  %333 = vmatpush1.msra.mxu0 0.0
  %334 = vmatprep.mubr.f32.mxu0 0.0
  %335 = vmatmul.mubr.f32.gmra.mrb[0].mxu0 %v259
  %v336 = vpop.f32.mrb[0].mxu0
  %v337 = vadd.f32 0.0, %v336
  %v338 = vpop.f32.mrb[0].mxu0
  %339 = vmatprep.mubr.f32.mxu0 0.0
  %340 = vmatmul.mubr.f32.gmra.mrb[0].mxu0 %v262
  %v341 = vpop.f32.mrb[0].mxu0
  %v342 = vadd.f32 0.0, %v341
  %v343 = vpop.f32.mrb[0].mxu0
  %344 = vmatprep.mubr.f32.mxu0 0.0
  %345 = vmatmul.mubr.f32.gmra.mrb[0].mxu0 %v265
  %v346 = vpop.f32.mrb[0].mxu0
  %v347 = vadd.f32 0.0, %v346
  %v348 = vpop.f32.mrb[0].mxu0
  %349 = vmatprep.mubr.f32.mxu0 0.0
  %350 = vmatmul.mubr.f32.gmra.mrb[0].mxu0 %v268
  %v351 = vpop.f32.mrb[0].mxu0
  %v352 = vadd.f32 0.0, %v351
  %v353 = vpop.f32.mrb[0].mxu0
  %354 = vdwg.mxu0
  %355 = vmatprep.subr.mxu0 0.0
  %356 = vmatpush1.msra.mxu0 %v156
  %357 = vmatprep.subr.mxu0 0.0
  %358 = vmatpush1.msra.mxu0 %v157
  %359 = vmatprep.subr.mxu0 0.0
  %360 = vmatpush1.msra.mxu0 %v158
  %361 = vmatprep.subr.mxu0 0.0
  %362 = vmatpush1.msra.mxu0 %v159
  %363 = vmatprep.subr.mxu0 0.0
  %364 = vmatpush1.msra.mxu0 %v160
  %365 = vmatprep.subr.mxu0 0.0
  %366 = vmatpush1.msra.mxu0 %v161
  %367 = vmatprep.subr.mxu0 0.0
  %368 = vmatpush1.msra.mxu0 %v162
  %369 = vmatprep.subr.mxu0 0.0
  %370 = vmatpush1.msra.mxu0 %v163
  %371 = vmatprep.subr.mxu0 0.0
  %372 = vmatpush1.msra.mxu0 0.0
  %373 = vmatprep.subr.mxu0 0.0
  %374 = vmatpush1.msra.mxu0 0.0
  %375 = vmatprep.subr.mxu0 0.0
  %376 = vmatpush1.msra.mxu0 0.0
  %377 = vmatprep.subr.mxu0 0.0
  %378 = vmatpush1.msra.mxu0 0.0
  %379 = vmatprep.subr.mxu0 0.0
  %380 = vmatpush1.msra.mxu0 0.0
  %381 = vmatprep.subr.mxu0 0.0
  %382 = vmatpush1.msra.mxu0 0.0
  %383 = vmatprep.subr.mxu0 0.0
  %384 = vmatpush1.msra.mxu0 0.0
  %385 = vmatprep.subr.mxu0 0.0
  %386 = vmatpush1.msra.mxu0 0.0
  %387 = vmatprep.subr.mxu0 0.0
  %388 = vmatpush1.msra.mxu0 0.0
  %389 = vmatprep.subr.mxu0 0.0
  %390 = vmatpush1.msra.mxu0 0.0
  %391 = vmatprep.subr.mxu0 0.0
  %392 = vmatpush1.msra.mxu0 0.0
  %393 = vmatprep.subr.mxu0 0.0
  %394 = vmatpush1.msra.mxu0 0.0
  %395 = vmatprep.subr.mxu0 0.0
  %396 = vmatpush1.msra.mxu0 0.0
  %397 = vmatprep.subr.mxu0 0.0
  %398 = vmatpush1.msra.mxu0 0.0
  %399 = vmatprep.subr.mxu0 0.0
  %400 = vmatpush1.msra.mxu0 0.0
  %401 = vmatprep.subr.mxu0 0.0
  %402 = vmatpush1.msra.mxu0 0.0
  %403 = vmatprep.subr.mxu0 0.0
  %404 = vmatpush1.msra.mxu0 0.0
  %405 = vmatprep.subr.mxu0 0.0
  %406 = vmatpush1.msra.mxu0 0.0
  %407 = vmatprep.subr.mxu0 0.0
  %408 = vmatpush1.msra.mxu0 0.0
  %409 = vmatprep.subr.mxu0 0.0
  %410 = vmatpush1.msra.mxu0 0.0
  %411 = vmatprep.subr.mxu0 0.0
  %412 = vmatpush1.msra.mxu0 0.0
  %413 = vmatprep.subr.mxu0 0.0
  %414 = vmatpush1.msra.mxu0 0.0
  %415 = vmatprep.subr.mxu0 0.0
  %416 = vmatpush1.msra.mxu0 0.0
  %417 = vmatprep.subr.mxu0 0.0
  %418 = vmatpush1.msra.mxu0 0.0
  %419 = vmatprep.mubr.f32.mxu0 0.0
  %420 = vmatmul.mubr.f32.gmra.mrb[0].mxu0 %v60
  %v421 = vpop.f32.mrb[0].mxu0
  %v422 = vadd.f32 %v337, %v421
  %v423 = vpop.f32.mrb[0].mxu0
  %424 = vmatprep.mubr.f32.mxu0 0.0
  %425 = vmatmul.mubr.f32.gmra.mrb[0].mxu0 %v63
  %v426 = vpop.f32.mrb[0].mxu0
  %v427 = vadd.f32 %v342, %v426
  %v428 = vpop.f32.mrb[0].mxu0
  %429 = vmatprep.mubr.f32.mxu0 0.0
  %430 = vmatmul.mubr.f32.gmra.mrb[0].mxu0 %v66
  %v431 = vpop.f32.mrb[0].mxu0
  %v432 = vadd.f32 %v347, %v431
  %v433 = vpop.f32.mrb[0].mxu0
  %434 = vmatprep.mubr.f32.mxu0 0.0
  %435 = vmatmul.mubr.f32.gmra.mrb[0].mxu0 %v69
  %v436 = vpop.f32.mrb[0].mxu0
  %v437 = vadd.f32 %v352, %v436
  %v438 = vpop.f32.mrb[0].mxu0
  %439 = vdwg.mxu0
  %v441 = vsel %vm257, %v46, 0
  %v444 = vsel %vm257, %v47, 0
  %v447 = vsel %vm257, %v48, 0
  %v450 = vsel %vm257, %v49, 0
  %452 = vmatprep.subr.mxu0 0.0
  %453 = vmatpush1.msra.mxu0 %v239
  %454 = vmatprep.subr.mxu0 0.0
  %455 = vmatpush1.msra.mxu0 %v244
  %456 = vmatprep.subr.mxu0 0.0
  %457 = vmatpush1.msra.mxu0 %v249
  %458 = vmatprep.subr.mxu0 0.0
  %459 = vmatpush1.msra.mxu0 %v254
  %460 = vmatprep.subr.mxu0 0.0
  %461 = vmatpush1.msra.mxu0 0.0
  %462 = vmatprep.subr.mxu0 0.0
  %463 = vmatpush1.msra.mxu0 0.0
  %464 = vmatprep.subr.mxu0 0.0
  %465 = vmatpush1.msra.mxu0 0.0
  %466 = vmatprep.subr.mxu0 0.0
  %467 = vmatpush1.msra.mxu0 0.0
  %468 = vmatprep.subr.mxu0 0.0
  %469 = vmatpush1.msra.mxu0 0.0
  %470 = vmatprep.subr.mxu0 0.0
  %471 = vmatpush1.msra.mxu0 0.0
  %472 = vmatprep.subr.mxu0 0.0
  %473 = vmatpush1.msra.mxu0 0.0
  %474 = vmatprep.subr.mxu0 0.0
  %475 = vmatpush1.msra.mxu0 0.0
  %476 = vmatprep.subr.mxu0 0.0
  %477 = vmatpush1.msra.mxu0 0.0
  %478 = vmatprep.subr.mxu0 0.0
  %479 = vmatpush1.msra.mxu0 0.0
  %480 = vmatprep.subr.mxu0 0.0
  %481 = vmatpush1.msra.mxu0 0.0
  %482 = vmatprep.subr.mxu0 0.0
  %483 = vmatpush1.msra.mxu0 0.0
  %484 = vmatprep.subr.mxu0 0.0
  %485 = vmatpush1.msra.mxu0 0.0
  %486 = vmatprep.subr.mxu0 0.0
  %487 = vmatpush1.msra.mxu0 0.0
  %488 = vmatprep.subr.mxu0 0.0
  %489 = vmatpush1.msra.mxu0 0.0
  %490 = vmatprep.subr.mxu0 0.0
  %491 = vmatpush1.msra.mxu0 0.0
  %492 = vmatprep.subr.mxu0 0.0
  %493 = vmatpush1.msra.mxu0 0.0
  %494 = vmatprep.subr.mxu0 0.0
  %495 = vmatpush1.msra.mxu0 0.0
  %496 = vmatprep.subr.mxu0 0.0
  %497 = vmatpush1.msra.mxu0 0.0
  %498 = vmatprep.subr.mxu0 0.0
  %499 = vmatpush1.msra.mxu0 0.0
  %500 = vmatprep.subr.mxu0 0.0
  %501 = vmatpush1.msra.mxu0 0.0
  %502 = vmatprep.subr.mxu0 0.0
  %503 = vmatpush1.msra.mxu0 0.0
  %504 = vmatprep.subr.mxu0 0.0
  %505 = vmatpush1.msra.mxu0 0.0
  %506 = vmatprep.subr.mxu0 0.0
  %507 = vmatpush1.msra.mxu0 0.0
  %508 = vmatprep.subr.mxu0 0.0
  %509 = vmatpush1.msra.mxu0 0.0
  %510 = vmatprep.subr.mxu0 0.0
  %511 = vmatpush1.msra.mxu0 0.0
  %512 = vmatprep.subr.mxu0 0.0
  %513 = vmatpush1.msra.mxu0 0.0
  %514 = vmatprep.subr.mxu0 0.0
  %515 = vmatpush1.msra.mxu0 0.0
  %516 = vmatprep.mubr.f32.mxu0 0.0
  %517 = vmatmul.mubr.f32.gmra.mrb[0].mxu0 %v441
  %v518 = vpop.f32.mrb[0].mxu0
  %v519 = vadd.f32 0.0, %v518
  %v520 = vpop.f32.mrb[0].mxu0
  %521 = vmatprep.mubr.f32.mxu0 0.0
  %522 = vmatmul.mubr.f32.gmra.mrb[0].mxu0 %v444
  %v523 = vpop.f32.mrb[0].mxu0
  %v524 = vadd.f32 0.0, %v523
  %v525 = vpop.f32.mrb[0].mxu0
  %526 = vmatprep.mubr.f32.mxu0 0.0
  %527 = vmatmul.mubr.f32.gmra.mrb[0].mxu0 %v447
  %v528 = vpop.f32.mrb[0].mxu0
  %v529 = vadd.f32 0.0, %v528
  %v530 = vpop.f32.mrb[0].mxu0
  %531 = vmatprep.mubr.f32.mxu0 0.0
  %532 = vmatmul.mubr.f32.gmra.mrb[0].mxu0 %v450
  %v533 = vpop.f32.mrb[0].mxu0
  %v534 = vadd.f32 0.0, %v533
  %v535 = vpop.f32.mrb[0].mxu0
  %536 = vdwg.mxu0
  %v537 = vadd.f32 %v422, %v519
  %v538 = vadd.f32 %v427, %v524
  %v539 = vadd.f32 %v432, %v529
  %v540 = vadd.f32 %v437, %v534
  %v541 = vld [vmem:[%s4] sm:$0x1]
  %v543 = vlaneseq
  %v544 = vshrl.u32 %v543, 7
  %v545 = vsub.s32 0, %v544
  %v546 = vrot.slane %v541, %v545
  %v548 = vadd.f32 %v537, %v546
  %v549 = vadd.f32 %v538, %v546
  %v550 = vadd.f32 %v539, %v546
  %v551 = vadd.f32 %v540, %v546
  %v552 = vmax.f32 %v548, 0.0
  %v553 = vmax.f32 %v549, 0.0
  %v554 = vmax.f32 %v550, 0.0
  %v555 = vmax.f32 %v551, 0.0
  %v556 = vld [vmem:[%s5] sm:$0xff]
  %v557 = vld [vmem:[%s5 + $0x8] sm:$0xff]
  %v558 = vld [vmem:[%s5 + $0x10] sm:$0xff]
  %v559 = vld [vmem:[%s5 + $0x18] sm:$0xff]
  %v560 = vld [vmem:[%s5 + $0x20] sm:$0xff]
  %v561 = vld [vmem:[%s5 + $0x28] sm:$0xff]
  %v562 = vld [vmem:[%s5 + $0x30] sm:$0xff]
  %v563 = vld [vmem:[%s5 + $0x38] sm:$0xff]
  %v565 = vsel %vm58, %v552, 0
  %v568 = vsel %vm58, %v553, 0
  %v571 = vsel %vm58, %v554, 0
  %v574 = vsel %vm58, %v555, 0
  %576 = vmatprep.subr.mxu0 0.0
  %577 = vmatpush1.msra.mxu0 %v556
  %578 = vmatprep.subr.mxu0 0.0
  %579 = vmatpush1.msra.mxu0 %v557
  %580 = vmatprep.subr.mxu0 0.0
  %581 = vmatpush1.msra.mxu0 %v558
  %582 = vmatprep.subr.mxu0 0.0
  %583 = vmatpush1.msra.mxu0 %v559
  %584 = vmatprep.subr.mxu0 0.0
  %585 = vmatpush1.msra.mxu0 %v560
  %586 = vmatprep.subr.mxu0 0.0
  %587 = vmatpush1.msra.mxu0 %v561
  %588 = vmatprep.subr.mxu0 0.0
  %589 = vmatpush1.msra.mxu0 %v562
  %590 = vmatprep.subr.mxu0 0.0
  %591 = vmatpush1.msra.mxu0 %v563
  %592 = vmatprep.subr.mxu0 0.0
  %593 = vmatpush1.msra.mxu0 0.0
  %594 = vmatprep.subr.mxu0 0.0
  %595 = vmatpush1.msra.mxu0 0.0
  %596 = vmatprep.subr.mxu0 0.0
  %597 = vmatpush1.msra.mxu0 0.0
  %598 = vmatprep.subr.mxu0 0.0
  %599 = vmatpush1.msra.mxu0 0.0
  %600 = vmatprep.subr.mxu0 0.0
  %601 = vmatpush1.msra.mxu0 0.0
  %602 = vmatprep.subr.mxu0 0.0
  %603 = vmatpush1.msra.mxu0 0.0
  %604 = vmatprep.subr.mxu0 0.0
  %605 = vmatpush1.msra.mxu0 0.0
  %606 = vmatprep.subr.mxu0 0.0
  %607 = vmatpush1.msra.mxu0 0.0
  %608 = vmatprep.subr.mxu0 0.0
  %609 = vmatpush1.msra.mxu0 0.0
  %610 = vmatprep.subr.mxu0 0.0
  %611 = vmatpush1.msra.mxu0 0.0
  %612 = vmatprep.subr.mxu0 0.0
  %613 = vmatpush1.msra.mxu0 0.0
  %614 = vmatprep.subr.mxu0 0.0
  %615 = vmatpush1.msra.mxu0 0.0
  %616 = vmatprep.subr.mxu0 0.0
  %617 = vmatpush1.msra.mxu0 0.0
  %618 = vmatprep.subr.mxu0 0.0
  %619 = vmatpush1.msra.mxu0 0.0
  %620 = vmatprep.subr.mxu0 0.0
  %621 = vmatpush1.msra.mxu0 0.0
  %622 = vmatprep.subr.mxu0 0.0
  %623 = vmatpush1.msra.mxu0 0.0
  %624 = vmatprep.subr.mxu0 0.0
  %625 = vmatpush1.msra.mxu0 0.0
  %626 = vmatprep.subr.mxu0 0.0
  %627 = vmatpush1.msra.mxu0 0.0
  %628 = vmatprep.subr.mxu0 0.0
  %629 = vmatpush1.msra.mxu0 0.0
  %630 = vmatprep.subr.mxu0 0.0
  %631 = vmatpush1.msra.mxu0 0.0
  %632 = vmatprep.subr.mxu0 0.0
  %633 = vmatpush1.msra.mxu0 0.0
  %634 = vmatprep.subr.mxu0 0.0
  %635 = vmatpush1.msra.mxu0 0.0
  %636 = vmatprep.subr.mxu0 0.0
  %637 = vmatpush1.msra.mxu0 0.0
  %638 = vmatprep.subr.mxu0 0.0
  %639 = vmatpush1.msra.mxu0 0.0
  %640 = vmatprep.mubr.f32.mxu0 0.0
  %641 = vmatmul.mubr.f32.gmra.mrb[0].mxu0 %v565
  %v642 = vpop.f32.mrb[0].mxu0
  %v643 = vadd.f32 0.0, %v642
  %v644 = vpop.f32.mrb[0].mxu0
  %645 = vmatprep.mubr.f32.mxu0 0.0
  %646 = vmatmul.mubr.f32.gmra.mrb[0].mxu0 %v568
  %v647 = vpop.f32.mrb[0].mxu0
  %v648 = vadd.f32 0.0, %v647
  %v649 = vpop.f32.mrb[0].mxu0
  %650 = vmatprep.mubr.f32.mxu0 0.0
  %651 = vmatmul.mubr.f32.gmra.mrb[0].mxu0 %v571
  %v652 = vpop.f32.mrb[0].mxu0
  %v653 = vadd.f32 0.0, %v652
  %v654 = vpop.f32.mrb[0].mxu0
  %655 = vmatprep.mubr.f32.mxu0 0.0
  %656 = vmatmul.mubr.f32.gmra.mrb[0].mxu0 %v574
  %v657 = vpop.f32.mrb[0].mxu0
  %v658 = vadd.f32 0.0, %v657
  %v659 = vpop.f32.mrb[0].mxu0
  %660 = vdwg.mxu0
  %v661 = vld [vmem:[%s6] sm:$0xff]
  %v662 = vld [vmem:[%s6 + $0x8] sm:$0xff]
  %v663 = vld [vmem:[%s6 + $0x10] sm:$0xff]
  %v664 = vld [vmem:[%s6 + $0x18] sm:$0xff]
  %v665 = vld [vmem:[%s6 + $0x20] sm:$0xff]
  %v666 = vld [vmem:[%s6 + $0x28] sm:$0xff]
  %v667 = vld [vmem:[%s6 + $0x30] sm:$0xff]
  %v668 = vld [vmem:[%s6 + $0x38] sm:$0xff]
  %v669 = vld [vmem:[%s7] sm:$0xff]
  %v670 = vld [vmem:[%s7 + $0x8] sm:$0xff]
  %v671 = vld [vmem:[%s7 + $0x10] sm:$0xff]
  %v672 = vld [vmem:[%s7 + $0x18] sm:$0xff]
  %v673 = vld [vmem:[%s7 + $0x20] sm:$0xff]
  %v674 = vld [vmem:[%s7 + $0x28] sm:$0xff]
  %v675 = vld [vmem:[%s7 + $0x30] sm:$0xff]
  %v676 = vld [vmem:[%s7 + $0x38] sm:$0xff]
  %677 = vmatprep.subr.mxu0 0.0
  %678 = vmatpush1.msra.mxu0 %v669
  %679 = vmatprep.subr.mxu0 0.0
  %680 = vmatpush1.msra.mxu0 %v670
  %681 = vmatprep.subr.mxu0 0.0
  %682 = vmatpush1.msra.mxu0 %v671
  %683 = vmatprep.subr.mxu0 0.0
  %684 = vmatpush1.msra.mxu0 %v672
  %685 = vmatprep.subr.mxu0 0.0
  %686 = vmatpush1.msra.mxu0 %v673
  %687 = vmatprep.subr.mxu0 0.0
  %688 = vmatpush1.msra.mxu0 %v674
  %689 = vmatprep.subr.mxu0 0.0
  %690 = vmatpush1.msra.mxu0 %v675
  %691 = vmatprep.subr.mxu0 0.0
  %692 = vmatpush1.msra.mxu0 %v676
  %693 = vmatprep.subr.mxu0 0.0
  %694 = vmatpush1.msra.mxu0 0.0
  %695 = vmatprep.subr.mxu0 0.0
  %696 = vmatpush1.msra.mxu0 0.0
  %697 = vmatprep.subr.mxu0 0.0
  %698 = vmatpush1.msra.mxu0 0.0
  %699 = vmatprep.subr.mxu0 0.0
  %700 = vmatpush1.msra.mxu0 0.0
  %701 = vmatprep.subr.mxu0 0.0
  %702 = vmatpush1.msra.mxu0 0.0
  %703 = vmatprep.subr.mxu0 0.0
  %704 = vmatpush1.msra.mxu0 0.0
  %705 = vmatprep.subr.mxu0 0.0
  %706 = vmatpush1.msra.mxu0 0.0
  %707 = vmatprep.subr.mxu0 0.0
  %708 = vmatpush1.msra.mxu0 0.0
  %709 = vmatprep.subr.mxu0 0.0
  %710 = vmatpush1.msra.mxu0 0.0
  %711 = vmatprep.subr.mxu0 0.0
  %712 = vmatpush1.msra.mxu0 0.0
  %713 = vmatprep.subr.mxu0 0.0
  %714 = vmatpush1.msra.mxu0 0.0
  %715 = vmatprep.subr.mxu0 0.0
  %716 = vmatpush1.msra.mxu0 0.0
  %717 = vmatprep.subr.mxu0 0.0
  %718 = vmatpush1.msra.mxu0 0.0
  %719 = vmatprep.subr.mxu0 0.0
  %720 = vmatpush1.msra.mxu0 0.0
  %721 = vmatprep.subr.mxu0 0.0
  %722 = vmatpush1.msra.mxu0 0.0
  %723 = vmatprep.subr.mxu0 0.0
  %724 = vmatpush1.msra.mxu0 0.0
  %725 = vmatprep.subr.mxu0 0.0
  %726 = vmatpush1.msra.mxu0 0.0
  %727 = vmatprep.subr.mxu0 0.0
  %728 = vmatpush1.msra.mxu0 0.0
  %729 = vmatprep.subr.mxu0 0.0
  %730 = vmatpush1.msra.mxu0 0.0
  %731 = vmatprep.subr.mxu0 0.0
  %732 = vmatpush1.msra.mxu0 0.0
  %733 = vmatprep.subr.mxu0 0.0
  %734 = vmatpush1.msra.mxu0 0.0
  %735 = vmatprep.subr.mxu0 0.0
  %736 = vmatpush1.msra.mxu0 0.0
  %737 = vmatprep.subr.mxu0 0.0
  %738 = vmatpush1.msra.mxu0 0.0
  %739 = vmatprep.subr.mxu0 0.0
  %740 = vmatpush1.msra.mxu0 0.0
  %741 = vmatprep.mubr.f32.mxu0 0.0
  %742 = vmatmul.mubr.f32.gmra.mrb[0].mxu0 %v565
  %v743 = vpop.f32.mrb[0].mxu0
  %v744 = vadd.f32 0.0, %v743
  %v745 = vpop.f32.mrb[0].mxu0
  %746 = vmatprep.mubr.f32.mxu0 0.0
  %747 = vmatmul.mubr.f32.gmra.mrb[0].mxu0 %v568
  %v748 = vpop.f32.mrb[0].mxu0
  %v749 = vadd.f32 0.0, %v748
  %v750 = vpop.f32.mrb[0].mxu0
  %751 = vmatprep.mubr.f32.mxu0 0.0
  %752 = vmatmul.mubr.f32.gmra.mrb[0].mxu0 %v571
  %v753 = vpop.f32.mrb[0].mxu0
  %v754 = vadd.f32 0.0, %v753
  %v755 = vpop.f32.mrb[0].mxu0
  %756 = vmatprep.mubr.f32.mxu0 0.0
  %757 = vmatmul.mubr.f32.gmra.mrb[0].mxu0 %v574
  %v758 = vpop.f32.mrb[0].mxu0
  %v759 = vadd.f32 0.0, %v758
  %v760 = vpop.f32.mrb[0].mxu0
  %761 = vdwg.mxu0
  %762 = vmatprep.subr.mxu0 0.0
  %763 = vmatpush1.msra.mxu0 %v643
  %764 = vmatprep.subr.mxu0 0.0
  %765 = vmatpush1.msra.mxu0 %v648
  %766 = vmatprep.subr.mxu0 0.0
  %767 = vmatpush1.msra.mxu0 %v653
  %768 = vmatprep.subr.mxu0 0.0
  %769 = vmatpush1.msra.mxu0 %v658
  %770 = vmatprep.subr.mxu0 0.0
  %771 = vmatpush1.msra.mxu0 0.0
  %772 = vmatprep.subr.mxu0 0.0
  %773 = vmatpush1.msra.mxu0 0.0
  %774 = vmatprep.subr.mxu0 0.0
  %775 = vmatpush1.msra.mxu0 0.0
  %776 = vmatprep.subr.mxu0 0.0
  %777 = vmatpush1.msra.mxu0 0.0
  %778 = vmatprep.subr.mxu0 0.0
  %779 = vmatpush1.msra.mxu0 0.0
  %780 = vmatprep.subr.mxu0 0.0
  %781 = vmatpush1.msra.mxu0 0.0
  %782 = vmatprep.subr.mxu0 0.0
  %783 = vmatpush1.msra.mxu0 0.0
  %784 = vmatprep.subr.mxu0 0.0
  %785 = vmatpush1.msra.mxu0 0.0
  %786 = vmatprep.subr.mxu0 0.0
  %787 = vmatpush1.msra.mxu0 0.0
  %788 = vmatprep.subr.mxu0 0.0
  %789 = vmatpush1.msra.mxu0 0.0
  %790 = vmatprep.subr.mxu0 0.0
  %791 = vmatpush1.msra.mxu0 0.0
  %792 = vmatprep.subr.mxu0 0.0
  %793 = vmatpush1.msra.mxu0 0.0
  %794 = vmatprep.subr.mxu0 0.0
  %795 = vmatpush1.msra.mxu0 0.0
  %796 = vmatprep.subr.mxu0 0.0
  %797 = vmatpush1.msra.mxu0 0.0
  %798 = vmatprep.subr.mxu0 0.0
  %799 = vmatpush1.msra.mxu0 0.0
  %800 = vmatprep.subr.mxu0 0.0
  %801 = vmatpush1.msra.mxu0 0.0
  %802 = vmatprep.subr.mxu0 0.0
  %803 = vmatpush1.msra.mxu0 0.0
  %804 = vmatprep.subr.mxu0 0.0
  %805 = vmatpush1.msra.mxu0 0.0
  %806 = vmatprep.subr.mxu0 0.0
  %807 = vmatpush1.msra.mxu0 0.0
  %808 = vmatprep.subr.mxu0 0.0
  %809 = vmatpush1.msra.mxu0 0.0
  %810 = vmatprep.subr.mxu0 0.0
  %811 = vmatpush1.msra.mxu0 0.0
  %812 = vmatprep.subr.mxu0 0.0
  %813 = vmatpush1.msra.mxu0 0.0
  %814 = vmatprep.subr.mxu0 0.0
  %815 = vmatpush1.msra.mxu0 0.0
  %816 = vmatprep.subr.mxu0 0.0
  %817 = vmatpush1.msra.mxu0 0.0
  %818 = vmatprep.subr.mxu0 0.0
  %819 = vmatpush1.msra.mxu0 0.0
  %820 = vmatprep.subr.mxu0 0.0
  %821 = vmatpush1.msra.mxu0 0.0
  %822 = vmatprep.subr.mxu0 0.0
  %823 = vmatpush1.msra.mxu0 0.0
  %824 = vmatprep.subr.mxu0 0.0
  %825 = vmatpush1.msra.mxu0 0.0
  %826 = vmatprep.mubr.f32.mxu0 0.0
  %827 = vmatmul.mubr.f32.gmra.mrb[0].mxu0 %v259
  %v828 = vpop.f32.mrb[0].mxu0
  %v829 = vadd.f32 0.0, %v828
  %v830 = vpop.f32.mrb[0].mxu0
  %831 = vmatprep.mubr.f32.mxu0 0.0
  %832 = vmatmul.mubr.f32.gmra.mrb[0].mxu0 %v262
  %v833 = vpop.f32.mrb[0].mxu0
  %v834 = vadd.f32 0.0, %v833
  %v835 = vpop.f32.mrb[0].mxu0
  %836 = vmatprep.mubr.f32.mxu0 0.0
  %837 = vmatmul.mubr.f32.gmra.mrb[0].mxu0 %v265
  %v838 = vpop.f32.mrb[0].mxu0
  %v839 = vadd.f32 0.0, %v838
  %v840 = vpop.f32.mrb[0].mxu0
  %841 = vmatprep.mubr.f32.mxu0 0.0
  %842 = vmatmul.mubr.f32.gmra.mrb[0].mxu0 %v268
  %v843 = vpop.f32.mrb[0].mxu0
  %v844 = vadd.f32 0.0, %v843
  %v845 = vpop.f32.mrb[0].mxu0
  %846 = vdwg.mxu0
  %847 = vmatprep.subr.mxu0 0.0
  %848 = vmatpush1.msra.mxu0 %v661
  %849 = vmatprep.subr.mxu0 0.0
  %850 = vmatpush1.msra.mxu0 %v662
  %851 = vmatprep.subr.mxu0 0.0
  %852 = vmatpush1.msra.mxu0 %v663
  %853 = vmatprep.subr.mxu0 0.0
  %854 = vmatpush1.msra.mxu0 %v664
  %855 = vmatprep.subr.mxu0 0.0
  %856 = vmatpush1.msra.mxu0 %v665
  %857 = vmatprep.subr.mxu0 0.0
  %858 = vmatpush1.msra.mxu0 %v666
  %859 = vmatprep.subr.mxu0 0.0
  %860 = vmatpush1.msra.mxu0 %v667
  %861 = vmatprep.subr.mxu0 0.0
  %862 = vmatpush1.msra.mxu0 %v668
  %863 = vmatprep.subr.mxu0 0.0
  %864 = vmatpush1.msra.mxu0 0.0
  %865 = vmatprep.subr.mxu0 0.0
  %866 = vmatpush1.msra.mxu0 0.0
  %867 = vmatprep.subr.mxu0 0.0
  %868 = vmatpush1.msra.mxu0 0.0
  %869 = vmatprep.subr.mxu0 0.0
  %870 = vmatpush1.msra.mxu0 0.0
  %871 = vmatprep.subr.mxu0 0.0
  %872 = vmatpush1.msra.mxu0 0.0
  %873 = vmatprep.subr.mxu0 0.0
  %874 = vmatpush1.msra.mxu0 0.0
  %875 = vmatprep.subr.mxu0 0.0
  %876 = vmatpush1.msra.mxu0 0.0
  %877 = vmatprep.subr.mxu0 0.0
  %878 = vmatpush1.msra.mxu0 0.0
  %879 = vmatprep.subr.mxu0 0.0
  %880 = vmatpush1.msra.mxu0 0.0
  %881 = vmatprep.subr.mxu0 0.0
  %882 = vmatpush1.msra.mxu0 0.0
  %883 = vmatprep.subr.mxu0 0.0
  %884 = vmatpush1.msra.mxu0 0.0
  %885 = vmatprep.subr.mxu0 0.0
  %886 = vmatpush1.msra.mxu0 0.0
  %887 = vmatprep.subr.mxu0 0.0
  %888 = vmatpush1.msra.mxu0 0.0
  %889 = vmatprep.subr.mxu0 0.0
  %890 = vmatpush1.msra.mxu0 0.0
  %891 = vmatprep.subr.mxu0 0.0
  %892 = vmatpush1.msra.mxu0 0.0
  %893 = vmatprep.subr.mxu0 0.0
  %894 = vmatpush1.msra.mxu0 0.0
  %895 = vmatprep.subr.mxu0 0.0
  %896 = vmatpush1.msra.mxu0 0.0
  %897 = vmatprep.subr.mxu0 0.0
  %898 = vmatpush1.msra.mxu0 0.0
  %899 = vmatprep.subr.mxu0 0.0
  %900 = vmatpush1.msra.mxu0 0.0
  %901 = vmatprep.subr.mxu0 0.0
  %902 = vmatpush1.msra.mxu0 0.0
  %903 = vmatprep.subr.mxu0 0.0
  %904 = vmatpush1.msra.mxu0 0.0
  %905 = vmatprep.subr.mxu0 0.0
  %906 = vmatpush1.msra.mxu0 0.0
  %907 = vmatprep.subr.mxu0 0.0
  %908 = vmatpush1.msra.mxu0 0.0
  %909 = vmatprep.subr.mxu0 0.0
  %910 = vmatpush1.msra.mxu0 0.0
  %911 = vmatprep.mubr.f32.mxu0 0.0
  %912 = vmatmul.mubr.f32.gmra.mrb[0].mxu0 %v565
  %v913 = vpop.f32.mrb[0].mxu0
  %v914 = vadd.f32 %v829, %v913
  %v915 = vpop.f32.mrb[0].mxu0
  %916 = vmatprep.mubr.f32.mxu0 0.0
  %917 = vmatmul.mubr.f32.gmra.mrb[0].mxu0 %v568
  %v918 = vpop.f32.mrb[0].mxu0
  %v919 = vadd.f32 %v834, %v918
  %v920 = vpop.f32.mrb[0].mxu0
  %921 = vmatprep.mubr.f32.mxu0 0.0
  %922 = vmatmul.mubr.f32.gmra.mrb[0].mxu0 %v571
  %v923 = vpop.f32.mrb[0].mxu0
  %v924 = vadd.f32 %v839, %v923
  %v925 = vpop.f32.mrb[0].mxu0
  %926 = vmatprep.mubr.f32.mxu0 0.0
  %927 = vmatmul.mubr.f32.gmra.mrb[0].mxu0 %v574
  %v928 = vpop.f32.mrb[0].mxu0
  %v929 = vadd.f32 %v844, %v928
  %v930 = vpop.f32.mrb[0].mxu0
  %931 = vdwg.mxu0
  %932 = vmatprep.subr.mxu0 0.0
  %933 = vmatpush1.msra.mxu0 %v744
  %934 = vmatprep.subr.mxu0 0.0
  %935 = vmatpush1.msra.mxu0 %v749
  %936 = vmatprep.subr.mxu0 0.0
  %937 = vmatpush1.msra.mxu0 %v754
  %938 = vmatprep.subr.mxu0 0.0
  %939 = vmatpush1.msra.mxu0 %v759
  %940 = vmatprep.subr.mxu0 0.0
  %941 = vmatpush1.msra.mxu0 0.0
  %942 = vmatprep.subr.mxu0 0.0
  %943 = vmatpush1.msra.mxu0 0.0
  %944 = vmatprep.subr.mxu0 0.0
  %945 = vmatpush1.msra.mxu0 0.0
  %946 = vmatprep.subr.mxu0 0.0
  %947 = vmatpush1.msra.mxu0 0.0
  %948 = vmatprep.subr.mxu0 0.0
  %949 = vmatpush1.msra.mxu0 0.0
  %950 = vmatprep.subr.mxu0 0.0
  %951 = vmatpush1.msra.mxu0 0.0
  %952 = vmatprep.subr.mxu0 0.0
  %953 = vmatpush1.msra.mxu0 0.0
  %954 = vmatprep.subr.mxu0 0.0
  %955 = vmatpush1.msra.mxu0 0.0
  %956 = vmatprep.subr.mxu0 0.0
  %957 = vmatpush1.msra.mxu0 0.0
  %958 = vmatprep.subr.mxu0 0.0
  %959 = vmatpush1.msra.mxu0 0.0
  %960 = vmatprep.subr.mxu0 0.0
  %961 = vmatpush1.msra.mxu0 0.0
  %962 = vmatprep.subr.mxu0 0.0
  %963 = vmatpush1.msra.mxu0 0.0
  %964 = vmatprep.subr.mxu0 0.0
  %965 = vmatpush1.msra.mxu0 0.0
  %966 = vmatprep.subr.mxu0 0.0
  %967 = vmatpush1.msra.mxu0 0.0
  %968 = vmatprep.subr.mxu0 0.0
  %969 = vmatpush1.msra.mxu0 0.0
  %970 = vmatprep.subr.mxu0 0.0
  %971 = vmatpush1.msra.mxu0 0.0
  %972 = vmatprep.subr.mxu0 0.0
  %973 = vmatpush1.msra.mxu0 0.0
  %974 = vmatprep.subr.mxu0 0.0
  %975 = vmatpush1.msra.mxu0 0.0
  %976 = vmatprep.subr.mxu0 0.0
  %977 = vmatpush1.msra.mxu0 0.0
  %978 = vmatprep.subr.mxu0 0.0
  %979 = vmatpush1.msra.mxu0 0.0
  %980 = vmatprep.subr.mxu0 0.0
  %981 = vmatpush1.msra.mxu0 0.0
  %982 = vmatprep.subr.mxu0 0.0
  %983 = vmatpush1.msra.mxu0 0.0
  %984 = vmatprep.subr.mxu0 0.0
  %985 = vmatpush1.msra.mxu0 0.0
  %986 = vmatprep.subr.mxu0 0.0
  %987 = vmatpush1.msra.mxu0 0.0
  %988 = vmatprep.subr.mxu0 0.0
  %989 = vmatpush1.msra.mxu0 0.0
  %990 = vmatprep.subr.mxu0 0.0
  %991 = vmatpush1.msra.mxu0 0.0
  %992 = vmatprep.subr.mxu0 0.0
  %993 = vmatpush1.msra.mxu0 0.0
  %994 = vmatprep.subr.mxu0 0.0
  %995 = vmatpush1.msra.mxu0 0.0
  %996 = vmatprep.mubr.f32.mxu0 0.0
  %997 = vmatmul.mubr.f32.gmra.mrb[0].mxu0 %v441
  %v998 = vpop.f32.mrb[0].mxu0
  %v999 = vadd.f32 0.0, %v998
  %v1000 = vpop.f32.mrb[0].mxu0
  %1001 = vmatprep.mubr.f32.mxu0 0.0
  %1002 = vmatmul.mubr.f32.gmra.mrb[0].mxu0 %v444
  %v1003 = vpop.f32.mrb[0].mxu0
  %v1004 = vadd.f32 0.0, %v1003
  %v1005 = vpop.f32.mrb[0].mxu0
  %1006 = vmatprep.mubr.f32.mxu0 0.0
  %1007 = vmatmul.mubr.f32.gmra.mrb[0].mxu0 %v447
  %v1008 = vpop.f32.mrb[0].mxu0
  %v1009 = vadd.f32 0.0, %v1008
  %v1010 = vpop.f32.mrb[0].mxu0
  %1011 = vmatprep.mubr.f32.mxu0 0.0
  %1012 = vmatmul.mubr.f32.gmra.mrb[0].mxu0 %v450
  %v1013 = vpop.f32.mrb[0].mxu0
  %v1014 = vadd.f32 0.0, %v1013
  %v1015 = vpop.f32.mrb[0].mxu0
  %1016 = vdwg.mxu0
  %v1017 = vadd.f32 %v914, %v999
  %v1018 = vadd.f32 %v919, %v1004
  %v1019 = vadd.f32 %v924, %v1009
  %v1020 = vadd.f32 %v929, %v1014
  %v1021 = vld [vmem:[%s8] sm:$0x1]
  %v1023 = vlaneseq
  %v1024 = vshrl.u32 %v1023, 7
  %v1025 = vsub.s32 0, %v1024
  %v1026 = vrot.slane %v1021, %v1025
  %v1028 = vadd.f32 %v1017, %v1026
  %v1029 = vadd.f32 %v1018, %v1026
  %v1030 = vadd.f32 %v1019, %v1026
  %v1031 = vadd.f32 %v1020, %v1026
  %v1032 = vmax.f32 %v1028, 0.0
  %v1033 = vmax.f32 %v1029, 0.0
  %v1034 = vmax.f32 %v1030, 0.0
  %v1035 = vmax.f32 %v1031, 0.0
  %1036 = vst.msk [vmem:[%s11] sm:$0xff] %vm58, %v1032
  %1037 = vst.msk [vmem:[%s11 + $0x8] sm:$0xff] %vm58, %v1033
  %1038 = vst.msk [vmem:[%s11 + $0x10] sm:$0xff] %vm58, %v1034
  %1039 = vst.msk [vmem:[%s11 + $0x18] sm:$0xff] %vm58, %v1035
  // Predicated region
  $region46: #{planar_flow_density_forward.4} parent=0 // pred_check
    _
  $region47: #{planar_flow_density_forward.4} parent=0 // pred_check_branch
    %1041 = sbr.rel (0) target = $region49
  $region48: #{planar_flow_density_forward.4} parent=0 // pred_region
    _
  $region49: #{planar_flow_density_forward.4} parent=0 // pred_fallthru
    _
  // Predicated region
  $region50: #{planar_flow_density_forward.4} parent=0 // pred_check
    _
  $region51: #{planar_flow_density_forward.4} parent=0 // pred_check_branch
    %1043 = sbr.rel (0) target = $region53
  $region52: #{planar_flow_density_forward.4} parent=0 // pred_region
    _
  $region53: #{planar_flow_density_forward.4} parent=0 // pred_fallthru
    _

// kernel: planar_flow_density_forward.6
$region0: #{planar_flow_density_forward.6}
  #allocation0 [shape = 'u32[]', space=smem, size = 0x4, offset = 0x4, fixed_abs, tag = 'smem constant byte address 0x4 - core index']
  #allocation1 [shape = 'u32[144,128]{1,0:T(1,128)}', space=vmem, size = 0x12000, scoped, tag = 'internal scratch']
  %s0 = inlined_call_operand.vmem [shape: f32[16,64], index: 0, kind: input, shape index: {}]
  %s1 = inlined_call_operand.vmem [shape: f32[8,16], index: 1, kind: input, shape index: {}]
  %s2 = inlined_call_operand.vmem [shape: f32[64,32], index: 2, kind: input, shape index: {}]
  %s3 = inlined_call_operand.vmem [shape: f32[32,32], index: 3, kind: input, shape index: {}]
  %s4 = inlined_call_operand.vmem [shape: f32[32,32], index: 4, kind: input, shape index: {}]
  %s5 = inlined_call_operand.vmem [shape: f32[32,32], index: 5, kind: input, shape index: {}]
  %s6 = inlined_call_operand.vmem [shape: f32[1,32], index: 6, kind: input, shape index: {}]
  %s7 = inlined_call_operand.vmem [shape: f32[32,32], index: 7, kind: input, shape index: {}]
  %s8 = inlined_call_operand.vmem [shape: f32[32,32], index: 8, kind: input, shape index: {}]
  %s9 = inlined_call_operand.vmem [shape: f32[32,32], index: 9, kind: input, shape index: {}]
  %s10 = inlined_call_operand.vmem [shape: f32[1,32], index: 10, kind: input, shape index: {}]
  %s11 = inlined_call_operand.vmem [shape: f32[8,8], index: 11, kind: input, shape index: {}]
  %s12 = inlined_call_operand.vmem [shape: f32[8,8], index: 12, kind: input, shape index: {}]
  %s13 = inlined_call_operand.vmem [shape: f32[8,32], index: 13, kind: output, shape index: {}]
  %s14 = sld [smem:[#allocation0]]
  $region62: #{planar_flow_density_forward.6} parent=0
    _
  %s16 = ssub.s32 1, %s14
  %s17 = scalar_select 0, %s16, %s14
  // Predicated region
  $region2: #{planar_flow_density_forward.6} parent=0 // pred_check
    _
  $region3: #{planar_flow_density_forward.6} parent=0 // pred_check_branch
    %19 = sbr.rel (0) target = $region5
  $region4: #{planar_flow_density_forward.6} parent=0 // pred_region
    _
  $region5: #{planar_flow_density_forward.6} parent=0 // pred_fallthru
    _
  // Predicated region
  $region6: #{planar_flow_density_forward.6} parent=0 // pred_check
    _
  $region7: #{planar_flow_density_forward.6} parent=0 // pred_check_branch
    %21 = sbr.rel (0) target = $region9
  $region8: #{planar_flow_density_forward.6} parent=0 // pred_region
    _
  $region9: #{planar_flow_density_forward.6} parent=0 // pred_fallthru
    _
  // Predicated region
  $region10: #{planar_flow_density_forward.6} parent=0 // pred_check
    _
  $region11: #{planar_flow_density_forward.6} parent=0 // pred_check_branch
    %23 = sbr.rel (0) target = $region13
  $region12: #{planar_flow_density_forward.6} parent=0 // pred_region
    _
  $region13: #{planar_flow_density_forward.6} parent=0 // pred_fallthru
    _
  // Predicated region
  $region14: #{planar_flow_density_forward.6} parent=0 // pred_check
    _
  $region15: #{planar_flow_density_forward.6} parent=0 // pred_check_branch
    %25 = sbr.rel (0) target = $region17
  $region16: #{planar_flow_density_forward.6} parent=0 // pred_region
    _
  $region17: #{planar_flow_density_forward.6} parent=0 // pred_fallthru
    _
  // Predicated region
  $region18: #{planar_flow_density_forward.6} parent=0 // pred_check
    _
  $region19: #{planar_flow_density_forward.6} parent=0 // pred_check_branch
    %27 = sbr.rel (0) target = $region21
  $region20: #{planar_flow_density_forward.6} parent=0 // pred_region
    _
  $region21: #{planar_flow_density_forward.6} parent=0 // pred_fallthru
    _
  // Predicated region
  $region22: #{planar_flow_density_forward.6} parent=0 // pred_check
    _
  $region23: #{planar_flow_density_forward.6} parent=0 // pred_check_branch
    %29 = sbr.rel (0) target = $region25
  $region24: #{planar_flow_density_forward.6} parent=0 // pred_region
    _
  $region25: #{planar_flow_density_forward.6} parent=0 // pred_fallthru
    _
  // Predicated region
  $region26: #{planar_flow_density_forward.6} parent=0 // pred_check
    _
  $region27: #{planar_flow_density_forward.6} parent=0 // pred_check_branch
    %31 = sbr.rel (0) target = $region29
  $region28: #{planar_flow_density_forward.6} parent=0 // pred_region
    _
  $region29: #{planar_flow_density_forward.6} parent=0 // pred_fallthru
    _
  // Predicated region
  $region30: #{planar_flow_density_forward.6} parent=0 // pred_check
    _
  $region31: #{planar_flow_density_forward.6} parent=0 // pred_check_branch
    %33 = sbr.rel (0) target = $region33
  $region32: #{planar_flow_density_forward.6} parent=0 // pred_region
    _
  $region33: #{planar_flow_density_forward.6} parent=0 // pred_fallthru
    _
  // Predicated region
  $region34: #{planar_flow_density_forward.6} parent=0 // pred_check
    _
  $region35: #{planar_flow_density_forward.6} parent=0 // pred_check_branch
    %35 = sbr.rel (0) target = $region37
  $region36: #{planar_flow_density_forward.6} parent=0 // pred_region
    _
  $region37: #{planar_flow_density_forward.6} parent=0 // pred_fallthru
    _
  // Predicated region
  $region38: #{planar_flow_density_forward.6} parent=0 // pred_check
    _
  $region39: #{planar_flow_density_forward.6} parent=0 // pred_check_branch
    %37 = sbr.rel (0) target = $region41
  $region40: #{planar_flow_density_forward.6} parent=0 // pred_region
    _
  $region41: #{planar_flow_density_forward.6} parent=0 // pred_fallthru
    _
  // Predicated region
  $region42: #{planar_flow_density_forward.6} parent=0 // pred_check
    _
  $region43: #{planar_flow_density_forward.6} parent=0 // pred_check_branch
    %39 = sbr.rel (0) target = $region45
  $region44: #{planar_flow_density_forward.6} parent=0 // pred_region
    _
  $region45: #{planar_flow_density_forward.6} parent=0 // pred_fallthru
    _
  // Predicated region
  $region46: #{planar_flow_density_forward.6} parent=0 // pred_check
    _
  $region47: #{planar_flow_density_forward.6} parent=0 // pred_check_branch
    %41 = sbr.rel (0) target = $region49
  $region48: #{planar_flow_density_forward.6} parent=0 // pred_region
    _
  $region49: #{planar_flow_density_forward.6} parent=0 // pred_fallthru
    _
  // Predicated region
  $region50: #{planar_flow_density_forward.6} parent=0 // pred_check
    _
  $region51: #{planar_flow_density_forward.6} parent=0 // pred_check_branch
    %43 = sbr.rel (0) target = $region53
  $region52: #{planar_flow_density_forward.6} parent=0 // pred_region
    _
  $region53: #{planar_flow_density_forward.6} parent=0 // pred_fallthru
    _
  %v44 = vld [vmem:[%s0] sm:$0xff]
  %v45 = vld [vmem:[%s0 + $0x8] sm:$0xff]
  %v46 = vld [vmem:[%s1] sm:$0xff]
  %v47 = vld [vmem:[%s2] sm:$0xff]
  %v48 = vld [vmem:[%s2 + $0x8] sm:$0xff]
  %v49 = vld [vmem:[%s2 + $0x10] sm:$0xff]
  %v50 = vld [vmem:[%s2 + $0x18] sm:$0xff]
  %v51 = vld [vmem:[%s2 + $0x20] sm:$0xff]
  %v52 = vld [vmem:[%s2 + $0x28] sm:$0xff]
  %v53 = vld [vmem:[%s2 + $0x30] sm:$0xff]
  %v54 = vld [vmem:[%s2 + $0x38] sm:$0xff]
  %vm55 = vcmask 523264
  %v57 = vsel %vm55, %v44, 0
  %v60 = vsel %vm55, %v45, 0
  %62 = vmatprep.subr.mxu0 0.0
  %63 = vmatpush1.msra.mxu0 %v47
  %64 = vmatprep.subr.mxu0 0.0
  %65 = vmatpush1.msra.mxu0 %v48
  %66 = vmatprep.subr.mxu0 0.0
  %67 = vmatpush1.msra.mxu0 %v49
  %68 = vmatprep.subr.mxu0 0.0
  %69 = vmatpush1.msra.mxu0 %v50
  %70 = vmatprep.subr.mxu0 0.0
  %71 = vmatpush1.msra.mxu0 %v51
  %72 = vmatprep.subr.mxu0 0.0
  %73 = vmatpush1.msra.mxu0 %v52
  %74 = vmatprep.subr.mxu0 0.0
  %75 = vmatpush1.msra.mxu0 %v53
  %76 = vmatprep.subr.mxu0 0.0
  %77 = vmatpush1.msra.mxu0 %v54
  %78 = vmatprep.subr.mxu0 0.0
  %79 = vmatpush1.msra.mxu0 0.0
  %80 = vmatprep.subr.mxu0 0.0
  %81 = vmatpush1.msra.mxu0 0.0
  %82 = vmatprep.subr.mxu0 0.0
  %83 = vmatpush1.msra.mxu0 0.0
  %84 = vmatprep.subr.mxu0 0.0
  %85 = vmatpush1.msra.mxu0 0.0
  %86 = vmatprep.subr.mxu0 0.0
  %87 = vmatpush1.msra.mxu0 0.0
  %88 = vmatprep.subr.mxu0 0.0
  %89 = vmatpush1.msra.mxu0 0.0
  %90 = vmatprep.subr.mxu0 0.0
  %91 = vmatpush1.msra.mxu0 0.0
  %92 = vmatprep.subr.mxu0 0.0
  %93 = vmatpush1.msra.mxu0 0.0
  %94 = vmatprep.subr.mxu0 0.0
  %95 = vmatpush1.msra.mxu0 0.0
  %96 = vmatprep.subr.mxu0 0.0
  %97 = vmatpush1.msra.mxu0 0.0
  %98 = vmatprep.subr.mxu0 0.0
  %99 = vmatpush1.msra.mxu0 0.0
  %100 = vmatprep.subr.mxu0 0.0
  %101 = vmatpush1.msra.mxu0 0.0
  %102 = vmatprep.subr.mxu0 0.0
  %103 = vmatpush1.msra.mxu0 0.0
  %104 = vmatprep.subr.mxu0 0.0
  %105 = vmatpush1.msra.mxu0 0.0
  %106 = vmatprep.subr.mxu0 0.0
  %107 = vmatpush1.msra.mxu0 0.0
  %108 = vmatprep.subr.mxu0 0.0
  %109 = vmatpush1.msra.mxu0 0.0
  %110 = vmatprep.subr.mxu0 0.0
  %111 = vmatpush1.msra.mxu0 0.0
  %112 = vmatprep.subr.mxu0 0.0
  %113 = vmatpush1.msra.mxu0 0.0
  %114 = vmatprep.subr.mxu0 0.0
  %115 = vmatpush1.msra.mxu0 0.0
  %116 = vmatprep.subr.mxu0 0.0
  %117 = vmatpush1.msra.mxu0 0.0
  %118 = vmatprep.subr.mxu0 0.0
  %119 = vmatpush1.msra.mxu0 0.0
  %120 = vmatprep.subr.mxu0 0.0
  %121 = vmatpush1.msra.mxu0 0.0
  %122 = vmatprep.subr.mxu0 0.0
  %123 = vmatpush1.msra.mxu0 0.0
  %124 = vmatprep.subr.mxu0 0.0
  %125 = vmatpush1.msra.mxu0 0.0
  %126 = vmatprep.mubr.f32.mxu0 0.0
  %127 = vmatmul.mubr.f32.gmra.mrb[0].mxu0 %v57
  %v128 = vpop.f32.mrb[0].mxu0
  %v129 = vadd.f32 0.0, %v128
  %v130 = vpop.f32.mrb[0].mxu0
  %131 = vmatprep.mubr.f32.mxu0 0.0
  %132 = vmatmul.mubr.f32.gmra.mrb[0].mxu0 %v60
  %v133 = vpop.f32.mrb[0].mxu0
  %v134 = vadd.f32 0.0, %v133
  %v135 = vpop.f32.mrb[0].mxu0
  %136 = vdwg.mxu0
  %vm137 = vcmask 130048
  %v139 = vsel %vm137, %v46, 0
  %141 = vmatprep.subr.mxu0 0.0
  %142 = vmatpush1.msra.mxu0 %v129
  %143 = vmatprep.subr.mxu0 0.0
  %144 = vmatpush1.msra.mxu0 %v134
  %145 = vmatprep.subr.mxu0 0.0
  %146 = vmatpush1.msra.mxu0 0.0
  %147 = vmatprep.subr.mxu0 0.0
  %148 = vmatpush1.msra.mxu0 0.0
  %149 = vmatprep.subr.mxu0 0.0
  %150 = vmatpush1.msra.mxu0 0.0
  %151 = vmatprep.subr.mxu0 0.0
  %152 = vmatpush1.msra.mxu0 0.0
  %153 = vmatprep.subr.mxu0 0.0
  %154 = vmatpush1.msra.mxu0 0.0
  %155 = vmatprep.subr.mxu0 0.0
  %156 = vmatpush1.msra.mxu0 0.0
  %157 = vmatprep.subr.mxu0 0.0
  %158 = vmatpush1.msra.mxu0 0.0
  %159 = vmatprep.subr.mxu0 0.0
  %160 = vmatpush1.msra.mxu0 0.0
  %161 = vmatprep.subr.mxu0 0.0
  %162 = vmatpush1.msra.mxu0 0.0
  %163 = vmatprep.subr.mxu0 0.0
  %164 = vmatpush1.msra.mxu0 0.0
  %165 = vmatprep.subr.mxu0 0.0
  %166 = vmatpush1.msra.mxu0 0.0
  %167 = vmatprep.subr.mxu0 0.0
  %168 = vmatpush1.msra.mxu0 0.0
  %169 = vmatprep.subr.mxu0 0.0
  %170 = vmatpush1.msra.mxu0 0.0
  %171 = vmatprep.subr.mxu0 0.0
  %172 = vmatpush1.msra.mxu0 0.0
  %173 = vmatprep.subr.mxu0 0.0
  %174 = vmatpush1.msra.mxu0 0.0
  %175 = vmatprep.subr.mxu0 0.0
  %176 = vmatpush1.msra.mxu0 0.0
  %177 = vmatprep.subr.mxu0 0.0
  %178 = vmatpush1.msra.mxu0 0.0
  %179 = vmatprep.subr.mxu0 0.0
  %180 = vmatpush1.msra.mxu0 0.0
  %181 = vmatprep.subr.mxu0 0.0
  %182 = vmatpush1.msra.mxu0 0.0
  %183 = vmatprep.subr.mxu0 0.0
  %184 = vmatpush1.msra.mxu0 0.0
  %185 = vmatprep.subr.mxu0 0.0
  %186 = vmatpush1.msra.mxu0 0.0
  %187 = vmatprep.subr.mxu0 0.0
  %188 = vmatpush1.msra.mxu0 0.0
  %189 = vmatprep.subr.mxu0 0.0
  %190 = vmatpush1.msra.mxu0 0.0
  %191 = vmatprep.subr.mxu0 0.0
  %192 = vmatpush1.msra.mxu0 0.0
  %193 = vmatprep.subr.mxu0 0.0
  %194 = vmatpush1.msra.mxu0 0.0
  %195 = vmatprep.subr.mxu0 0.0
  %196 = vmatpush1.msra.mxu0 0.0
  %197 = vmatprep.subr.mxu0 0.0
  %198 = vmatpush1.msra.mxu0 0.0
  %199 = vmatprep.subr.mxu0 0.0
  %200 = vmatpush1.msra.mxu0 0.0
  %201 = vmatprep.subr.mxu0 0.0
  %202 = vmatpush1.msra.mxu0 0.0
  %203 = vmatprep.subr.mxu0 0.0
  %204 = vmatpush1.msra.mxu0 0.0
  %205 = vmatprep.mubr.f32.mxu0 0.0
  %206 = vmatmul.mubr.f32.gmra.mrb[0].mxu0 %v139
  %v207 = vpop.f32.mrb[0].mxu0
  %v208 = vadd.f32 0.0, %v207
  %v209 = vpop.f32.mrb[0].mxu0
  %210 = vdwg.mxu0
  %v211 = vld [vmem:[%s11] sm:$0xff]
  %v212 = vld [vmem:[%s12] sm:$0xff]
  %v213 = vld [vmem:[%s3] sm:$0xff]
  %v214 = vld [vmem:[%s3 + $0x8] sm:$0xff]
  %v215 = vld [vmem:[%s3 + $0x10] sm:$0xff]
  %v216 = vld [vmem:[%s3 + $0x18] sm:$0xff]
  %vm217 = vcmask 261120
  %v219 = vsel %vm217, %v208, 0
  %221 = vmatprep.subr.mxu0 0.0
  %222 = vmatpush1.msra.mxu0 %v213
  %223 = vmatprep.subr.mxu0 0.0
  %224 = vmatpush1.msra.mxu0 %v214
  %225 = vmatprep.subr.mxu0 0.0
  %226 = vmatpush1.msra.mxu0 %v215
  %227 = vmatprep.subr.mxu0 0.0
  %228 = vmatpush1.msra.mxu0 %v216
  %229 = vmatprep.subr.mxu0 0.0
  %230 = vmatpush1.msra.mxu0 0.0
  %231 = vmatprep.subr.mxu0 0.0
  %232 = vmatpush1.msra.mxu0 0.0
  %233 = vmatprep.subr.mxu0 0.0
  %234 = vmatpush1.msra.mxu0 0.0
  %235 = vmatprep.subr.mxu0 0.0
  %236 = vmatpush1.msra.mxu0 0.0
  %237 = vmatprep.subr.mxu0 0.0
  %238 = vmatpush1.msra.mxu0 0.0
  %239 = vmatprep.subr.mxu0 0.0
  %240 = vmatpush1.msra.mxu0 0.0
  %241 = vmatprep.subr.mxu0 0.0
  %242 = vmatpush1.msra.mxu0 0.0
  %243 = vmatprep.subr.mxu0 0.0
  %244 = vmatpush1.msra.mxu0 0.0
  %245 = vmatprep.subr.mxu0 0.0
  %246 = vmatpush1.msra.mxu0 0.0
  %247 = vmatprep.subr.mxu0 0.0
  %248 = vmatpush1.msra.mxu0 0.0
  %249 = vmatprep.subr.mxu0 0.0
  %250 = vmatpush1.msra.mxu0 0.0
  %251 = vmatprep.subr.mxu0 0.0
  %252 = vmatpush1.msra.mxu0 0.0
  %253 = vmatprep.subr.mxu0 0.0
  %254 = vmatpush1.msra.mxu0 0.0
  %255 = vmatprep.subr.mxu0 0.0
  %256 = vmatpush1.msra.mxu0 0.0
  %257 = vmatprep.subr.mxu0 0.0
  %258 = vmatpush1.msra.mxu0 0.0
  %259 = vmatprep.subr.mxu0 0.0
  %260 = vmatpush1.msra.mxu0 0.0
  %261 = vmatprep.subr.mxu0 0.0
  %262 = vmatpush1.msra.mxu0 0.0
  %263 = vmatprep.subr.mxu0 0.0
  %264 = vmatpush1.msra.mxu0 0.0
  %265 = vmatprep.subr.mxu0 0.0
  %266 = vmatpush1.msra.mxu0 0.0
  %267 = vmatprep.subr.mxu0 0.0
  %268 = vmatpush1.msra.mxu0 0.0
  %269 = vmatprep.subr.mxu0 0.0
  %270 = vmatpush1.msra.mxu0 0.0
  %271 = vmatprep.subr.mxu0 0.0
  %272 = vmatpush1.msra.mxu0 0.0
  %273 = vmatprep.subr.mxu0 0.0
  %274 = vmatpush1.msra.mxu0 0.0
  %275 = vmatprep.subr.mxu0 0.0
  %276 = vmatpush1.msra.mxu0 0.0
  %277 = vmatprep.subr.mxu0 0.0
  %278 = vmatpush1.msra.mxu0 0.0
  %279 = vmatprep.subr.mxu0 0.0
  %280 = vmatpush1.msra.mxu0 0.0
  %281 = vmatprep.subr.mxu0 0.0
  %282 = vmatpush1.msra.mxu0 0.0
  %283 = vmatprep.subr.mxu0 0.0
  %284 = vmatpush1.msra.mxu0 0.0
  %285 = vmatprep.mubr.f32.mxu0 0.0
  %286 = vmatmul.mubr.f32.gmra.mrb[0].mxu0 %v219
  %v287 = vpop.f32.mrb[0].mxu0
  %v288 = vadd.f32 0.0, %v287
  %v289 = vpop.f32.mrb[0].mxu0
  %290 = vdwg.mxu0
  %v291 = vld [vmem:[%s4] sm:$0xff]
  %v292 = vld [vmem:[%s4 + $0x8] sm:$0xff]
  %v293 = vld [vmem:[%s4 + $0x10] sm:$0xff]
  %v294 = vld [vmem:[%s4 + $0x18] sm:$0xff]
  %v295 = vld [vmem:[%s5] sm:$0xff]
  %v296 = vld [vmem:[%s5 + $0x8] sm:$0xff]
  %v297 = vld [vmem:[%s5 + $0x10] sm:$0xff]
  %v298 = vld [vmem:[%s5 + $0x18] sm:$0xff]
  %299 = vmatprep.subr.mxu0 0.0
  %300 = vmatpush1.msra.mxu0 %v295
  %301 = vmatprep.subr.mxu0 0.0
  %302 = vmatpush1.msra.mxu0 %v296
  %303 = vmatprep.subr.mxu0 0.0
  %304 = vmatpush1.msra.mxu0 %v297
  %305 = vmatprep.subr.mxu0 0.0
  %306 = vmatpush1.msra.mxu0 %v298
  %307 = vmatprep.subr.mxu0 0.0
  %308 = vmatpush1.msra.mxu0 0.0
  %309 = vmatprep.subr.mxu0 0.0
  %310 = vmatpush1.msra.mxu0 0.0
  %311 = vmatprep.subr.mxu0 0.0
  %312 = vmatpush1.msra.mxu0 0.0
  %313 = vmatprep.subr.mxu0 0.0
  %314 = vmatpush1.msra.mxu0 0.0
  %315 = vmatprep.subr.mxu0 0.0
  %316 = vmatpush1.msra.mxu0 0.0
  %317 = vmatprep.subr.mxu0 0.0
  %318 = vmatpush1.msra.mxu0 0.0
  %319 = vmatprep.subr.mxu0 0.0
  %320 = vmatpush1.msra.mxu0 0.0
  %321 = vmatprep.subr.mxu0 0.0
  %322 = vmatpush1.msra.mxu0 0.0
  %323 = vmatprep.subr.mxu0 0.0
  %324 = vmatpush1.msra.mxu0 0.0
  %325 = vmatprep.subr.mxu0 0.0
  %326 = vmatpush1.msra.mxu0 0.0
  %327 = vmatprep.subr.mxu0 0.0
  %328 = vmatpush1.msra.mxu0 0.0
  %329 = vmatprep.subr.mxu0 0.0
  %330 = vmatpush1.msra.mxu0 0.0
  %331 = vmatprep.subr.mxu0 0.0
  %332 = vmatpush1.msra.mxu0 0.0
  %333 = vmatprep.subr.mxu0 0.0
  %334 = vmatpush1.msra.mxu0 0.0
  %335 = vmatprep.subr.mxu0 0.0
  %336 = vmatpush1.msra.mxu0 0.0
  %337 = vmatprep.subr.mxu0 0.0
  %338 = vmatpush1.msra.mxu0 0.0
  %339 = vmatprep.subr.mxu0 0.0
  %340 = vmatpush1.msra.mxu0 0.0
  %341 = vmatprep.subr.mxu0 0.0
  %342 = vmatpush1.msra.mxu0 0.0
  %343 = vmatprep.subr.mxu0 0.0
  %344 = vmatpush1.msra.mxu0 0.0
  %345 = vmatprep.subr.mxu0 0.0
  %346 = vmatpush1.msra.mxu0 0.0
  %347 = vmatprep.subr.mxu0 0.0
  %348 = vmatpush1.msra.mxu0 0.0
  %349 = vmatprep.subr.mxu0 0.0
  %350 = vmatpush1.msra.mxu0 0.0
  %351 = vmatprep.subr.mxu0 0.0
  %352 = vmatpush1.msra.mxu0 0.0
  %353 = vmatprep.subr.mxu0 0.0
  %354 = vmatpush1.msra.mxu0 0.0
  %355 = vmatprep.subr.mxu0 0.0
  %356 = vmatpush1.msra.mxu0 0.0
  %357 = vmatprep.subr.mxu0 0.0
  %358 = vmatpush1.msra.mxu0 0.0
  %359 = vmatprep.subr.mxu0 0.0
  %360 = vmatpush1.msra.mxu0 0.0
  %361 = vmatprep.subr.mxu0 0.0
  %362 = vmatpush1.msra.mxu0 0.0
  %363 = vmatprep.mubr.f32.mxu0 0.0
  %364 = vmatmul.mubr.f32.gmra.mrb[0].mxu0 %v219
  %v365 = vpop.f32.mrb[0].mxu0
  %v366 = vadd.f32 0.0, %v365
  %v367 = vpop.f32.mrb[0].mxu0
  %368 = vdwg.mxu0
  %vm369 = vcmask 64512
  %v371 = vsel %vm369, %v211, 0
  %373 = vmatprep.subr.mxu0 0.0
  %374 = vmatpush1.msra.mxu0 %v288
  %375 = vmatprep.subr.mxu0 0.0
  %376 = vmatpush1.msra.mxu0 0.0
  %377 = vmatprep.subr.mxu0 0.0
  %378 = vmatpush1.msra.mxu0 0.0
  %379 = vmatprep.subr.mxu0 0.0
  %380 = vmatpush1.msra.mxu0 0.0
  %381 = vmatprep.subr.mxu0 0.0
  %382 = vmatpush1.msra.mxu0 0.0
  %383 = vmatprep.subr.mxu0 0.0
  %384 = vmatpush1.msra.mxu0 0.0
  %385 = vmatprep.subr.mxu0 0.0
  %386 = vmatpush1.msra.mxu0 0.0
  %387 = vmatprep.subr.mxu0 0.0
  %388 = vmatpush1.msra.mxu0 0.0
  %389 = vmatprep.subr.mxu0 0.0
  %390 = vmatpush1.msra.mxu0 0.0
  %391 = vmatprep.subr.mxu0 0.0
  %392 = vmatpush1.msra.mxu0 0.0
  %393 = vmatprep.subr.mxu0 0.0
  %394 = vmatpush1.msra.mxu0 0.0
  %395 = vmatprep.subr.mxu0 0.0
  %396 = vmatpush1.msra.mxu0 0.0
  %397 = vmatprep.subr.mxu0 0.0
  %398 = vmatpush1.msra.mxu0 0.0
  %399 = vmatprep.subr.mxu0 0.0
  %400 = vmatpush1.msra.mxu0 0.0
  %401 = vmatprep.subr.mxu0 0.0
  %402 = vmatpush1.msra.mxu0 0.0
  %403 = vmatprep.subr.mxu0 0.0
  %404 = vmatpush1.msra.mxu0 0.0
  %405 = vmatprep.subr.mxu0 0.0
  %406 = vmatpush1.msra.mxu0 0.0
  %407 = vmatprep.subr.mxu0 0.0
  %408 = vmatpush1.msra.mxu0 0.0
  %409 = vmatprep.subr.mxu0 0.0
  %410 = vmatpush1.msra.mxu0 0.0
  %411 = vmatprep.subr.mxu0 0.0
  %412 = vmatpush1.msra.mxu0 0.0
  %413 = vmatprep.subr.mxu0 0.0
  %414 = vmatpush1.msra.mxu0 0.0
  %415 = vmatprep.subr.mxu0 0.0
  %416 = vmatpush1.msra.mxu0 0.0
  %417 = vmatprep.subr.mxu0 0.0
  %418 = vmatpush1.msra.mxu0 0.0
  %419 = vmatprep.subr.mxu0 0.0
  %420 = vmatpush1.msra.mxu0 0.0
  %421 = vmatprep.subr.mxu0 0.0
  %422 = vmatpush1.msra.mxu0 0.0
  %423 = vmatprep.subr.mxu0 0.0
  %424 = vmatpush1.msra.mxu0 0.0
  %425 = vmatprep.subr.mxu0 0.0
  %426 = vmatpush1.msra.mxu0 0.0
  %427 = vmatprep.subr.mxu0 0.0
  %428 = vmatpush1.msra.mxu0 0.0
  %429 = vmatprep.subr.mxu0 0.0
  %430 = vmatpush1.msra.mxu0 0.0
  %431 = vmatprep.subr.mxu0 0.0
  %432 = vmatpush1.msra.mxu0 0.0
  %433 = vmatprep.subr.mxu0 0.0
  %434 = vmatpush1.msra.mxu0 0.0
  %435 = vmatprep.subr.mxu0 0.0
  %436 = vmatpush1.msra.mxu0 0.0
  %437 = vmatprep.mubr.f32.mxu0 0.0
  %438 = vmatmul.mubr.f32.gmra.mrb[0].mxu0 %v371
  %v439 = vpop.f32.mrb[0].mxu0
  %v440 = vadd.f32 0.0, %v439
  %v441 = vpop.f32.mrb[0].mxu0
  %442 = vdwg.mxu0
  %443 = vmatprep.subr.mxu0 0.0
  %444 = vmatpush1.msra.mxu0 %v291
  %445 = vmatprep.subr.mxu0 0.0
  %446 = vmatpush1.msra.mxu0 %v292
  %447 = vmatprep.subr.mxu0 0.0
  %448 = vmatpush1.msra.mxu0 %v293
  %449 = vmatprep.subr.mxu0 0.0
  %450 = vmatpush1.msra.mxu0 %v294
  %451 = vmatprep.subr.mxu0 0.0
  %452 = vmatpush1.msra.mxu0 0.0
  %453 = vmatprep.subr.mxu0 0.0
  %454 = vmatpush1.msra.mxu0 0.0
  %455 = vmatprep.subr.mxu0 0.0
  %456 = vmatpush1.msra.mxu0 0.0
  %457 = vmatprep.subr.mxu0 0.0
  %458 = vmatpush1.msra.mxu0 0.0
  %459 = vmatprep.subr.mxu0 0.0
  %460 = vmatpush1.msra.mxu0 0.0
  %461 = vmatprep.subr.mxu0 0.0
  %462 = vmatpush1.msra.mxu0 0.0
  %463 = vmatprep.subr.mxu0 0.0
  %464 = vmatpush1.msra.mxu0 0.0
  %465 = vmatprep.subr.mxu0 0.0
  %466 = vmatpush1.msra.mxu0 0.0
  %467 = vmatprep.subr.mxu0 0.0
  %468 = vmatpush1.msra.mxu0 0.0
  %469 = vmatprep.subr.mxu0 0.0
  %470 = vmatpush1.msra.mxu0 0.0
  %471 = vmatprep.subr.mxu0 0.0
  %472 = vmatpush1.msra.mxu0 0.0
  %473 = vmatprep.subr.mxu0 0.0
  %474 = vmatpush1.msra.mxu0 0.0
  %475 = vmatprep.subr.mxu0 0.0
  %476 = vmatpush1.msra.mxu0 0.0
  %477 = vmatprep.subr.mxu0 0.0
  %478 = vmatpush1.msra.mxu0 0.0
  %479 = vmatprep.subr.mxu0 0.0
  %480 = vmatpush1.msra.mxu0 0.0
  %481 = vmatprep.subr.mxu0 0.0
  %482 = vmatpush1.msra.mxu0 0.0
  %483 = vmatprep.subr.mxu0 0.0
  %484 = vmatpush1.msra.mxu0 0.0
  %485 = vmatprep.subr.mxu0 0.0
  %486 = vmatpush1.msra.mxu0 0.0
  %487 = vmatprep.subr.mxu0 0.0
  %488 = vmatpush1.msra.mxu0 0.0
  %489 = vmatprep.subr.mxu0 0.0
  %490 = vmatpush1.msra.mxu0 0.0
  %491 = vmatprep.subr.mxu0 0.0
  %492 = vmatpush1.msra.mxu0 0.0
  %493 = vmatprep.subr.mxu0 0.0
  %494 = vmatpush1.msra.mxu0 0.0
  %495 = vmatprep.subr.mxu0 0.0
  %496 = vmatpush1.msra.mxu0 0.0
  %497 = vmatprep.subr.mxu0 0.0
  %498 = vmatpush1.msra.mxu0 0.0
  %499 = vmatprep.subr.mxu0 0.0
  %500 = vmatpush1.msra.mxu0 0.0
  %501 = vmatprep.subr.mxu0 0.0
  %502 = vmatpush1.msra.mxu0 0.0
  %503 = vmatprep.subr.mxu0 0.0
  %504 = vmatpush1.msra.mxu0 0.0
  %505 = vmatprep.subr.mxu0 0.0
  %506 = vmatpush1.msra.mxu0 0.0
  %507 = vmatprep.mubr.f32.mxu0 0.0
  %508 = vmatmul.mubr.f32.gmra.mrb[0].mxu0 %v219
  %v509 = vpop.f32.mrb[0].mxu0
  %v510 = vadd.f32 %v440, %v509
  %v511 = vpop.f32.mrb[0].mxu0
  %512 = vdwg.mxu0
  %v514 = vsel %vm369, %v212, 0
  %516 = vmatprep.subr.mxu0 0.0
  %517 = vmatpush1.msra.mxu0 %v366
  %518 = vmatprep.subr.mxu0 0.0
  %519 = vmatpush1.msra.mxu0 0.0
  %520 = vmatprep.subr.mxu0 0.0
  %521 = vmatpush1.msra.mxu0 0.0
  %522 = vmatprep.subr.mxu0 0.0
  %523 = vmatpush1.msra.mxu0 0.0
  %524 = vmatprep.subr.mxu0 0.0
  %525 = vmatpush1.msra.mxu0 0.0
  %526 = vmatprep.subr.mxu0 0.0
  %527 = vmatpush1.msra.mxu0 0.0
  %528 = vmatprep.subr.mxu0 0.0
  %529 = vmatpush1.msra.mxu0 0.0
  %530 = vmatprep.subr.mxu0 0.0
  %531 = vmatpush1.msra.mxu0 0.0
  %532 = vmatprep.subr.mxu0 0.0
  %533 = vmatpush1.msra.mxu0 0.0
  %534 = vmatprep.subr.mxu0 0.0
  %535 = vmatpush1.msra.mxu0 0.0
  %536 = vmatprep.subr.mxu0 0.0
  %537 = vmatpush1.msra.mxu0 0.0
  %538 = vmatprep.subr.mxu0 0.0
  %539 = vmatpush1.msra.mxu0 0.0
  %540 = vmatprep.subr.mxu0 0.0
  %541 = vmatpush1.msra.mxu0 0.0
  %542 = vmatprep.subr.mxu0 0.0
  %543 = vmatpush1.msra.mxu0 0.0
  %544 = vmatprep.subr.mxu0 0.0
  %545 = vmatpush1.msra.mxu0 0.0
  %546 = vmatprep.subr.mxu0 0.0
  %547 = vmatpush1.msra.mxu0 0.0
  %548 = vmatprep.subr.mxu0 0.0
  %549 = vmatpush1.msra.mxu0 0.0
  %550 = vmatprep.subr.mxu0 0.0
  %551 = vmatpush1.msra.mxu0 0.0
  %552 = vmatprep.subr.mxu0 0.0
  %553 = vmatpush1.msra.mxu0 0.0
  %554 = vmatprep.subr.mxu0 0.0
  %555 = vmatpush1.msra.mxu0 0.0
  %556 = vmatprep.subr.mxu0 0.0
  %557 = vmatpush1.msra.mxu0 0.0
  %558 = vmatprep.subr.mxu0 0.0
  %559 = vmatpush1.msra.mxu0 0.0
  %560 = vmatprep.subr.mxu0 0.0
  %561 = vmatpush1.msra.mxu0 0.0
  %562 = vmatprep.subr.mxu0 0.0
  %563 = vmatpush1.msra.mxu0 0.0
  %564 = vmatprep.subr.mxu0 0.0
  %565 = vmatpush1.msra.mxu0 0.0
  %566 = vmatprep.subr.mxu0 0.0
  %567 = vmatpush1.msra.mxu0 0.0
  %568 = vmatprep.subr.mxu0 0.0
  %569 = vmatpush1.msra.mxu0 0.0
  %570 = vmatprep.subr.mxu0 0.0
  %571 = vmatpush1.msra.mxu0 0.0
  %572 = vmatprep.subr.mxu0 0.0
  %573 = vmatpush1.msra.mxu0 0.0
  %574 = vmatprep.subr.mxu0 0.0
  %575 = vmatpush1.msra.mxu0 0.0
  %576 = vmatprep.subr.mxu0 0.0
  %577 = vmatpush1.msra.mxu0 0.0
  %578 = vmatprep.subr.mxu0 0.0
  %579 = vmatpush1.msra.mxu0 0.0
  %580 = vmatprep.mubr.f32.mxu0 0.0
  %581 = vmatmul.mubr.f32.gmra.mrb[0].mxu0 %v514
  %v582 = vpop.f32.mrb[0].mxu0
  %v583 = vadd.f32 0.0, %v582
  %v584 = vpop.f32.mrb[0].mxu0
  %585 = vdwg.mxu0
  %v586 = vadd.f32 %v510, %v583
  %v587 = vld [vmem:[%s6] sm:$0x1]
  %v589 = vlaneseq
  %v590 = vshrl.u32 %v589, 7
  %v591 = vsub.s32 0, %v590
  %v592 = vrot.slane %v587, %v591
  %v594 = vadd.f32 %v586, %v592
  %v595 = vmax.f32 %v594, 0.0
  %v596 = vld [vmem:[%s7] sm:$0xff]
  %v597 = vld [vmem:[%s7 + $0x8] sm:$0xff]
  %v598 = vld [vmem:[%s7 + $0x10] sm:$0xff]
  %v599 = vld [vmem:[%s7 + $0x18] sm:$0xff]
  %v601 = vsel %vm217, %v595, 0
  %603 = vmatprep.subr.mxu0 0.0
  %604 = vmatpush1.msra.mxu0 %v596
  %605 = vmatprep.subr.mxu0 0.0
  %606 = vmatpush1.msra.mxu0 %v597
  %607 = vmatprep.subr.mxu0 0.0
  %608 = vmatpush1.msra.mxu0 %v598
  %609 = vmatprep.subr.mxu0 0.0
  %610 = vmatpush1.msra.mxu0 %v599
  %611 = vmatprep.subr.mxu0 0.0
  %612 = vmatpush1.msra.mxu0 0.0
  %613 = vmatprep.subr.mxu0 0.0
  %614 = vmatpush1.msra.mxu0 0.0
  %615 = vmatprep.subr.mxu0 0.0
  %616 = vmatpush1.msra.mxu0 0.0
  %617 = vmatprep.subr.mxu0 0.0
  %618 = vmatpush1.msra.mxu0 0.0
  %619 = vmatprep.subr.mxu0 0.0
  %620 = vmatpush1.msra.mxu0 0.0
  %621 = vmatprep.subr.mxu0 0.0
  %622 = vmatpush1.msra.mxu0 0.0
  %623 = vmatprep.subr.mxu0 0.0
  %624 = vmatpush1.msra.mxu0 0.0
  %625 = vmatprep.subr.mxu0 0.0
  %626 = vmatpush1.msra.mxu0 0.0
  %627 = vmatprep.subr.mxu0 0.0
  %628 = vmatpush1.msra.mxu0 0.0
  %629 = vmatprep.subr.mxu0 0.0
  %630 = vmatpush1.msra.mxu0 0.0
  %631 = vmatprep.subr.mxu0 0.0
  %632 = vmatpush1.msra.mxu0 0.0
  %633 = vmatprep.subr.mxu0 0.0
  %634 = vmatpush1.msra.mxu0 0.0
  %635 = vmatprep.subr.mxu0 0.0
  %636 = vmatpush1.msra.mxu0 0.0
  %637 = vmatprep.subr.mxu0 0.0
  %638 = vmatpush1.msra.mxu0 0.0
  %639 = vmatprep.subr.mxu0 0.0
  %640 = vmatpush1.msra.mxu0 0.0
  %641 = vmatprep.subr.mxu0 0.0
  %642 = vmatpush1.msra.mxu0 0.0
  %643 = vmatprep.subr.mxu0 0.0
  %644 = vmatpush1.msra.mxu0 0.0
  %645 = vmatprep.subr.mxu0 0.0
  %646 = vmatpush1.msra.mxu0 0.0
  %647 = vmatprep.subr.mxu0 0.0
  %648 = vmatpush1.msra.mxu0 0.0
  %649 = vmatprep.subr.mxu0 0.0
  %650 = vmatpush1.msra.mxu0 0.0
  %651 = vmatprep.subr.mxu0 0.0
  %652 = vmatpush1.msra.mxu0 0.0
  %653 = vmatprep.subr.mxu0 0.0
  %654 = vmatpush1.msra.mxu0 0.0
  %655 = vmatprep.subr.mxu0 0.0
  %656 = vmatpush1.msra.mxu0 0.0
  %657 = vmatprep.subr.mxu0 0.0
  %658 = vmatpush1.msra.mxu0 0.0
  %659 = vmatprep.subr.mxu0 0.0
  %660 = vmatpush1.msra.mxu0 0.0
  %661 = vmatprep.subr.mxu0 0.0
  %662 = vmatpush1.msra.mxu0 0.0
  %663 = vmatprep.subr.mxu0 0.0
  %664 = vmatpush1.msra.mxu0 0.0
  %665 = vmatprep.subr.mxu0 0.0
  %666 = vmatpush1.msra.mxu0 0.0
  %667 = vmatprep.mubr.f32.mxu0 0.0
  %668 = vmatmul.mubr.f32.gmra.mrb[0].mxu0 %v601
  %v669 = vpop.f32.mrb[0].mxu0
  %v670 = vadd.f32 0.0, %v669
  %v671 = vpop.f32.mrb[0].mxu0
  %672 = vdwg.mxu0
  %v673 = vld [vmem:[%s8] sm:$0xff]
  %v674 = vld [vmem:[%s8 + $0x8] sm:$0xff]
  %v675 = vld [vmem:[%s8 + $0x10] sm:$0xff]
  %v676 = vld [vmem:[%s8 + $0x18] sm:$0xff]
  %v677 = vld [vmem:[%s9] sm:$0xff]
  %v678 = vld [vmem:[%s9 + $0x8] sm:$0xff]
  %v679 = vld [vmem:[%s9 + $0x10] sm:$0xff]
  %v680 = vld [vmem:[%s9 + $0x18] sm:$0xff]
  %681 = vmatprep.subr.mxu0 0.0
  %682 = vmatpush1.msra.mxu0 %v677
  %683 = vmatprep.subr.mxu0 0.0
  %684 = vmatpush1.msra.mxu0 %v678
  %685 = vmatprep.subr.mxu0 0.0
  %686 = vmatpush1.msra.mxu0 %v679
  %687 = vmatprep.subr.mxu0 0.0
  %688 = vmatpush1.msra.mxu0 %v680
  %689 = vmatprep.subr.mxu0 0.0
  %690 = vmatpush1.msra.mxu0 0.0
  %691 = vmatprep.subr.mxu0 0.0
  %692 = vmatpush1.msra.mxu0 0.0
  %693 = vmatprep.subr.mxu0 0.0
  %694 = vmatpush1.msra.mxu0 0.0
  %695 = vmatprep.subr.mxu0 0.0
  %696 = vmatpush1.msra.mxu0 0.0
  %697 = vmatprep.subr.mxu0 0.0
  %698 = vmatpush1.msra.mxu0 0.0
  %699 = vmatprep.subr.mxu0 0.0
  %700 = vmatpush1.msra.mxu0 0.0
  %701 = vmatprep.subr.mxu0 0.0
  %702 = vmatpush1.msra.mxu0 0.0
  %703 = vmatprep.subr.mxu0 0.0
  %704 = vmatpush1.msra.mxu0 0.0
  %705 = vmatprep.subr.mxu0 0.0
  %706 = vmatpush1.msra.mxu0 0.0
  %707 = vmatprep.subr.mxu0 0.0
  %708 = vmatpush1.msra.mxu0 0.0
  %709 = vmatprep.subr.mxu0 0.0
  %710 = vmatpush1.msra.mxu0 0.0
  %711 = vmatprep.subr.mxu0 0.0
  %712 = vmatpush1.msra.mxu0 0.0
  %713 = vmatprep.subr.mxu0 0.0
  %714 = vmatpush1.msra.mxu0 0.0
  %715 = vmatprep.subr.mxu0 0.0
  %716 = vmatpush1.msra.mxu0 0.0
  %717 = vmatprep.subr.mxu0 0.0
  %718 = vmatpush1.msra.mxu0 0.0
  %719 = vmatprep.subr.mxu0 0.0
  %720 = vmatpush1.msra.mxu0 0.0
  %721 = vmatprep.subr.mxu0 0.0
  %722 = vmatpush1.msra.mxu0 0.0
  %723 = vmatprep.subr.mxu0 0.0
  %724 = vmatpush1.msra.mxu0 0.0
  %725 = vmatprep.subr.mxu0 0.0
  %726 = vmatpush1.msra.mxu0 0.0
  %727 = vmatprep.subr.mxu0 0.0
  %728 = vmatpush1.msra.mxu0 0.0
  %729 = vmatprep.subr.mxu0 0.0
  %730 = vmatpush1.msra.mxu0 0.0
  %731 = vmatprep.subr.mxu0 0.0
  %732 = vmatpush1.msra.mxu0 0.0
  %733 = vmatprep.subr.mxu0 0.0
  %734 = vmatpush1.msra.mxu0 0.0
  %735 = vmatprep.subr.mxu0 0.0
  %736 = vmatpush1.msra.mxu0 0.0
  %737 = vmatprep.subr.mxu0 0.0
  %738 = vmatpush1.msra.mxu0 0.0
  %739 = vmatprep.subr.mxu0 0.0
  %740 = vmatpush1.msra.mxu0 0.0
  %741 = vmatprep.subr.mxu0 0.0
  %742 = vmatpush1.msra.mxu0 0.0
  %743 = vmatprep.subr.mxu0 0.0
  %744 = vmatpush1.msra.mxu0 0.0
  %745 = vmatprep.mubr.f32.mxu0 0.0
  %746 = vmatmul.mubr.f32.gmra.mrb[0].mxu0 %v601
  %v747 = vpop.f32.mrb[0].mxu0
  %v748 = vadd.f32 0.0, %v747
  %v749 = vpop.f32.mrb[0].mxu0
  %750 = vdwg.mxu0
  %751 = vmatprep.subr.mxu0 0.0
  %752 = vmatpush1.msra.mxu0 %v670
  %753 = vmatprep.subr.mxu0 0.0
  %754 = vmatpush1.msra.mxu0 0.0
  %755 = vmatprep.subr.mxu0 0.0
  %756 = vmatpush1.msra.mxu0 0.0
  %757 = vmatprep.subr.mxu0 0.0
  %758 = vmatpush1.msra.mxu0 0.0
  %759 = vmatprep.subr.mxu0 0.0
  %760 = vmatpush1.msra.mxu0 0.0
  %761 = vmatprep.subr.mxu0 0.0
  %762 = vmatpush1.msra.mxu0 0.0
  %763 = vmatprep.subr.mxu0 0.0
  %764 = vmatpush1.msra.mxu0 0.0
  %765 = vmatprep.subr.mxu0 0.0
  %766 = vmatpush1.msra.mxu0 0.0
  %767 = vmatprep.subr.mxu0 0.0
  %768 = vmatpush1.msra.mxu0 0.0
  %769 = vmatprep.subr.mxu0 0.0
  %770 = vmatpush1.msra.mxu0 0.0
  %771 = vmatprep.subr.mxu0 0.0
  %772 = vmatpush1.msra.mxu0 0.0
  %773 = vmatprep.subr.mxu0 0.0
  %774 = vmatpush1.msra.mxu0 0.0
  %775 = vmatprep.subr.mxu0 0.0
  %776 = vmatpush1.msra.mxu0 0.0
  %777 = vmatprep.subr.mxu0 0.0
  %778 = vmatpush1.msra.mxu0 0.0
  %779 = vmatprep.subr.mxu0 0.0
  %780 = vmatpush1.msra.mxu0 0.0
  %781 = vmatprep.subr.mxu0 0.0
  %782 = vmatpush1.msra.mxu0 0.0
  %783 = vmatprep.subr.mxu0 0.0
  %784 = vmatpush1.msra.mxu0 0.0
  %785 = vmatprep.subr.mxu0 0.0
  %786 = vmatpush1.msra.mxu0 0.0
  %787 = vmatprep.subr.mxu0 0.0
  %788 = vmatpush1.msra.mxu0 0.0
  %789 = vmatprep.subr.mxu0 0.0
  %790 = vmatpush1.msra.mxu0 0.0
  %791 = vmatprep.subr.mxu0 0.0
  %792 = vmatpush1.msra.mxu0 0.0
  %793 = vmatprep.subr.mxu0 0.0
  %794 = vmatpush1.msra.mxu0 0.0
  %795 = vmatprep.subr.mxu0 0.0
  %796 = vmatpush1.msra.mxu0 0.0
  %797 = vmatprep.subr.mxu0 0.0
  %798 = vmatpush1.msra.mxu0 0.0
  %799 = vmatprep.subr.mxu0 0.0
  %800 = vmatpush1.msra.mxu0 0.0
  %801 = vmatprep.subr.mxu0 0.0
  %802 = vmatpush1.msra.mxu0 0.0
  %803 = vmatprep.subr.mxu0 0.0
  %804 = vmatpush1.msra.mxu0 0.0
  %805 = vmatprep.subr.mxu0 0.0
  %806 = vmatpush1.msra.mxu0 0.0
  %807 = vmatprep.subr.mxu0 0.0
  %808 = vmatpush1.msra.mxu0 0.0
  %809 = vmatprep.subr.mxu0 0.0
  %810 = vmatpush1.msra.mxu0 0.0
  %811 = vmatprep.subr.mxu0 0.0
  %812 = vmatpush1.msra.mxu0 0.0
  %813 = vmatprep.subr.mxu0 0.0
  %814 = vmatpush1.msra.mxu0 0.0
  %815 = vmatprep.mubr.f32.mxu0 0.0
  %816 = vmatmul.mubr.f32.gmra.mrb[0].mxu0 %v371
  %v817 = vpop.f32.mrb[0].mxu0
  %v818 = vadd.f32 0.0, %v817
  %v819 = vpop.f32.mrb[0].mxu0
  %820 = vdwg.mxu0
  %821 = vmatprep.subr.mxu0 0.0
  %822 = vmatpush1.msra.mxu0 %v673
  %823 = vmatprep.subr.mxu0 0.0
  %824 = vmatpush1.msra.mxu0 %v674
  %825 = vmatprep.subr.mxu0 0.0
  %826 = vmatpush1.msra.mxu0 %v675
  %827 = vmatprep.subr.mxu0 0.0
  %828 = vmatpush1.msra.mxu0 %v676
  %829 = vmatprep.subr.mxu0 0.0
  %830 = vmatpush1.msra.mxu0 0.0
  %831 = vmatprep.subr.mxu0 0.0
  %832 = vmatpush1.msra.mxu0 0.0
  %833 = vmatprep.subr.mxu0 0.0
  %834 = vmatpush1.msra.mxu0 0.0
  %835 = vmatprep.subr.mxu0 0.0
  %836 = vmatpush1.msra.mxu0 0.0
  %837 = vmatprep.subr.mxu0 0.0
  %838 = vmatpush1.msra.mxu0 0.0
  %839 = vmatprep.subr.mxu0 0.0
  %840 = vmatpush1.msra.mxu0 0.0
  %841 = vmatprep.subr.mxu0 0.0
  %842 = vmatpush1.msra.mxu0 0.0
  %843 = vmatprep.subr.mxu0 0.0
  %844 = vmatpush1.msra.mxu0 0.0
  %845 = vmatprep.subr.mxu0 0.0
  %846 = vmatpush1.msra.mxu0 0.0
  %847 = vmatprep.subr.mxu0 0.0
  %848 = vmatpush1.msra.mxu0 0.0
  %849 = vmatprep.subr.mxu0 0.0
  %850 = vmatpush1.msra.mxu0 0.0
  %851 = vmatprep.subr.mxu0 0.0
  %852 = vmatpush1.msra.mxu0 0.0
  %853 = vmatprep.subr.mxu0 0.0
  %854 = vmatpush1.msra.mxu0 0.0
  %855 = vmatprep.subr.mxu0 0.0
  %856 = vmatpush1.msra.mxu0 0.0
  %857 = vmatprep.subr.mxu0 0.0
  %858 = vmatpush1.msra.mxu0 0.0
  %859 = vmatprep.subr.mxu0 0.0
  %860 = vmatpush1.msra.mxu0 0.0
  %861 = vmatprep.subr.mxu0 0.0
  %862 = vmatpush1.msra.mxu0 0.0
  %863 = vmatprep.subr.mxu0 0.0
  %864 = vmatpush1.msra.mxu0 0.0
  %865 = vmatprep.subr.mxu0 0.0
  %866 = vmatpush1.msra.mxu0 0.0
  %867 = vmatprep.subr.mxu0 0.0
  %868 = vmatpush1.msra.mxu0 0.0
  %869 = vmatprep.subr.mxu0 0.0
  %870 = vmatpush1.msra.mxu0 0.0
  %871 = vmatprep.subr.mxu0 0.0
  %872 = vmatpush1.msra.mxu0 0.0
  %873 = vmatprep.subr.mxu0 0.0
  %874 = vmatpush1.msra.mxu0 0.0
  %875 = vmatprep.subr.mxu0 0.0
  %876 = vmatpush1.msra.mxu0 0.0
  %877 = vmatprep.subr.mxu0 0.0
  %878 = vmatpush1.msra.mxu0 0.0
  %879 = vmatprep.subr.mxu0 0.0
  %880 = vmatpush1.msra.mxu0 0.0
  %881 = vmatprep.subr.mxu0 0.0
  %882 = vmatpush1.msra.mxu0 0.0
  %883 = vmatprep.subr.mxu0 0.0
  %884 = vmatpush1.msra.mxu0 0.0
  %885 = vmatprep.mubr.f32.mxu0 0.0
  %886 = vmatmul.mubr.f32.gmra.mrb[0].mxu0 %v601
  %v887 = vpop.f32.mrb[0].mxu0
  %v888 = vadd.f32 %v818, %v887
  %v889 = vpop.f32.mrb[0].mxu0
  %890 = vdwg.mxu0
  %891 = vmatprep.subr.mxu0 0.0
  %892 = vmatpush1.msra.mxu0 %v748
  %893 = vmatprep.subr.mxu0 0.0
  %894 = vmatpush1.msra.mxu0 0.0
  %895 = vmatprep.subr.mxu0 0.0
  %896 = vmatpush1.msra.mxu0 0.0
  %897 = vmatprep.subr.mxu0 0.0
  %898 = vmatpush1.msra.mxu0 0.0
  %899 = vmatprep.subr.mxu0 0.0
  %900 = vmatpush1.msra.mxu0 0.0
  %901 = vmatprep.subr.mxu0 0.0
  %902 = vmatpush1.msra.mxu0 0.0
  %903 = vmatprep.subr.mxu0 0.0
  %904 = vmatpush1.msra.mxu0 0.0
  %905 = vmatprep.subr.mxu0 0.0
  %906 = vmatpush1.msra.mxu0 0.0
  %907 = vmatprep.subr.mxu0 0.0
  %908 = vmatpush1.msra.mxu0 0.0
  %909 = vmatprep.subr.mxu0 0.0
  %910 = vmatpush1.msra.mxu0 0.0
  %911 = vmatprep.subr.mxu0 0.0
  %912 = vmatpush1.msra.mxu0 0.0
  %913 = vmatprep.subr.mxu0 0.0
  %914 = vmatpush1.msra.mxu0 0.0
  %915 = vmatprep.subr.mxu0 0.0
  %916 = vmatpush1.msra.mxu0 0.0
  %917 = vmatprep.subr.mxu0 0.0
  %918 = vmatpush1.msra.mxu0 0.0
  %919 = vmatprep.subr.mxu0 0.0
  %920 = vmatpush1.msra.mxu0 0.0
  %921 = vmatprep.subr.mxu0 0.0
  %922 = vmatpush1.msra.mxu0 0.0
  %923 = vmatprep.subr.mxu0 0.0
  %924 = vmatpush1.msra.mxu0 0.0
  %925 = vmatprep.subr.mxu0 0.0
  %926 = vmatpush1.msra.mxu0 0.0
  %927 = vmatprep.subr.mxu0 0.0
  %928 = vmatpush1.msra.mxu0 0.0
  %929 = vmatprep.subr.mxu0 0.0
  %930 = vmatpush1.msra.mxu0 0.0
  %931 = vmatprep.subr.mxu0 0.0
  %932 = vmatpush1.msra.mxu0 0.0
  %933 = vmatprep.subr.mxu0 0.0
  %934 = vmatpush1.msra.mxu0 0.0
  %935 = vmatprep.subr.mxu0 0.0
  %936 = vmatpush1.msra.mxu0 0.0
  %937 = vmatprep.subr.mxu0 0.0
  %938 = vmatpush1.msra.mxu0 0.0
  %939 = vmatprep.subr.mxu0 0.0
  %940 = vmatpush1.msra.mxu0 0.0
  %941 = vmatprep.subr.mxu0 0.0
  %942 = vmatpush1.msra.mxu0 0.0
  %943 = vmatprep.subr.mxu0 0.0
  %944 = vmatpush1.msra.mxu0 0.0
  %945 = vmatprep.subr.mxu0 0.0
  %946 = vmatpush1.msra.mxu0 0.0
  %947 = vmatprep.subr.mxu0 0.0
  %948 = vmatpush1.msra.mxu0 0.0
  %949 = vmatprep.subr.mxu0 0.0
  %950 = vmatpush1.msra.mxu0 0.0
  %951 = vmatprep.subr.mxu0 0.0
  %952 = vmatpush1.msra.mxu0 0.0
  %953 = vmatprep.subr.mxu0 0.0
  %954 = vmatpush1.msra.mxu0 0.0
  %955 = vmatprep.mubr.f32.mxu0 0.0
  %956 = vmatmul.mubr.f32.gmra.mrb[0].mxu0 %v514
  %v957 = vpop.f32.mrb[0].mxu0
  %v958 = vadd.f32 0.0, %v957
  %v959 = vpop.f32.mrb[0].mxu0
  %960 = vdwg.mxu0
  %v961 = vadd.f32 %v888, %v958
  %v962 = vld [vmem:[%s10] sm:$0x1]
  %v964 = vlaneseq
  %v965 = vshrl.u32 %v964, 7
  %v966 = vsub.s32 0, %v965
  %v967 = vrot.slane %v962, %v966
  %v969 = vadd.f32 %v961, %v967
  %v970 = vmax.f32 %v969, 0.0
  %971 = vst.msk [vmem:[%s13] sm:$0xff] %vm217, %v970
  // Predicated region
  $region54: #{planar_flow_density_forward.6} parent=0 // pred_check
    _
  $region55: #{planar_flow_density_forward.6} parent=0 // pred_check_branch
    %973 = sbr.rel (0) target = $region57
  $region56: #{planar_flow_density_forward.6} parent=0 // pred_region
    _
  $region57: #{planar_flow_density_forward.6} parent=0 // pred_fallthru
    _
  // Predicated region
  $region58: #{planar_flow_density_forward.6} parent=0 // pred_check
    _
  $region59: #{planar_flow_density_forward.6} parent=0 // pred_check_branch
    %975 = sbr.rel (0) target = $region61
  $region60: #{planar_flow_density_forward.6} parent=0 // pred_region
    _
  $region61: #{planar_flow_density_forward.6} parent=0 // pred_fallthru
    _

// kernel: planar_flow_density_forward.7
$region0: #{planar_flow_density_forward.7}
  #allocation0 [shape = 'u32[]', space=smem, size = 0x4, offset = 0x4, fixed_abs, tag = 'smem constant byte address 0x4 - core index']
  #allocation1 [shape = 'u32[144,128]{1,0:T(1,128)}', space=vmem, size = 0x12000, scoped, tag = 'internal scratch']
  %s0 = inlined_call_operand.vmem [shape: f32[8,32], index: 0, kind: input, shape index: {}]
  %s1 = inlined_call_operand.vmem [shape: f32[2,8], index: 1, kind: input, shape index: {}]
  %s2 = inlined_call_operand.vmem [shape: f32[32,8], index: 2, kind: input, shape index: {}]
  %s3 = inlined_call_operand.vmem [shape: f32[8,64], index: 3, kind: input, shape index: {}]
  %s4 = inlined_call_operand.vmem [shape: f32[1,64], index: 4, kind: input, shape index: {}]
  %s5 = inlined_call_operand.vmem [shape: f32[52,52], index: 5, kind: input, shape index: {}]
  %s6 = inlined_call_operand.vmem [shape: f32[1,52], index: 6, kind: input, shape index: {}]
  %s7 = inlined_call_operand.vmem [shape: f32[1,52], index: 7, kind: input, shape index: {}]
  %s8 = inlined_call_operand.vmem [shape: f32[1,52], index: 8, kind: input, shape index: {}]
  %s9 = inlined_call_operand.vmem [shape: f32[2,6], index: 9, kind: input, shape index: {}]
  %s10 = inlined_call_operand.vmem [shape: f32[2,25], index: 10, kind: output, shape index: {}]
  %s11 = sld [smem:[#allocation0]]
  $region50: #{planar_flow_density_forward.7} parent=0
    _
  %s13 = ssub.s32 1, %s11
  %s14 = scalar_select 0, %s13, %s11
  // Predicated region
  $region2: #{planar_flow_density_forward.7} parent=0 // pred_check
    _
  $region3: #{planar_flow_density_forward.7} parent=0 // pred_check_branch
    %16 = sbr.rel (0) target = $region5
  $region4: #{planar_flow_density_forward.7} parent=0 // pred_region
    _
  $region5: #{planar_flow_density_forward.7} parent=0 // pred_fallthru
    _
  // Predicated region
  $region6: #{planar_flow_density_forward.7} parent=0 // pred_check
    _
  $region7: #{planar_flow_density_forward.7} parent=0 // pred_check_branch
    %18 = sbr.rel (0) target = $region9
  $region8: #{planar_flow_density_forward.7} parent=0 // pred_region
    _
  $region9: #{planar_flow_density_forward.7} parent=0 // pred_fallthru
    _
  // Predicated region
  $region10: #{planar_flow_density_forward.7} parent=0 // pred_check
    _
  $region11: #{planar_flow_density_forward.7} parent=0 // pred_check_branch
    %20 = sbr.rel (0) target = $region13
  $region12: #{planar_flow_density_forward.7} parent=0 // pred_region
    _
  $region13: #{planar_flow_density_forward.7} parent=0 // pred_fallthru
    _
  // Predicated region
  $region14: #{planar_flow_density_forward.7} parent=0 // pred_check
    _
  $region15: #{planar_flow_density_forward.7} parent=0 // pred_check_branch
    %22 = sbr.rel (0) target = $region17
  $region16: #{planar_flow_density_forward.7} parent=0 // pred_region
    _
  $region17: #{planar_flow_density_forward.7} parent=0 // pred_fallthru
    _
  // Predicated region
  $region18: #{planar_flow_density_forward.7} parent=0 // pred_check
    _
  $region19: #{planar_flow_density_forward.7} parent=0 // pred_check_branch
    %24 = sbr.rel (0) target = $region21
  $region20: #{planar_flow_density_forward.7} parent=0 // pred_region
    _
  $region21: #{planar_flow_density_forward.7} parent=0 // pred_fallthru
    _
  // Predicated region
  $region22: #{planar_flow_density_forward.7} parent=0 // pred_check
    _
  $region23: #{planar_flow_density_forward.7} parent=0 // pred_check_branch
    %26 = sbr.rel (0) target = $region25
  $region24: #{planar_flow_density_forward.7} parent=0 // pred_region
    _
  $region25: #{planar_flow_density_forward.7} parent=0 // pred_fallthru
    _
  // Predicated region
  $region26: #{planar_flow_density_forward.7} parent=0 // pred_check
    _
  $region27: #{planar_flow_density_forward.7} parent=0 // pred_check_branch
    %28 = sbr.rel (0) target = $region29
  $region28: #{planar_flow_density_forward.7} parent=0 // pred_region
    _
  $region29: #{planar_flow_density_forward.7} parent=0 // pred_fallthru
    _
  // Predicated region
  $region30: #{planar_flow_density_forward.7} parent=0 // pred_check
    _
  $region31: #{planar_flow_density_forward.7} parent=0 // pred_check_branch
    %30 = sbr.rel (0) target = $region33
  $region32: #{planar_flow_density_forward.7} parent=0 // pred_region
    _
  $region33: #{planar_flow_density_forward.7} parent=0 // pred_fallthru
    _
  // Predicated region
  $region34: #{planar_flow_density_forward.7} parent=0 // pred_check
    _
  $region35: #{planar_flow_density_forward.7} parent=0 // pred_check_branch
    %32 = sbr.rel (0) target = $region37
  $region36: #{planar_flow_density_forward.7} parent=0 // pred_region
    _
  $region37: #{planar_flow_density_forward.7} parent=0 // pred_fallthru
    _
  // Predicated region
  $region38: #{planar_flow_density_forward.7} parent=0 // pred_check
    _
  $region39: #{planar_flow_density_forward.7} parent=0 // pred_check_branch
    %34 = sbr.rel (0) target = $region41
  $region40: #{planar_flow_density_forward.7} parent=0 // pred_region
    _
  $region41: #{planar_flow_density_forward.7} parent=0 // pred_fallthru
    _
  %v35 = vld [vmem:[%s0] sm:$0xff]
  %v36 = vld [vmem:[%s1] sm:$0x3]
  %v37 = vld [vmem:[%s2] sm:$0xff]
  %v38 = vld [vmem:[%s2 + $0x8] sm:$0xff]
  %v39 = vld [vmem:[%s2 + $0x10] sm:$0xff]
  %v40 = vld [vmem:[%s2 + $0x18] sm:$0xff]
  %vm41 = vcmask 261120
  %v43 = vsel %vm41, %v35, 0
  %45 = vmatprep.subr.mxu0 0.0
  %46 = vmatpush1.msra.mxu0 %v37
  %47 = vmatprep.subr.mxu0 0.0
  %48 = vmatpush1.msra.mxu0 %v38
  %49 = vmatprep.subr.mxu0 0.0
  %50 = vmatpush1.msra.mxu0 %v39
  %51 = vmatprep.subr.mxu0 0.0
  %52 = vmatpush1.msra.mxu0 %v40
  %53 = vmatprep.subr.mxu0 0.0
  %54 = vmatpush1.msra.mxu0 0.0
  %55 = vmatprep.subr.mxu0 0.0
  %56 = vmatpush1.msra.mxu0 0.0
  %57 = vmatprep.subr.mxu0 0.0
  %58 = vmatpush1.msra.mxu0 0.0
  %59 = vmatprep.subr.mxu0 0.0
  %60 = vmatpush1.msra.mxu0 0.0
  %61 = vmatprep.subr.mxu0 0.0
  %62 = vmatpush1.msra.mxu0 0.0
  %63 = vmatprep.subr.mxu0 0.0
  %64 = vmatpush1.msra.mxu0 0.0
  %65 = vmatprep.subr.mxu0 0.0
  %66 = vmatpush1.msra.mxu0 0.0
  %67 = vmatprep.subr.mxu0 0.0
  %68 = vmatpush1.msra.mxu0 0.0
  %69 = vmatprep.subr.mxu0 0.0
  %70 = vmatpush1.msra.mxu0 0.0
  %71 = vmatprep.subr.mxu0 0.0
  %72 = vmatpush1.msra.mxu0 0.0
  %73 = vmatprep.subr.mxu0 0.0
  %74 = vmatpush1.msra.mxu0 0.0
  %75 = vmatprep.subr.mxu0 0.0
  %76 = vmatpush1.msra.mxu0 0.0
  %77 = vmatprep.subr.mxu0 0.0
  %78 = vmatpush1.msra.mxu0 0.0
  %79 = vmatprep.subr.mxu0 0.0
  %80 = vmatpush1.msra.mxu0 0.0
  %81 = vmatprep.subr.mxu0 0.0
  %82 = vmatpush1.msra.mxu0 0.0
  %83 = vmatprep.subr.mxu0 0.0
  %84 = vmatpush1.msra.mxu0 0.0
  %85 = vmatprep.subr.mxu0 0.0
  %86 = vmatpush1.msra.mxu0 0.0
  %87 = vmatprep.subr.mxu0 0.0
  %88 = vmatpush1.msra.mxu0 0.0
  %89 = vmatprep.subr.mxu0 0.0
  %90 = vmatpush1.msra.mxu0 0.0
  %91 = vmatprep.subr.mxu0 0.0
  %92 = vmatpush1.msra.mxu0 0.0
  %93 = vmatprep.subr.mxu0 0.0
  %94 = vmatpush1.msra.mxu0 0.0
  %95 = vmatprep.subr.mxu0 0.0
  %96 = vmatpush1.msra.mxu0 0.0
  %97 = vmatprep.subr.mxu0 0.0
  %98 = vmatpush1.msra.mxu0 0.0
  %99 = vmatprep.subr.mxu0 0.0
  %100 = vmatpush1.msra.mxu0 0.0
  %101 = vmatprep.subr.mxu0 0.0
  %102 = vmatpush1.msra.mxu0 0.0
  %103 = vmatprep.subr.mxu0 0.0
  %104 = vmatpush1.msra.mxu0 0.0
  %105 = vmatprep.subr.mxu0 0.0
  %106 = vmatpush1.msra.mxu0 0.0
  %107 = vmatprep.subr.mxu0 0.0
  %108 = vmatpush1.msra.mxu0 0.0
  %109 = vmatprep.mubr.f32.mxu0 0.0
  %110 = vmatmul.mubr.f32.gmra.mrb[0].mxu0 %v43
  %v111 = vpop.f32.mrb[0].mxu0
  %v112 = vadd.f32 0.0, %v111
  %v113 = vpop.f32.mrb[0].mxu0
  %114 = vdwg.mxu0
  %vm115 = vcmask 64512
  %v117 = vsel %vm115, %v36, 0
  %119 = vmatprep.subr.mxu0 0.0
  %120 = vmatpush1.msra.mxu0 %v112
  %121 = vmatprep.subr.mxu0 0.0
  %122 = vmatpush1.msra.mxu0 0.0
  %123 = vmatprep.subr.mxu0 0.0
  %124 = vmatpush1.msra.mxu0 0.0
  %125 = vmatprep.subr.mxu0 0.0
  %126 = vmatpush1.msra.mxu0 0.0
  %127 = vmatprep.subr.mxu0 0.0
  %128 = vmatpush1.msra.mxu0 0.0
  %129 = vmatprep.subr.mxu0 0.0
  %130 = vmatpush1.msra.mxu0 0.0
  %131 = vmatprep.subr.mxu0 0.0
  %132 = vmatpush1.msra.mxu0 0.0
  %133 = vmatprep.subr.mxu0 0.0
  %134 = vmatpush1.msra.mxu0 0.0
  %135 = vmatprep.subr.mxu0 0.0
  %136 = vmatpush1.msra.mxu0 0.0
  %137 = vmatprep.subr.mxu0 0.0
  %138 = vmatpush1.msra.mxu0 0.0
  %139 = vmatprep.subr.mxu0 0.0
  %140 = vmatpush1.msra.mxu0 0.0
  %141 = vmatprep.subr.mxu0 0.0
  %142 = vmatpush1.msra.mxu0 0.0
  %143 = vmatprep.subr.mxu0 0.0
  %144 = vmatpush1.msra.mxu0 0.0
  %145 = vmatprep.subr.mxu0 0.0
  %146 = vmatpush1.msra.mxu0 0.0
  %147 = vmatprep.subr.mxu0 0.0
  %148 = vmatpush1.msra.mxu0 0.0
  %149 = vmatprep.subr.mxu0 0.0
  %150 = vmatpush1.msra.mxu0 0.0
  %151 = vmatprep.subr.mxu0 0.0
  %152 = vmatpush1.msra.mxu0 0.0
  %153 = vmatprep.subr.mxu0 0.0
  %154 = vmatpush1.msra.mxu0 0.0
  %155 = vmatprep.subr.mxu0 0.0
  %156 = vmatpush1.msra.mxu0 0.0
  %157 = vmatprep.subr.mxu0 0.0
  %158 = vmatpush1.msra.mxu0 0.0
  %159 = vmatprep.subr.mxu0 0.0
  %160 = vmatpush1.msra.mxu0 0.0
  %161 = vmatprep.subr.mxu0 0.0
  %162 = vmatpush1.msra.mxu0 0.0
  %163 = vmatprep.subr.mxu0 0.0
  %164 = vmatpush1.msra.mxu0 0.0
  %165 = vmatprep.subr.mxu0 0.0
  %166 = vmatpush1.msra.mxu0 0.0
  %167 = vmatprep.subr.mxu0 0.0
  %168 = vmatpush1.msra.mxu0 0.0
  %169 = vmatprep.subr.mxu0 0.0
  %170 = vmatpush1.msra.mxu0 0.0
  %171 = vmatprep.subr.mxu0 0.0
  %172 = vmatpush1.msra.mxu0 0.0
  %173 = vmatprep.subr.mxu0 0.0
  %174 = vmatpush1.msra.mxu0 0.0
  %175 = vmatprep.subr.mxu0 0.0
  %176 = vmatpush1.msra.mxu0 0.0
  %177 = vmatprep.subr.mxu0 0.0
  %178 = vmatpush1.msra.mxu0 0.0
  %179 = vmatprep.subr.mxu0 0.0
  %180 = vmatpush1.msra.mxu0 0.0
  %181 = vmatprep.subr.mxu0 0.0
  %182 = vmatpush1.msra.mxu0 0.0
  %183 = vmatprep.mubr.f32.mxu0 0.0
  %184 = vmatmul.mubr.f32.gmra.mrb[0].mxu0 %v117
  %v185 = vpop.f32.mrb[0].mxu0
  %v186 = vadd.f32 0.0, %v185
  %v187 = vpop.f32.mrb[0].mxu0
  %188 = vdwg.mxu0
  %v189 = vld [vmem:[%s3] sm:$0xff]
  %v190 = vld [vmem:[%s4] sm:$0x1]
  %v192 = vlaneseq
  %v193 = vshrl.u32 %v192, 7
  %v194 = vsub.s32 0, %v193
  %v195 = vrot.slane %v190, %v194
  %v198 = vsel %vm115, %v186, 0
  %200 = vmatprep.subr.mxu0 0.0
  %201 = vmatpush1.msra.mxu0 %v189
  %202 = vmatprep.subr.mxu0 0.0
  %203 = vmatpush1.msra.mxu0 0.0
  %204 = vmatprep.subr.mxu0 0.0
  %205 = vmatpush1.msra.mxu0 0.0
  %206 = vmatprep.subr.mxu0 0.0
  %207 = vmatpush1.msra.mxu0 0.0
  %208 = vmatprep.subr.mxu0 0.0
  %209 = vmatpush1.msra.mxu0 0.0
  %210 = vmatprep.subr.mxu0 0.0
  %211 = vmatpush1.msra.mxu0 0.0
  %212 = vmatprep.subr.mxu0 0.0
  %213 = vmatpush1.msra.mxu0 0.0
  %214 = vmatprep.subr.mxu0 0.0
  %215 = vmatpush1.msra.mxu0 0.0
  %216 = vmatprep.subr.mxu0 0.0
  %217 = vmatpush1.msra.mxu0 0.0
  %218 = vmatprep.subr.mxu0 0.0
  %219 = vmatpush1.msra.mxu0 0.0
  %220 = vmatprep.subr.mxu0 0.0
  %221 = vmatpush1.msra.mxu0 0.0
  %222 = vmatprep.subr.mxu0 0.0
  %223 = vmatpush1.msra.mxu0 0.0
  %224 = vmatprep.subr.mxu0 0.0
  %225 = vmatpush1.msra.mxu0 0.0
  %226 = vmatprep.subr.mxu0 0.0
  %227 = vmatpush1.msra.mxu0 0.0
  %228 = vmatprep.subr.mxu0 0.0
  %229 = vmatpush1.msra.mxu0 0.0
  %230 = vmatprep.subr.mxu0 0.0
  %231 = vmatpush1.msra.mxu0 0.0
  %232 = vmatprep.subr.mxu0 0.0
  %233 = vmatpush1.msra.mxu0 0.0
  %234 = vmatprep.subr.mxu0 0.0
  %235 = vmatpush1.msra.mxu0 0.0
  %236 = vmatprep.subr.mxu0 0.0
  %237 = vmatpush1.msra.mxu0 0.0
  %238 = vmatprep.subr.mxu0 0.0
  %239 = vmatpush1.msra.mxu0 0.0
  %240 = vmatprep.subr.mxu0 0.0
  %241 = vmatpush1.msra.mxu0 0.0
  %242 = vmatprep.subr.mxu0 0.0
  %243 = vmatpush1.msra.mxu0 0.0
  %244 = vmatprep.subr.mxu0 0.0
  %245 = vmatpush1.msra.mxu0 0.0
  %246 = vmatprep.subr.mxu0 0.0
  %247 = vmatpush1.msra.mxu0 0.0
  %248 = vmatprep.subr.mxu0 0.0
  %249 = vmatpush1.msra.mxu0 0.0
  %250 = vmatprep.subr.mxu0 0.0
  %251 = vmatpush1.msra.mxu0 0.0
  %252 = vmatprep.subr.mxu0 0.0
  %253 = vmatpush1.msra.mxu0 0.0
  %254 = vmatprep.subr.mxu0 0.0
  %255 = vmatpush1.msra.mxu0 0.0
  %256 = vmatprep.subr.mxu0 0.0
  %257 = vmatpush1.msra.mxu0 0.0
  %258 = vmatprep.subr.mxu0 0.0
  %259 = vmatpush1.msra.mxu0 0.0
  %260 = vmatprep.subr.mxu0 0.0
  %261 = vmatpush1.msra.mxu0 0.0
  %262 = vmatprep.subr.mxu0 0.0
  %263 = vmatpush1.msra.mxu0 0.0
  %264 = vmatprep.mubr.f32.mxu0 0.0
  %265 = vmatmul.mubr.f32.gmra.mrb[0].mxu0 %v198
  %v266 = vpop.f32.mrb[0].mxu0
  %v267 = vadd.f32 %v195, %v266
  %v268 = vpop.f32.mrb[0].mxu0
  %269 = vdwg.mxu0
  %v270 = vmax.f32 %v267, 0.0
  %v271 = vld [vmem:[%s5] sm:$0xff]
  %v272 = vld [vmem:[%s5 + $0x8] sm:$0xff]
  %v273 = vld [vmem:[%s5 + $0x10] sm:$0xff]
  %v274 = vld [vmem:[%s5 + $0x18] sm:$0xff]
  %v275 = vld [vmem:[%s5 + $0x20] sm:$0xff]
  %v276 = vld [vmem:[%s5 + $0x28] sm:$0xff]
  %v277 = vld [vmem:[%s5 + $0x30] sm:$0xf]
  %v278 = vld [vmem:[%s6] sm:$0x1]
  %v280 = vlaneseq
  %v281 = vshrl.u32 %v280, 7
  %v282 = vsub.s32 0, %v281
  %v283 = vrot.slane %v278, %v282
  %286 = vrot.lane.b32.xlu0 %v270, 116
  %v287 = vpop.permute.xlu0 %286
  %vm288 = vcmask 424960
  %v289 = vsel %vm288, %v287, 0
  %vm291 = vcmask 1043456
  %v293 = vsel %vm291, %v277, 0
  %295 = vmatprep.subr.mxu0 0.0
  %296 = vmatpush1.msra.mxu0 %v271
  %297 = vmatprep.subr.mxu0 0.0
  %298 = vmatpush1.msra.mxu0 %v272
  %299 = vmatprep.subr.mxu0 0.0
  %300 = vmatpush1.msra.mxu0 %v273
  %301 = vmatprep.subr.mxu0 0.0
  %302 = vmatpush1.msra.mxu0 %v274
  %303 = vmatprep.subr.mxu0 0.0
  %304 = vmatpush1.msra.mxu0 %v275
  %305 = vmatprep.subr.mxu0 0.0
  %306 = vmatpush1.msra.mxu0 %v276
  %307 = vmatprep.subr.mxu0 0.0
  %308 = vmatpush1.msra.mxu0 %v293
  %309 = vmatprep.subr.mxu0 0.0
  %310 = vmatpush1.msra.mxu0 0.0
  %311 = vmatprep.subr.mxu0 0.0
  %312 = vmatpush1.msra.mxu0 0.0
  %313 = vmatprep.subr.mxu0 0.0
  %314 = vmatpush1.msra.mxu0 0.0
  %315 = vmatprep.subr.mxu0 0.0
  %316 = vmatpush1.msra.mxu0 0.0
  %317 = vmatprep.subr.mxu0 0.0
  %318 = vmatpush1.msra.mxu0 0.0
  %319 = vmatprep.subr.mxu0 0.0
  %320 = vmatpush1.msra.mxu0 0.0
  %321 = vmatprep.subr.mxu0 0.0
  %322 = vmatpush1.msra.mxu0 0.0
  %323 = vmatprep.subr.mxu0 0.0
  %324 = vmatpush1.msra.mxu0 0.0
  %325 = vmatprep.subr.mxu0 0.0
  %326 = vmatpush1.msra.mxu0 0.0
  %327 = vmatprep.subr.mxu0 0.0
  %328 = vmatpush1.msra.mxu0 0.0
  %329 = vmatprep.subr.mxu0 0.0
  %330 = vmatpush1.msra.mxu0 0.0
  %331 = vmatprep.subr.mxu0 0.0
  %332 = vmatpush1.msra.mxu0 0.0
  %333 = vmatprep.subr.mxu0 0.0
  %334 = vmatpush1.msra.mxu0 0.0
  %335 = vmatprep.subr.mxu0 0.0
  %336 = vmatpush1.msra.mxu0 0.0
  %337 = vmatprep.subr.mxu0 0.0
  %338 = vmatpush1.msra.mxu0 0.0
  %339 = vmatprep.subr.mxu0 0.0
  %340 = vmatpush1.msra.mxu0 0.0
  %341 = vmatprep.subr.mxu0 0.0
  %342 = vmatpush1.msra.mxu0 0.0
  %343 = vmatprep.subr.mxu0 0.0
  %344 = vmatpush1.msra.mxu0 0.0
  %345 = vmatprep.subr.mxu0 0.0
  %346 = vmatpush1.msra.mxu0 0.0
  %347 = vmatprep.subr.mxu0 0.0
  %348 = vmatpush1.msra.mxu0 0.0
  %349 = vmatprep.subr.mxu0 0.0
  %350 = vmatpush1.msra.mxu0 0.0
  %351 = vmatprep.subr.mxu0 0.0
  %352 = vmatpush1.msra.mxu0 0.0
  %353 = vmatprep.subr.mxu0 0.0
  %354 = vmatpush1.msra.mxu0 0.0
  %355 = vmatprep.subr.mxu0 0.0
  %356 = vmatpush1.msra.mxu0 0.0
  %357 = vmatprep.subr.mxu0 0.0
  %358 = vmatpush1.msra.mxu0 0.0
  %359 = vmatprep.mubr.f32.mxu0 0.0
  %360 = vmatmul.mubr.f32.gmra.mrb[0].mxu0 %v289
  %v361 = vpop.f32.mrb[0].mxu0
  %v362 = vadd.f32 %v283, %v361
  %v363 = vpop.f32.mrb[0].mxu0
  %364 = vdwg.mxu0
  %vm365 = vcmask 418816
  %v366 = vsel %vm365, %v362, 0.0
  %v367 = vrot.slane %v366, 4
  %v368 = vadd.f32 %v366, %v367
  %v369 = vrot.slane %v368, 2
  %v370 = vadd.f32 %v368, %v369
  %v371 = vrot.slane %v370, 1
  %v372 = vadd.f32 %v370, %v371
  %v373 = vrcp.pop 2.0
  %v374 = vmul.f32 %v372, %v373
  %v375 = vsub.f32 %v362, %v374
  %v376 = vmul.f32 %v375, %v375
  %v377 = vsel %vm365, %v376, 0.0
  %v378 = vrot.slane %v377, 4
  %v379 = vadd.f32 %v377, %v378
  %v380 = vrot.slane %v379, 2
  %v381 = vadd.f32 %v379, %v380
  %v382 = vrot.slane %v381, 1
  %v383 = vadd.f32 %v381, %v382
  %v384 = vmul.f32 %v383, %v373
  %v385 = vadd.f32 %v384, 1e-05
  %v386 = vrsqrt.pop %v385
  %v387 = vmul.f32 %v375, %v386
  %v388 = vld [vmem:[%s7] sm:$0x1]
  %v390 = vlaneseq
  %v391 = vshrl.u32 %v390, 7
  %v392 = vsub.s32 0, %v391
  %v393 = vrot.slane %v388, %v392
  %v395 = vmul.f32 %v387, %v393
  %v396 = vld [vmem:[%s8] sm:$0x1]
  %v398 = vlaneseq
  %v399 = vshrl.u32 %v398, 7
  %v400 = vsub.s32 0, %v399
  %v401 = vrot.slane %v396, %v400
  %v403 = vadd.f32 %v395, %v401
  %v404 = vmul.f32 %v267, 1.442695
  %v405 = vpow.pop %v404
  %v406 = vld [vmem:[%s9] sm:$0x3]
  %408 = vrot.lane.b32.xlu0 %v406, 6
  %v409 = vpop.permute.xlu0 %408
  %v411 = vmul.f32 %v405, %v409
  %413 = vrot.lane.b32.xlu0 %v411, 122
  %v414 = vpop.permute.xlu0 %413
  %v416 = vadd.f32 %v267, %v414
  %418 = vrot.lane.b32.xlu0 %v403, 24
  %v419 = vpop.permute.xlu0 %418
  %v421 = vmul.f32 %v403, %v419
  %423 = vrot.lane.b32.xlu0 %v421, 104
  %v424 = vpop.permute.xlu0 %423
  %vm426 = vcmask 41984
  %v427 = vsel %vm426, %v424, 0.0
  %428 = vadd.xlane.f32.xlu0 %v427
  %v429 = vpop.xlane.xlu0 %428
  %v430 = vmax.f32 %v429, 0.0
  %v431 = vand.u32 2147483647, %v429
  %v432 = vsub.f32 0.0, %v431
  %v433 = vmul.f32 %v432, 1.442695
  %v434 = vpow.pop %v433
  %v435 = vadd.f32 %v434, 1.0
  %v436 = vlog2.pop %v435
  %v437 = vmul.f32 %v436, 0.6931472
  %v438 = vmul.f32 -0.5, %v434
  %v439 = vadd.f32 %v438, 1.0
  %v440 = vmul.f32 %v439, %v434
  %v441 = vand.u32 2147483647, %v434
  %vm442 = vcmp.lt.f32.partialorder %v441, 0.0004427343
  %v443 = vsel %vm442, %v440, %v437
  %v444 = vadd.f32 %v430, %v443
  %v445 = vadd.f32 %v444, -1.0
  %v446 = vmul.f32 %v403, %v403
  %448 = vrot.lane.b32.xlu0 %v446, 104
  %v449 = vpop.permute.xlu0 %448
  %v451 = vsel %vm426, %v449, 0.0
  %452 = vadd.xlane.f32.xlu0 %v451
  %v453 = vpop.xlane.xlu0 %452
  %v454 = vsub.f32 %v445, %v429
  %v455 = vmul.f32 %v454, %v403
  %v456 = vrcp.pop %v453
  %v457 = vmul.f32 %v455, %v456
  %459 = vrot.lane.b32.xlu0 %v457, 104
  %v460 = vpop.permute.xlu0 %459
  %v462 = vadd.f32 %v403, %v460
  %464 = vrot.lane.b32.xlu0 %v416, 24
  %v465 = vpop.permute.xlu0 %464
  %v467 = vmul.f32 %v403, %v465
  %469 = vrot.lane.b32.xlu0 %v467, 104
  %v470 = vpop.permute.xlu0 %469
  %v472 = vsel %vm426, %v470, 0.0
  %473 = vadd.xlane.f32.xlu0 %v472
  %v474 = vpop.xlane.xlu0 %473
  %v475 = vadd.f32 %v474, %v403
  %v476 = vtanh.pop %v475
  %478 = vset.pattern.permute.xlu0 48
  %479 = vperm.xlu0 %478, %v476
  %v480 = vpop.permute.xlu0 %479
  %v482 = vmul.f32 %v462, %v480
  %v483 = vadd.f32 %v416, %v482
  %v484 = vmul.f32 %v476, %v476
  %v485 = vsub.f32 1.0, %v484
  %487 = vset.pattern.permute.xlu0 48
  %488 = vperm.xlu0 %487, %v485
  %v489 = vpop.permute.xlu0 %488
  %v491 = vmul.f32 %v403, %v489
  %493 = vrot.lane.b32.xlu0 %v462, 24
  %v494 = vpop.permute.xlu0 %493
  %v496 = vmul.f32 %v491, %v494
  %498 = vrot.lane.b32.xlu0 %v496, 104
  %v499 = vpop.permute.xlu0 %498
  %v501 = vsel %vm426, %v499, 0.0
  %502 = vadd.xlane.f32.xlu0 %v501
  %v503 = vpop.xlane.xlu0 %502
  %v504 = vadd.f32 %v503, 1.0
  %v505 = vand.u32 2147483647, %v504
  %v506 = vlog2.pop %v505
  %v507 = vmul.f32 %v506, 0.6931472
  %v508 = vadd.f32 %v507, 0.0
  %509 = vrot.lane.b32.xlu0 %v421, 98
  %v510 = vpop.permute.xlu0 %509
  %v512 = vsel %vm426, %v510, 0.0
  %513 = vadd.xlane.f32.xlu0 %v512
  %v514 = vpop.xlane.xlu0 %513
  %v515 = vmax.f32 %v514, 0.0
  %v516 = vand.u32 2147483647, %v514
  %v517 = vsub.f32 0.0, %v516
  %v518 = vmul.f32 %v517, 1.442695
  %v519 = vpow.pop %v518
  %v520 = vadd.f32 %v519, 1.0
  %v521 = vlog2.pop %v520
  %v522 = vmul.f32 %v521, 0.6931472
  %v523 = vmul.f32 -0.5, %v519
  %v524 = vadd.f32 %v523, 1.0
  %v525 = vmul.f32 %v524, %v519
  %v526 = vand.u32 2147483647, %v519
  %vm527 = vcmp.lt.f32.partialorder %v526, 0.0004427343
  %v528 = vsel %vm527, %v525, %v522
  %v529 = vadd.f32 %v515, %v528
  %v530 = vadd.f32 %v529, -1.0
  %531 = vrot.lane.b32.xlu0 %v446, 98
  %v532 = vpop.permute.xlu0 %531
  %v534 = vsel %vm426, %v532, 0.0
  %535 = vadd.xlane.f32.xlu0 %v534
  %v536 = vpop.xlane.xlu0 %535
  %v537 = vsub.f32 %v530, %v514
  %v538 = vmul.f32 %v537, %v403
  %v539 = vrcp.pop %v536
  %v540 = vmul.f32 %v538, %v539
  %542 = vrot.lane.b32.xlu0 %v540, 104
  %v543 = vpop.permute.xlu0 %542
  %v545 = vadd.f32 %v403, %v543
  %547 = vrot.lane.b32.xlu0 %v483, 30
  %v548 = vpop.permute.xlu0 %547
  %v550 = vmul.f32 %v403, %v548
  %552 = vrot.lane.b32.xlu0 %v550, 98
  %v553 = vpop.permute.xlu0 %552
  %v555 = vsel %vm426, %v553, 0.0
  %556 = vadd.xlane.f32.xlu0 %v555
  %v557 = vpop.xlane.xlu0 %556
  %v558 = vadd.f32 %v557, %v403
  %v559 = vtanh.pop %v558
  %561 = vset.pattern.permute.xlu0 49
  %562 = vperm.xlu0 %561, %v559
  %v563 = vpop.permute.xlu0 %562
  %v565 = vmul.f32 %v545, %v563
  %567 = vrot.lane.b32.xlu0 %v565, 122
  %v568 = vpop.permute.xlu0 %567
  %v570 = vadd.f32 %v483, %v568
  %v571 = vmul.f32 %v559, %v559
  %v572 = vsub.f32 1.0, %v571
  %574 = vset.pattern.permute.xlu0 49
  %575 = vperm.xlu0 %574, %v572
  %v576 = vpop.permute.xlu0 %575
  %v578 = vmul.f32 %v403, %v576
  %580 = vrot.lane.b32.xlu0 %v545, 24
  %v581 = vpop.permute.xlu0 %580
  %v583 = vmul.f32 %v578, %v581
  %585 = vrot.lane.b32.xlu0 %v583, 98
  %v586 = vpop.permute.xlu0 %585
  %v588 = vsel %vm426, %v586, 0.0
  %589 = vadd.xlane.f32.xlu0 %v588
  %v590 = vpop.xlane.xlu0 %589
  %v591 = vadd.f32 %v590, 1.0
  %v592 = vand.u32 2147483647, %v591
  %v593 = vlog2.pop %v592
  %v594 = vmul.f32 %v593, 0.6931472
  %v595 = vadd.f32 %v508, %v594
  %596 = vrot.lane.b32.xlu0 %v421, 92
  %v597 = vpop.permute.xlu0 %596
  %v599 = vsel %vm426, %v597, 0.0
  %600 = vadd.xlane.f32.xlu0 %v599
  %v601 = vpop.xlane.xlu0 %600
  %v602 = vmax.f32 %v601, 0.0
  %v603 = vand.u32 2147483647, %v601
  %v604 = vsub.f32 0.0, %v603
  %v605 = vmul.f32 %v604, 1.442695
  %v606 = vpow.pop %v605
  %v607 = vadd.f32 %v606, 1.0
  %v608 = vlog2.pop %v607
  %v609 = vmul.f32 %v608, 0.6931472
  %v610 = vmul.f32 -0.5, %v606
  %v611 = vadd.f32 %v610, 1.0
  %v612 = vmul.f32 %v611, %v606
  %v613 = vand.u32 2147483647, %v606
  %vm614 = vcmp.lt.f32.partialorder %v613, 0.0004427343
  %v615 = vsel %vm614, %v612, %v609
  %v616 = vadd.f32 %v602, %v615
  %v617 = vadd.f32 %v616, -1.0
  %618 = vrot.lane.b32.xlu0 %v446, 92
  %v619 = vpop.permute.xlu0 %618
  %v621 = vsel %vm426, %v619, 0.0
  %622 = vadd.xlane.f32.xlu0 %v621
  %v623 = vpop.xlane.xlu0 %622
  %v624 = vsub.f32 %v617, %v601
  %v625 = vmul.f32 %v624, %v403
  %v626 = vrcp.pop %v623
  %v627 = vmul.f32 %v625, %v626
  %629 = vrot.lane.b32.xlu0 %v627, 104
  %v630 = vpop.permute.xlu0 %629
  %v632 = vadd.f32 %v403, %v630
  %634 = vrot.lane.b32.xlu0 %v570, 36
  %v635 = vpop.permute.xlu0 %634
  %v637 = vmul.f32 %v403, %v635
  %639 = vrot.lane.b32.xlu0 %v637, 92
  %v640 = vpop.permute.xlu0 %639
  %v642 = vsel %vm426, %v640, 0.0
  %643 = vadd.xlane.f32.xlu0 %v642
  %v644 = vpop.xlane.xlu0 %643
  %v645 = vadd.f32 %v644, %v403
  %v646 = vtanh.pop %v645
  %648 = vset.pattern.permute.xlu0 50
  %649 = vperm.xlu0 %648, %v646
  %v650 = vpop.permute.xlu0 %649
  %v652 = vmul.f32 %v632, %v650
  %654 = vrot.lane.b32.xlu0 %v652, 116
  %v655 = vpop.permute.xlu0 %654
  %v657 = vadd.f32 %v570, %v655
  %v658 = vmul.f32 %v646, %v646
  %v659 = vsub.f32 1.0, %v658
  %661 = vset.pattern.permute.xlu0 50
  %662 = vperm.xlu0 %661, %v659
  %v663 = vpop.permute.xlu0 %662
  %v665 = vmul.f32 %v403, %v663
  %667 = vrot.lane.b32.xlu0 %v632, 24
  %v668 = vpop.permute.xlu0 %667
  %v670 = vmul.f32 %v665, %v668
  %672 = vrot.lane.b32.xlu0 %v670, 92
  %v673 = vpop.permute.xlu0 %672
  %v675 = vsel %vm426, %v673, 0.0
  %676 = vadd.xlane.f32.xlu0 %v675
  %v677 = vpop.xlane.xlu0 %676
  %v678 = vadd.f32 %v677, 1.0
  %v679 = vand.u32 2147483647, %v678
  %v680 = vlog2.pop %v679
  %v681 = vmul.f32 %v680, 0.6931472
  %v682 = vadd.f32 %v595, %v681
  %683 = vrot.lane.b32.xlu0 %v421, 86
  %v684 = vpop.permute.xlu0 %683
  %v686 = vsel %vm426, %v684, 0.0
  %687 = vadd.xlane.f32.xlu0 %v686
  %v688 = vpop.xlane.xlu0 %687
  %v689 = vmax.f32 %v688, 0.0
  %v690 = vand.u32 2147483647, %v688
  %v691 = vsub.f32 0.0, %v690
  %v692 = vmul.f32 %v691, 1.442695
  %v693 = vpow.pop %v692
  %v694 = vadd.f32 %v693, 1.0
  %v695 = vlog2.pop %v694
  %v696 = vmul.f32 %v695, 0.6931472
  %v697 = vmul.f32 -0.5, %v693
  %v698 = vadd.f32 %v697, 1.0
  %v699 = vmul.f32 %v698, %v693
  %v700 = vand.u32 2147483647, %v693
  %vm701 = vcmp.lt.f32.partialorder %v700, 0.0004427343
  %v702 = vsel %vm701, %v699, %v696
  %v703 = vadd.f32 %v689, %v702
  %v704 = vadd.f32 %v703, -1.0
  %705 = vrot.lane.b32.xlu0 %v446, 86
  %v706 = vpop.permute.xlu0 %705
  %v708 = vsel %vm426, %v706, 0.0
  %709 = vadd.xlane.f32.xlu0 %v708
  %v710 = vpop.xlane.xlu0 %709
  %v711 = vsub.f32 %v704, %v688
  %v712 = vmul.f32 %v711, %v403
  %v713 = vrcp.pop %v710
  %v714 = vmul.f32 %v712, %v713
  %716 = vrot.lane.b32.xlu0 %v714, 104
  %v717 = vpop.permute.xlu0 %716
  %v719 = vadd.f32 %v403, %v717
  %721 = vrot.lane.b32.xlu0 %v657, 42
  %v722 = vpop.permute.xlu0 %721
  %v724 = vmul.f32 %v403, %v722
  %726 = vrot.lane.b32.xlu0 %v724, 86
  %v727 = vpop.permute.xlu0 %726
  %v729 = vsel %vm426, %v727, 0.0
  %730 = vadd.xlane.f32.xlu0 %v729
  %v731 = vpop.xlane.xlu0 %730
  %v732 = vadd.f32 %v731, %v403
  %v733 = vtanh.pop %v732
  %735 = vset.pattern.permute.xlu0 51
  %736 = vperm.xlu0 %735, %v733
  %v737 = vpop.permute.xlu0 %736
  %v739 = vmul.f32 %v719, %v737
  %741 = vrot.lane.b32.xlu0 %v739, 110
  %v742 = vpop.permute.xlu0 %741
  %v744 = vadd.f32 %v657, %v742
  %v745 = vmul.f32 %v733, %v733
  %v746 = vsub.f32 1.0, %v745
  %748 = vset.pattern.permute.xlu0 51
  %749 = vperm.xlu0 %748, %v746
  %v750 = vpop.permute.xlu0 %749
  %v752 = vmul.f32 %v403, %v750
  %754 = vrot.lane.b32.xlu0 %v719, 24
  %v755 = vpop.permute.xlu0 %754
  %v757 = vmul.f32 %v752, %v755
  %759 = vrot.lane.b32.xlu0 %v757, 86
  %v760 = vpop.permute.xlu0 %759
  %v762 = vsel %vm426, %v760, 0.0
  %763 = vadd.xlane.f32.xlu0 %v762
  %v764 = vpop.xlane.xlu0 %763
  %v765 = vadd.f32 %v764, 1.0
  %v766 = vand.u32 2147483647, %v765
  %v767 = vlog2.pop %v766
  %v768 = vmul.f32 %v767, 0.6931472
  %v769 = vadd.f32 %v682, %v768
  %770 = vrot.lane.b32.xlu0 %v416, 1
  %v771 = vpop.permute.xlu0 %770
  %774 = vrot.lane.b32.xlu0 %v744, 7
  %v775 = vpop.permute.xlu0 %774
  %778 = vrot.lane.b32.xlu0 %v267, 13
  %v779 = vpop.permute.xlu0 %778
  %vm781 = vcmask 7168
  %v782 = vsel %vm781, %v769, %v771
  %vm783 = vcmask 56320
  %v784 = vsel %vm783, %v782, %v775
  %vm785 = vcmask 105472
  %v786 = vsel %vm785, %v784, %v779
  %vm787 = vcmask 154624
  %v788 = vsel %vm787, %v786, %v779
  %vm789 = vcmask 197632
  %790 = vst.msk [vmem:[%s10] sm:$0x3] %vm789, %v788
  // Predicated region
  $region42: #{planar_flow_density_forward.7} parent=0 // pred_check
    _
  $region43: #{planar_flow_density_forward.7} parent=0 // pred_check_branch
    %792 = sbr.rel (0) target = $region45
  $region44: #{planar_flow_density_forward.7} parent=0 // pred_region
    _
  $region45: #{planar_flow_density_forward.7} parent=0 // pred_fallthru
    _
  // Predicated region
  $region46: #{planar_flow_density_forward.7} parent=0 // pred_check
    _
  $region47: #{planar_flow_density_forward.7} parent=0 // pred_check_branch
    %794 = sbr.rel (0) target = $region49
  $region48: #{planar_flow_density_forward.7} parent=0 // pred_region
    _
  $region49: #{planar_flow_density_forward.7} parent=0 // pred_fallthru
    _

</llo_original>
